<compile_context>
chip_gen: v7x
topology: tpu7x:2x2x1
jax: 0.10.0
libtpu: 0.0.40
codegen_flags: <defaults>
</compile_context>

<pallas_src>
import jax
import jax.numpy as jnp
from jax.experimental import pallas as pl
from jax.experimental.pallas import tpu as pltpu

EPS = 1e-5
NEG_SLOPE = 0.2


def unet_inner_kernel(xs_ref, wd_ref, bd_ref, wu_ref, bu_ref, out_ref, ypad_ref):
    # xs_ref : (1, Hi+1, Wi+1, 4*Cin)  zero-padded + space-to-depth input (f32)
    # wd_ref : (2, 2, 4*Cin, Ci)       bf16 down-conv weights, taps (dh, dw)
    # bd_ref : (1, Ci)                 f32 down-conv bias
    # wu_ref : (4, 4, Ci, Co)          bf16 up-conv weights [py*2+px, dh*2+dw]
    # bu_ref : (1, Co)                 f32 up-conv bias
    # out_ref: (1, Hi, Wi*4*Co)        lane-dense, parity-packed, normalized up-conv
    # ypad_ref: VMEM (Hi+2, Wi+2, Ci)  bf16 scratch: zero-padded ReLU(hidden)
    Hi = xs_ref.shape[1] - 1
    Wi = xs_ref.shape[2] - 1
    C4 = xs_ref.shape[3]
    Ci = wd_ref.shape[3]
    Co = bu_ref.shape[1]

    # ---- LeakyReLU(0.2); the zero padding is invariant under it ----
    xs = xs_ref[0]
    h = jnp.where(xs > 0, xs, NEG_SLOPE * xs).astype(jnp.bfloat16)

    # ---- down conv: 4 taps of a stride-1 2x2 conv on the s2d input ----
    acc = jnp.zeros((Hi * Wi, Ci), jnp.float32)
    for dh in range(2):
        for dw in range(2):
            patch = h[dh:dh + Hi, dw:dw + Wi, :].reshape(Hi * Wi, C4)
            acc = acc + jnp.dot(patch, wd_ref[dh, dw],
                                preferred_element_type=jnp.float32)
    hid = jnp.maximum(acc + bd_ref[...], 0.0)            # bias + ReLU

    # ---- zero-pad hidden into the VMEM scratch: interior + thin borders ----
    # (borders rewritten every step: cheap, and correct regardless of how the
    #  "parallel" batch axis is sharded across TensorCores)
    ypad_ref[1:Hi + 1, 1:Wi + 1, :] = hid.reshape(Hi, Wi, Ci).astype(jnp.bfloat16)
    zrow = jnp.zeros((1, Wi + 2, Ci), jnp.bfloat16)
    zcol = jnp.zeros((Hi + 2, 1, Ci), jnp.bfloat16)
    ypad_ref[0:1, :, :] = zrow
    ypad_ref[Hi + 1:Hi + 2, :, :] = zrow
    ypad_ref[:, 0:1, :] = zcol
    ypad_ref[:, Wi + 1:Wi + 2, :] = zcol

    # ---- transposed conv: 4 output parities x 2x2 taps (exact FLOPs) ----
    slabs = {}

    def slab(r, c):
        if (r, c) not in slabs:
            slabs[(r, c)] = ypad_ref[r:r + Hi, c:c + Wi, :].reshape(Hi * Wi, Ci)
        return slabs[(r, c)]

    bu = bu_ref[...]
    par_out = []
    ch_sum = jnp.zeros((1, Co), jnp.float32)
    ch_sq = jnp.zeros((1, Co), jnp.float32)
    for py in range(2):
        for px in range(2):
            a = jnp.zeros((Hi * Wi, Co), jnp.float32)
            for dh in range(2):
                for dw in range(2):
                    a = a + jnp.dot(slab(py + dh, px + dw),
                                    wu_ref[py * 2 + px, dh * 2 + dw],
                                    preferred_element_type=jnp.float32)
            a = a + bu
            par_out.append(a)
            # single-pass instance-norm statistics (f32)
            ch_sum = ch_sum + jnp.sum(a, axis=0, keepdims=True)
            ch_sq = ch_sq + jnp.sum(a * a, axis=0, keepdims=True)

    inv_n = 1.0 / (4.0 * Hi * Wi)
    mean = ch_sum * inv_n
    var = ch_sq * inv_n - mean * mean
    inv_std = jax.lax.rsqrt(var + EPS)

    # ---- normalize, pack parities on the lane axis, single dense store ----
    ys = [((a - mean) * inv_std).reshape(Hi, Wi, Co) for a in par_out]
    packed = jnp.concatenate(ys, axis=-1)                 # (Hi, Wi, 4*Co)
    out_ref[0] = packed.reshape(Hi, Wi * 4 * Co).astype(out_ref.dtype)


def unet_skip_block_innermost(x_nchw, w_down, b_down, w_up, b_up):
    """Innermost UnetSkipConnectionBlock forward (InstanceNorm2d config).

    x_nchw : (N, Cin, H, W) f32, H and W even
    w_down : (Ci, Cin, 4, 4)  Conv2d weight          (k=4, s=2, p=1, bias)
    b_down : (Ci,)
    w_up   : (Ci, Co, 4, 4)   ConvTranspose2d weight (k=4, s=2, p=1, bias)
    b_up   : (Co,)
    returns: (N, Cin + Co, H, W)
    """
    N, Cin, H, W = x_nchw.shape
    Ci = w_down.shape[0]
    Co = w_up.shape[1]
    assert H % 2 == 0 and W % 2 == 0, "spatial dims must be even"
    Hi, Wi = H // 2, W // 2

    # NCHW -> NHWC (channels on the lane axis).
    # TODO(synk): drop these boundary transposes when embedded in an NHWC net.
    x = jnp.transpose(x_nchw, (0, 2, 3, 1))

    # zero-pad (conv padding=1) + space-to-depth by 2: the stride-2 4x4 conv
    # becomes a stride-1 2x2 conv with 4*Cin input channels.
    xpad = jnp.pad(x, ((0, 0), (1, 1), (1, 1), (0, 0)))
    xs = (xpad.reshape(N, Hi + 1, 2, Wi + 1, 2, Cin)
              .transpose(0, 1, 3, 2, 4, 5)
              .reshape(N, Hi + 1, Wi + 1, 4 * Cin))

    # Down-conv weights -> (dh, dw, [ph, pw, cin], ci), bf16 for the MXU.
    wd = jnp.transpose(w_down, (2, 3, 1, 0))                 # (kh, kw, Cin, Ci)
    wd = (wd.reshape(2, 2, 2, 2, Cin, Ci)                    # (dh, ph, dw, pw, ., .)
            .transpose(0, 2, 1, 3, 4, 5)                     # (dh, dw, ph, pw, ., .)
            .reshape(2, 2, 4 * Cin, Ci)
            .astype(jnp.bfloat16))

    # Up-conv weights -> Wt[py, px, dh, dw] = w_up[:, :, 3-2*dh-py, 3-2*dw-px]
    wu = jnp.transpose(w_up, (2, 3, 0, 1))                   # (kh, kw, Ci, Co)
    wu = wu[::-1, ::-1]                                      # spatial flip
    wu = (wu.reshape(2, 2, 2, 2, Ci, Co)                     # (dh, py, dw, px, ., .)
            .transpose(1, 3, 0, 2, 4, 5)                     # (py, px, dh, dw, ., .)
            .reshape(4, 4, Ci, Co)
            .astype(jnp.bfloat16))

    bd = b_down.reshape(1, Ci).astype(jnp.float32)
    bu = b_up.reshape(1, Co).astype(jnp.float32)

    flops = 2 * N * Hi * Wi * 16 * Ci * (Cin + Co)
    bytes_accessed = (xs.size * 4 + wd.size * 2 + wu.size * 2
                      + bd.size * 4 + bu.size * 4 + N * Hi * Wi * 4 * Co * 4)

    out_packed = pl.pallas_call(
        unet_inner_kernel,
        out_shape=jax.ShapeDtypeStruct((N, Hi, Wi * 4 * Co), x.dtype),
        grid=(N,),
        in_specs=[
            pl.BlockSpec((1, Hi + 1, Wi + 1, 4 * Cin), lambda n: (n, 0, 0, 0)),
            pl.BlockSpec((2, 2, 4 * Cin, Ci), lambda n: (0, 0, 0, 0)),
            pl.BlockSpec((1, Ci), lambda n: (0, 0)),
            pl.BlockSpec((4, 4, Ci, Co), lambda n: (0, 0, 0, 0)),
            pl.BlockSpec((1, Co), lambda n: (0, 0)),
        ],
        out_specs=pl.BlockSpec((1, Hi, Wi * 4 * Co), lambda n: (n, 0, 0)),
        scratch_shapes=[pltpu.VMEM((Hi + 2, Wi + 2, Ci), jnp.bfloat16)],
        compiler_params=pltpu.CompilerParams(
            dimension_semantics=("parallel",),
            vmem_limit_bytes=48 * 1024 * 1024),
        cost_estimate=pl.CostEstimate(
            flops=flops, bytes_accessed=bytes_accessed, transcendentals=N * Co),
    )(xs, wd, bd, wu, bu)

    # depth-to-space of the parity-packed up-conv, back to NCHW, skip concat.
    up = (out_packed.reshape(N, Hi, Wi, 2, 2, Co)
                    .transpose(0, 1, 3, 2, 4, 5)
                    .reshape(N, H, W, Co))
    up = jnp.transpose(up, (0, 3, 1, 2))
    return jnp.concatenate([x_nchw, up], axis=1)


def ref_forward(x, w_down, b_down, w_up, b_up):
    """Pure-JAX reference of the PyTorch innermost block (same bf16 matmul path)."""
    bf = lambda a: a.astype(jnp.bfloat16)
    h = jnp.where(x > 0, x, NEG_SLOPE * x)
    d = jax.lax.conv_general_dilated(
        bf(h), bf(w_down), window_strides=(2, 2), padding=((1, 1), (1, 1)),
        dimension_numbers=("NCHW", "OIHW", "NCHW"),
        preferred_element_type=jnp.float32)
    d = jnp.maximum(d + b_down.reshape(1, -1, 1, 1), 0.0)
    # ConvTranspose2d(k=4, s=2, p=1) == lhs-dilated conv with flipped kernel.
    w_t = jnp.transpose(w_up, (1, 0, 2, 3))[:, :, ::-1, ::-1]   # (Co, Ci, kh, kw)
    u = jax.lax.conv_general_dilated(
        bf(d), bf(w_t), window_strides=(1, 1), padding=((2, 2), (2, 2)),
        lhs_dilation=(2, 2), dimension_numbers=("NCHW", "OIHW", "NCHW"),
        preferred_element_type=jnp.float32)
    u = u + b_up.reshape(1, -1, 1, 1)
    m = jnp.mean(u, axis=(2, 3), keepdims=True)
    v = jnp.mean((u - m) ** 2, axis=(2, 3), keepdims=True)
    u = (u - m) * jax.lax.rsqrt(v + EPS)
    return jnp.concatenate([x, u], axis=1)


if __name__ == "__main__":
    N, Cin, H, W = 2, 4, 16, 16      # outer_nc = input_nc = 4
    Ci = 8                           # inner_nc
    Co = Cin                         # outer_nc

    key = jax.random.PRNGKey(0)
    kx, kwd, kbd, kwu, kbu = jax.random.split(key, 5)
    x = jax.random.normal(kx, (N, Cin, H, W), jnp.float32)
    w_down = jax.random.normal(kwd, (Ci, Cin, 4, 4), jnp.float32) * 0.1
    b_down = jax.random.normal(kbd, (Ci,), jnp.float32) * 0.1
    w_up = jax.random.normal(kwu, (Ci, Co, 4, 4), jnp.float32) * 0.1
    b_up = jax.random.normal(kbu, (Co,), jnp.float32) * 0.1

    out = jax.block_until_ready(
        unet_skip_block_innermost(x, w_down, b_down, w_up, b_up))
    ref = jax.block_until_ready(ref_forward(x, w_down, b_down, w_up, b_up))

    assert out.shape == (N, Cin + Co, H, W), out.shape
    err = float(jnp.max(jnp.abs(out - ref)))
    assert err < 5e-3, f"mismatch vs JAX reference: max abs err = {err}"
    print("KERNEL_OK")
</pallas_src>

<mosaic_0001>
module attributes {stable_mosaic.version = 11 : i64} {
  func.func @unet_inner_kernel(%arg0: i32, %arg1: memref<1x9x9x16xf32, #tpu.memory_space<vmem>>, %arg2: memref<2x2x16x8xbf16, #tpu.memory_space<vmem>>, %arg3: memref<1x8xf32, #tpu.memory_space<vmem>>, %arg4: memref<4x4x8x4xbf16, #tpu.memory_space<vmem>>, %arg5: memref<1x4xf32, #tpu.memory_space<vmem>>, %arg6: memref<1x8x128xf32, #tpu.memory_space<vmem>>, %arg7: memref<10x10x8xbf16, #tpu.memory_space<vmem>>) attributes {dimension_semantics = [#tpu.dimension_semantics<parallel>], iteration_bounds = array<i64: 2>, scalar_prefetch = 0 : i64, scratch_operands = 1 : i64, tpu.core_type = #tpu.core_type<tc>, window_params = [{transform_indices = @transform_0, window_bounds = array<i64: 1, 9, 9, 16>}, {pipeline_mode = #tpu.pipeline_mode<synchronous>, transform_indices = @transform_1, window_bounds = array<i64: 2, 2, 16, 8>}, {pipeline_mode = #tpu.pipeline_mode<synchronous>, transform_indices = @transform_2, window_bounds = array<i64: 1, 8>}, {pipeline_mode = #tpu.pipeline_mode<synchronous>, transform_indices = @transform_3, window_bounds = array<i64: 4, 4, 8, 4>}, {pipeline_mode = #tpu.pipeline_mode<synchronous>, transform_indices = @transform_4, window_bounds = array<i64: 1, 4>}, {transform_indices = @transform_5, window_bounds = array<i64: 1, 8, 128>}]} {
    %c0 = arith.constant 0 : index
    %c0_0 = arith.constant 0 : index
    %c0_1 = arith.constant 0 : index
    %c0_2 = arith.constant 0 : index
    %0 = vector.load %arg1[%c0, %c0_0, %c0_1, %c0_2] : memref<1x9x9x16xf32, #tpu.memory_space<vmem>>, vector<1x9x9x16xf32>
    %1 = vector.shape_cast %0 : vector<1x9x9x16xf32> to vector<9x9x16xf32>
    %cst = arith.constant 0.000000e+00 : f32
    %2 = vector.broadcast %cst : f32 to vector<9x9x16xf32>
    %3 = arith.cmpf ogt, %1, %2 : vector<9x9x16xf32>
    %cst_3 = arith.constant 2.000000e-01 : f32
    %4 = vector.broadcast %cst_3 : f32 to vector<9x9x16xf32>
    %5 = arith.mulf %4, %1 : vector<9x9x16xf32>
    %6 = arith.select %3, %1, %5 : vector<9x9x16xi1>, vector<9x9x16xf32>
    %7 = arith.truncf %6 : vector<9x9x16xf32> to vector<9x9x16xbf16>
    %cst_4 = arith.constant 0.000000e+00 : f32
    %8 = vector.broadcast %cst_4 : f32 to vector<64x8xf32>
    %9 = vector.extract_strided_slice %7 {offsets = [0, 0, 0], sizes = [8, 8, 16], strides = [1, 1, 1]} : vector<9x9x16xbf16> to vector<8x8x16xbf16>
    %10 = vector.shape_cast %9 : vector<8x8x16xbf16> to vector<64x16xbf16>
    %c0_5 = arith.constant 0 : index
    %c0_6 = arith.constant 0 : index
    %c0_7 = arith.constant 0 : index
    %c0_8 = arith.constant 0 : index
    %11 = vector.load %arg2[%c0_5, %c0_6, %c0_7, %c0_8] : memref<2x2x16x8xbf16, #tpu.memory_space<vmem>>, vector<1x1x16x8xbf16>
    %12 = vector.shape_cast %11 : vector<1x1x16x8xbf16> to vector<16x8xbf16>
    %cst_9 = arith.constant dense<0.000000e+00> : vector<64x8xf32>
    %13 = tpu.matmul %10, %12, %cst_9 {dimension_numbers = #tpu.dot_dimension_numbers<[1], [0], [0], [1], [0, 0, 1, 1], [], []>} : vector<64x16xbf16>, vector<16x8xbf16>, vector<64x8xf32> -> vector<64x8xf32>
    %14 = arith.addf %8, %13 : vector<64x8xf32>
    %15 = vector.extract_strided_slice %7 {offsets = [0, 1, 0], sizes = [8, 8, 16], strides = [1, 1, 1]} : vector<9x9x16xbf16> to vector<8x8x16xbf16>
    %16 = vector.shape_cast %15 : vector<8x8x16xbf16> to vector<64x16xbf16>
    %c0_10 = arith.constant 0 : index
    %c1 = arith.constant 1 : index
    %c0_11 = arith.constant 0 : index
    %c0_12 = arith.constant 0 : index
    %17 = vector.load %arg2[%c0_10, %c1, %c0_11, %c0_12] : memref<2x2x16x8xbf16, #tpu.memory_space<vmem>>, vector<1x1x16x8xbf16>
    %18 = vector.shape_cast %17 : vector<1x1x16x8xbf16> to vector<16x8xbf16>
    %cst_13 = arith.constant dense<0.000000e+00> : vector<64x8xf32>
    %19 = tpu.matmul %16, %18, %cst_13 {dimension_numbers = #tpu.dot_dimension_numbers<[1], [0], [0], [1], [0, 0, 1, 1], [], []>} : vector<64x16xbf16>, vector<16x8xbf16>, vector<64x8xf32> -> vector<64x8xf32>
    %20 = arith.addf %14, %19 : vector<64x8xf32>
    %21 = vector.extract_strided_slice %7 {offsets = [1, 0, 0], sizes = [8, 8, 16], strides = [1, 1, 1]} : vector<9x9x16xbf16> to vector<8x8x16xbf16>
    %22 = vector.shape_cast %21 : vector<8x8x16xbf16> to vector<64x16xbf16>
    %c1_14 = arith.constant 1 : index
    %c0_15 = arith.constant 0 : index
    %c0_16 = arith.constant 0 : index
    %c0_17 = arith.constant 0 : index
    %23 = vector.load %arg2[%c1_14, %c0_15, %c0_16, %c0_17] : memref<2x2x16x8xbf16, #tpu.memory_space<vmem>>, vector<1x1x16x8xbf16>
    %24 = vector.shape_cast %23 : vector<1x1x16x8xbf16> to vector<16x8xbf16>
    %cst_18 = arith.constant dense<0.000000e+00> : vector<64x8xf32>
    %25 = tpu.matmul %22, %24, %cst_18 {dimension_numbers = #tpu.dot_dimension_numbers<[1], [0], [0], [1], [0, 0, 1, 1], [], []>} : vector<64x16xbf16>, vector<16x8xbf16>, vector<64x8xf32> -> vector<64x8xf32>
    %26 = arith.addf %20, %25 : vector<64x8xf32>
    %27 = vector.extract_strided_slice %7 {offsets = [1, 1, 0], sizes = [8, 8, 16], strides = [1, 1, 1]} : vector<9x9x16xbf16> to vector<8x8x16xbf16>
    %28 = vector.shape_cast %27 : vector<8x8x16xbf16> to vector<64x16xbf16>
    %c1_19 = arith.constant 1 : index
    %c1_20 = arith.constant 1 : index
    %c0_21 = arith.constant 0 : index
    %c0_22 = arith.constant 0 : index
    %29 = vector.load %arg2[%c1_19, %c1_20, %c0_21, %c0_22] : memref<2x2x16x8xbf16, #tpu.memory_space<vmem>>, vector<1x1x16x8xbf16>
    %30 = vector.shape_cast %29 : vector<1x1x16x8xbf16> to vector<16x8xbf16>
    %cst_23 = arith.constant dense<0.000000e+00> : vector<64x8xf32>
    %31 = tpu.matmul %28, %30, %cst_23 {dimension_numbers = #tpu.dot_dimension_numbers<[1], [0], [0], [1], [0, 0, 1, 1], [], []>} : vector<64x16xbf16>, vector<16x8xbf16>, vector<64x8xf32> -> vector<64x8xf32>
    %32 = arith.addf %26, %31 : vector<64x8xf32>
    %c0_24 = arith.constant 0 : index
    %c0_25 = arith.constant 0 : index
    %33 = vector.load %arg3[%c0_24, %c0_25] : memref<1x8xf32, #tpu.memory_space<vmem>>, vector<1x8xf32>
    %34 = vector.broadcast %33 : vector<1x8xf32> to vector<64x8xf32>
    %35 = arith.addf %32, %34 : vector<64x8xf32>
    %cst_26 = arith.constant 0.000000e+00 : f32
    %36 = vector.broadcast %cst_26 : f32 to vector<64x8xf32>
    %37 = arith.maximumf %35, %36 : vector<64x8xf32>
    %38 = vector.shape_cast %37 : vector<64x8xf32> to vector<8x8x8xf32>
    %39 = arith.truncf %38 : vector<8x8x8xf32> to vector<8x8x8xbf16>
    %c1_27 = arith.constant 1 : index
    %c1_28 = arith.constant 1 : index
    %c0_29 = arith.constant 0 : index
    %40 = vector.load %arg7[%c1_27, %c1_28, %c0_29] : memref<10x10x8xbf16, #tpu.memory_space<vmem>>, vector<8x8x8xbf16>
    tpu.vector_store %arg7[%c1_27, %c1_28, %c0_29], %39 {strides = array<i32>} : memref<10x10x8xbf16, #tpu.memory_space<vmem>>, vector<8x8x8xbf16>,
    %cst_30 = arith.constant 0.000000e+00 : bf16
    %41 = vector.broadcast %cst_30 : bf16 to vector<1x10x8xbf16>
    %cst_31 = arith.constant 0.000000e+00 : bf16
    %42 = vector.broadcast %cst_31 : bf16 to vector<10x1x8xbf16>
    %c0_32 = arith.constant 0 : index
    %c0_33 = arith.constant 0 : index
    %c0_34 = arith.constant 0 : index
    %43 = vector.load %arg7[%c0_32, %c0_33, %c0_34] : memref<10x10x8xbf16, #tpu.memory_space<vmem>>, vector<1x10x8xbf16>
    tpu.vector_store %arg7[%c0_32, %c0_33, %c0_34], %41 {strides = array<i32>} : memref<10x10x8xbf16, #tpu.memory_space<vmem>>, vector<1x10x8xbf16>,
    %c9 = arith.constant 9 : index
    %c0_35 = arith.constant 0 : index
    %c0_36 = arith.constant 0 : index
    %44 = vector.load %arg7[%c9, %c0_35, %c0_36] : memref<10x10x8xbf16, #tpu.memory_space<vmem>>, vector<1x10x8xbf16>
    tpu.vector_store %arg7[%c9, %c0_35, %c0_36], %41 {strides = array<i32>} : memref<10x10x8xbf16, #tpu.memory_space<vmem>>, vector<1x10x8xbf16>,
    %c0_37 = arith.constant 0 : index
    %c0_38 = arith.constant 0 : index
    %c0_39 = arith.constant 0 : index
    %45 = vector.load %arg7[%c0_37, %c0_38, %c0_39] : memref<10x10x8xbf16, #tpu.memory_space<vmem>>, vector<10x1x8xbf16>
    tpu.vector_store %arg7[%c0_37, %c0_38, %c0_39], %42 {strides = array<i32>} : memref<10x10x8xbf16, #tpu.memory_space<vmem>>, vector<10x1x8xbf16>,
    %c0_40 = arith.constant 0 : index
    %c9_41 = arith.constant 9 : index
    %c0_42 = arith.constant 0 : index
    %46 = vector.load %arg7[%c0_40, %c9_41, %c0_42] : memref<10x10x8xbf16, #tpu.memory_space<vmem>>, vector<10x1x8xbf16>
    tpu.vector_store %arg7[%c0_40, %c9_41, %c0_42], %42 {strides = array<i32>} : memref<10x10x8xbf16, #tpu.memory_space<vmem>>, vector<10x1x8xbf16>,
    %c0_43 = arith.constant 0 : index
    %c0_44 = arith.constant 0 : index
    %47 = vector.load %arg5[%c0_43, %c0_44] : memref<1x4xf32, #tpu.memory_space<vmem>>, vector<1x4xf32>
    %cst_45 = arith.constant 0.000000e+00 : f32
    %48 = vector.broadcast %cst_45 : f32 to vector<1x4xf32>
    %cst_46 = arith.constant 0.000000e+00 : f32
    %49 = vector.broadcast %cst_46 : f32 to vector<1x4xf32>
    %cst_47 = arith.constant 0.000000e+00 : f32
    %50 = vector.broadcast %cst_47 : f32 to vector<64x4xf32>
    %c0_48 = arith.constant 0 : index
    %c0_49 = arith.constant 0 : index
    %c0_50 = arith.constant 0 : index
    %51 = vector.load %arg7[%c0_48, %c0_49, %c0_50] : memref<10x10x8xbf16, #tpu.memory_space<vmem>>, vector<8x8x8xbf16>
    %52 = vector.shape_cast %51 : vector<8x8x8xbf16> to vector<64x8xbf16>
    %c0_51 = arith.constant 0 : index
    %c0_52 = arith.constant 0 : index
    %c0_53 = arith.constant 0 : index
    %c0_54 = arith.constant 0 : index
    %53 = vector.load %arg4[%c0_51, %c0_52, %c0_53, %c0_54] : memref<4x4x8x4xbf16, #tpu.memory_space<vmem>>, vector<1x1x8x4xbf16>
    %54 = vector.shape_cast %53 : vector<1x1x8x4xbf16> to vector<8x4xbf16>
    %cst_55 = arith.constant dense<0.000000e+00> : vector<64x4xf32>
    %55 = tpu.matmul %52, %54, %cst_55 {dimension_numbers = #tpu.dot_dimension_numbers<[1], [0], [0], [1], [0, 0, 1, 1], [], []>} : vector<64x8xbf16>, vector<8x4xbf16>, vector<64x4xf32> -> vector<64x4xf32>
    %56 = arith.addf %50, %55 : vector<64x4xf32>
    %c0_56 = arith.constant 0 : index
    %c1_57 = arith.constant 1 : index
    %c0_58 = arith.constant 0 : index
    %57 = vector.load %arg7[%c0_56, %c1_57, %c0_58] : memref<10x10x8xbf16, #tpu.memory_space<vmem>>, vector<8x8x8xbf16>
    %58 = vector.shape_cast %57 : vector<8x8x8xbf16> to vector<64x8xbf16>
    %c0_59 = arith.constant 0 : index
    %c1_60 = arith.constant 1 : index
    %c0_61 = arith.constant 0 : index
    %c0_62 = arith.constant 0 : index
    %59 = vector.load %arg4[%c0_59, %c1_60, %c0_61, %c0_62] : memref<4x4x8x4xbf16, #tpu.memory_space<vmem>>, vector<1x1x8x4xbf16>
    %60 = vector.shape_cast %59 : vector<1x1x8x4xbf16> to vector<8x4xbf16>
    %cst_63 = arith.constant dense<0.000000e+00> : vector<64x4xf32>
    %61 = tpu.matmul %58, %60, %cst_63 {dimension_numbers = #tpu.dot_dimension_numbers<[1], [0], [0], [1], [0, 0, 1, 1], [], []>} : vector<64x8xbf16>, vector<8x4xbf16>, vector<64x4xf32> -> vector<64x4xf32>
    %62 = arith.addf %56, %61 : vector<64x4xf32>
    %c1_64 = arith.constant 1 : index
    %c0_65 = arith.constant 0 : index
    %c0_66 = arith.constant 0 : index
    %63 = vector.load %arg7[%c1_64, %c0_65, %c0_66] : memref<10x10x8xbf16, #tpu.memory_space<vmem>>, vector<8x8x8xbf16>
    %64 = vector.shape_cast %63 : vector<8x8x8xbf16> to vector<64x8xbf16>
    %c0_67 = arith.constant 0 : index
    %c2 = arith.constant 2 : index
    %c0_68 = arith.constant 0 : index
    %c0_69 = arith.constant 0 : index
    %65 = vector.load %arg4[%c0_67, %c2, %c0_68, %c0_69] : memref<4x4x8x4xbf16, #tpu.memory_space<vmem>>, vector<1x1x8x4xbf16>
    %66 = vector.shape_cast %65 : vector<1x1x8x4xbf16> to vector<8x4xbf16>
    %cst_70 = arith.constant dense<0.000000e+00> : vector<64x4xf32>
    %67 = tpu.matmul %64, %66, %cst_70 {dimension_numbers = #tpu.dot_dimension_numbers<[1], [0], [0], [1], [0, 0, 1, 1], [], []>} : vector<64x8xbf16>, vector<8x4xbf16>, vector<64x4xf32> -> vector<64x4xf32>
    %68 = arith.addf %62, %67 : vector<64x4xf32>
    %c1_71 = arith.constant 1 : index
    %c1_72 = arith.constant 1 : index
    %c0_73 = arith.constant 0 : index
    %69 = vector.load %arg7[%c1_71, %c1_72, %c0_73] : memref<10x10x8xbf16, #tpu.memory_space<vmem>>, vector<8x8x8xbf16>
    %70 = vector.shape_cast %69 : vector<8x8x8xbf16> to vector<64x8xbf16>
    %c0_74 = arith.constant 0 : index
    %c3 = arith.constant 3 : index
    %c0_75 = arith.constant 0 : index
    %c0_76 = arith.constant 0 : index
    %71 = vector.load %arg4[%c0_74, %c3, %c0_75, %c0_76] : memref<4x4x8x4xbf16, #tpu.memory_space<vmem>>, vector<1x1x8x4xbf16>
    %72 = vector.shape_cast %71 : vector<1x1x8x4xbf16> to vector<8x4xbf16>
    %cst_77 = arith.constant dense<0.000000e+00> : vector<64x4xf32>
    %73 = tpu.matmul %70, %72, %cst_77 {dimension_numbers = #tpu.dot_dimension_numbers<[1], [0], [0], [1], [0, 0, 1, 1], [], []>} : vector<64x8xbf16>, vector<8x4xbf16>, vector<64x4xf32> -> vector<64x4xf32>
    %74 = arith.addf %68, %73 : vector<64x4xf32>
    %75 = vector.broadcast %47 : vector<1x4xf32> to vector<64x4xf32>
    %76 = arith.addf %74, %75 : vector<64x4xf32>
    %cst_78 = arith.constant dense<0.000000e+00> : vector<4xf32>
    %77 = vector.multi_reduction <add>, %76, %cst_78 [0] : vector<64x4xf32> to vector<4xf32>
    %78 = vector.shape_cast %77 : vector<4xf32> to vector<1x4xf32>
    %79 = arith.addf %48, %78 : vector<1x4xf32>
    %80 = arith.mulf %76, %76 : vector<64x4xf32>
    %cst_79 = arith.constant dense<0.000000e+00> : vector<4xf32>
    %81 = vector.multi_reduction <add>, %80, %cst_79 [0] : vector<64x4xf32> to vector<4xf32>
    %82 = vector.shape_cast %81 : vector<4xf32> to vector<1x4xf32>
    %83 = arith.addf %49, %82 : vector<1x4xf32>
    %cst_80 = arith.constant 0.000000e+00 : f32
    %84 = vector.broadcast %cst_80 : f32 to vector<64x4xf32>
    %c1_81 = arith.constant 1 : index
    %c0_82 = arith.constant 0 : index
    %c0_83 = arith.constant 0 : index
    %c0_84 = arith.constant 0 : index
    %85 = vector.load %arg4[%c1_81, %c0_82, %c0_83, %c0_84] : memref<4x4x8x4xbf16, #tpu.memory_space<vmem>>, vector<1x1x8x4xbf16>
    %86 = vector.shape_cast %85 : vector<1x1x8x4xbf16> to vector<8x4xbf16>
    %cst_85 = arith.constant dense<0.000000e+00> : vector<64x4xf32>
    %87 = tpu.matmul %58, %86, %cst_85 {dimension_numbers = #tpu.dot_dimension_numbers<[1], [0], [0], [1], [0, 0, 1, 1], [], []>} : vector<64x8xbf16>, vector<8x4xbf16>, vector<64x4xf32> -> vector<64x4xf32>
    %88 = arith.addf %84, %87 : vector<64x4xf32>
    %c0_86 = arith.constant 0 : index
    %c2_87 = arith.constant 2 : index
    %c0_88 = arith.constant 0 : index
    %89 = vector.load %arg7[%c0_86, %c2_87, %c0_88] : memref<10x10x8xbf16, #tpu.memory_space<vmem>>, vector<8x8x8xbf16>
    %90 = vector.shape_cast %89 : vector<8x8x8xbf16> to vector<64x8xbf16>
    %c1_89 = arith.constant 1 : index
    %c1_90 = arith.constant 1 : index
    %c0_91 = arith.constant 0 : index
    %c0_92 = arith.constant 0 : index
    %91 = vector.load %arg4[%c1_89, %c1_90, %c0_91, %c0_92] : memref<4x4x8x4xbf16, #tpu.memory_space<vmem>>, vector<1x1x8x4xbf16>
    %92 = vector.shape_cast %91 : vector<1x1x8x4xbf16> to vector<8x4xbf16>
    %cst_93 = arith.constant dense<0.000000e+00> : vector<64x4xf32>
    %93 = tpu.matmul %90, %92, %cst_93 {dimension_numbers = #tpu.dot_dimension_numbers<[1], [0], [0], [1], [0, 0, 1, 1], [], []>} : vector<64x8xbf16>, vector<8x4xbf16>, vector<64x4xf32> -> vector<64x4xf32>
    %94 = arith.addf %88, %93 : vector<64x4xf32>
    %c1_94 = arith.constant 1 : index
    %c2_95 = arith.constant 2 : index
    %c0_96 = arith.constant 0 : index
    %c0_97 = arith.constant 0 : index
    %95 = vector.load %arg4[%c1_94, %c2_95, %c0_96, %c0_97] : memref<4x4x8x4xbf16, #tpu.memory_space<vmem>>, vector<1x1x8x4xbf16>
    %96 = vector.shape_cast %95 : vector<1x1x8x4xbf16> to vector<8x4xbf16>
    %cst_98 = arith.constant dense<0.000000e+00> : vector<64x4xf32>
    %97 = tpu.matmul %70, %96, %cst_98 {dimension_numbers = #tpu.dot_dimension_numbers<[1], [0], [0], [1], [0, 0, 1, 1], [], []>} : vector<64x8xbf16>, vector<8x4xbf16>, vector<64x4xf32> -> vector<64x4xf32>
    %98 = arith.addf %94, %97 : vector<64x4xf32>
    %c1_99 = arith.constant 1 : index
    %c2_100 = arith.constant 2 : index
    %c0_101 = arith.constant 0 : index
    %99 = vector.load %arg7[%c1_99, %c2_100, %c0_101] : memref<10x10x8xbf16, #tpu.memory_space<vmem>>, vector<8x8x8xbf16>
    %100 = vector.shape_cast %99 : vector<8x8x8xbf16> to vector<64x8xbf16>
    %c1_102 = arith.constant 1 : index
    %c3_103 = arith.constant 3 : index
    %c0_104 = arith.constant 0 : index
    %c0_105 = arith.constant 0 : index
    %101 = vector.load %arg4[%c1_102, %c3_103, %c0_104, %c0_105] : memref<4x4x8x4xbf16, #tpu.memory_space<vmem>>, vector<1x1x8x4xbf16>
    %102 = vector.shape_cast %101 : vector<1x1x8x4xbf16> to vector<8x4xbf16>
    %cst_106 = arith.constant dense<0.000000e+00> : vector<64x4xf32>
    %103 = tpu.matmul %100, %102, %cst_106 {dimension_numbers = #tpu.dot_dimension_numbers<[1], [0], [0], [1], [0, 0, 1, 1], [], []>} : vector<64x8xbf16>, vector<8x4xbf16>, vector<64x4xf32> -> vector<64x4xf32>
    %104 = arith.addf %98, %103 : vector<64x4xf32>
    %105 = vector.broadcast %47 : vector<1x4xf32> to vector<64x4xf32>
    %106 = arith.addf %104, %105 : vector<64x4xf32>
    %cst_107 = arith.constant dense<0.000000e+00> : vector<4xf32>
    %107 = vector.multi_reduction <add>, %106, %cst_107 [0] : vector<64x4xf32> to vector<4xf32>
    %108 = vector.shape_cast %107 : vector<4xf32> to vector<1x4xf32>
    %109 = arith.addf %79, %108 : vector<1x4xf32>
    %110 = arith.mulf %106, %106 : vector<64x4xf32>
    %cst_108 = arith.constant dense<0.000000e+00> : vector<4xf32>
    %111 = vector.multi_reduction <add>, %110, %cst_108 [0] : vector<64x4xf32> to vector<4xf32>
    %112 = vector.shape_cast %111 : vector<4xf32> to vector<1x4xf32>
    %113 = arith.addf %83, %112 : vector<1x4xf32>
    %cst_109 = arith.constant 0.000000e+00 : f32
    %114 = vector.broadcast %cst_109 : f32 to vector<64x4xf32>
    %c2_110 = arith.constant 2 : index
    %c0_111 = arith.constant 0 : index
    %c0_112 = arith.constant 0 : index
    %c0_113 = arith.constant 0 : index
    %115 = vector.load %arg4[%c2_110, %c0_111, %c0_112, %c0_113] : memref<4x4x8x4xbf16, #tpu.memory_space<vmem>>, vector<1x1x8x4xbf16>
    %116 = vector.shape_cast %115 : vector<1x1x8x4xbf16> to vector<8x4xbf16>
    %cst_114 = arith.constant dense<0.000000e+00> : vector<64x4xf32>
    %117 = tpu.matmul %64, %116, %cst_114 {dimension_numbers = #tpu.dot_dimension_numbers<[1], [0], [0], [1], [0, 0, 1, 1], [], []>} : vector<64x8xbf16>, vector<8x4xbf16>, vector<64x4xf32> -> vector<64x4xf32>
    %118 = arith.addf %114, %117 : vector<64x4xf32>
    %c2_115 = arith.constant 2 : index
    %c1_116 = arith.constant 1 : index
    %c0_117 = arith.constant 0 : index
    %c0_118 = arith.constant 0 : index
    %119 = vector.load %arg4[%c2_115, %c1_116, %c0_117, %c0_118] : memref<4x4x8x4xbf16, #tpu.memory_space<vmem>>, vector<1x1x8x4xbf16>
    %120 = vector.shape_cast %119 : vector<1x1x8x4xbf16> to vector<8x4xbf16>
    %cst_119 = arith.constant dense<0.000000e+00> : vector<64x4xf32>
    %121 = tpu.matmul %70, %120, %cst_119 {dimension_numbers = #tpu.dot_dimension_numbers<[1], [0], [0], [1], [0, 0, 1, 1], [], []>} : vector<64x8xbf16>, vector<8x4xbf16>, vector<64x4xf32> -> vector<64x4xf32>
    %122 = arith.addf %118, %121 : vector<64x4xf32>
    %c2_120 = arith.constant 2 : index
    %c0_121 = arith.constant 0 : index
    %c0_122 = arith.constant 0 : index
    %123 = vector.load %arg7[%c2_120, %c0_121, %c0_122] : memref<10x10x8xbf16, #tpu.memory_space<vmem>>, vector<8x8x8xbf16>
    %124 = vector.shape_cast %123 : vector<8x8x8xbf16> to vector<64x8xbf16>
    %c2_123 = arith.constant 2 : index
    %c2_124 = arith.constant 2 : index
    %c0_125 = arith.constant 0 : index
    %c0_126 = arith.constant 0 : index
    %125 = vector.load %arg4[%c2_123, %c2_124, %c0_125, %c0_126] : memref<4x4x8x4xbf16, #tpu.memory_space<vmem>>, vector<1x1x8x4xbf16>
    %126 = vector.shape_cast %125 : vector<1x1x8x4xbf16> to vector<8x4xbf16>
    %cst_127 = arith.constant dense<0.000000e+00> : vector<64x4xf32>
    %127 = tpu.matmul %124, %126, %cst_127 {dimension_numbers = #tpu.dot_dimension_numbers<[1], [0], [0], [1], [0, 0, 1, 1], [], []>} : vector<64x8xbf16>, vector<8x4xbf16>, vector<64x4xf32> -> vector<64x4xf32>
    %128 = arith.addf %122, %127 : vector<64x4xf32>
    %c2_128 = arith.constant 2 : index
    %c1_129 = arith.constant 1 : index
    %c0_130 = arith.constant 0 : index
    %129 = vector.load %arg7[%c2_128, %c1_129, %c0_130] : memref<10x10x8xbf16, #tpu.memory_space<vmem>>, vector<8x8x8xbf16>
    %130 = vector.shape_cast %129 : vector<8x8x8xbf16> to vector<64x8xbf16>
    %c2_131 = arith.constant 2 : index
    %c3_132 = arith.constant 3 : index
    %c0_133 = arith.constant 0 : index
    %c0_134 = arith.constant 0 : index
    %131 = vector.load %arg4[%c2_131, %c3_132, %c0_133, %c0_134] : memref<4x4x8x4xbf16, #tpu.memory_space<vmem>>, vector<1x1x8x4xbf16>
    %132 = vector.shape_cast %131 : vector<1x1x8x4xbf16> to vector<8x4xbf16>
    %cst_135 = arith.constant dense<0.000000e+00> : vector<64x4xf32>
    %133 = tpu.matmul %130, %132, %cst_135 {dimension_numbers = #tpu.dot_dimension_numbers<[1], [0], [0], [1], [0, 0, 1, 1], [], []>} : vector<64x8xbf16>, vector<8x4xbf16>, vector<64x4xf32> -> vector<64x4xf32>
    %134 = arith.addf %128, %133 : vector<64x4xf32>
    %135 = vector.broadcast %47 : vector<1x4xf32> to vector<64x4xf32>
    %136 = arith.addf %134, %135 : vector<64x4xf32>
    %cst_136 = arith.constant dense<0.000000e+00> : vector<4xf32>
    %137 = vector.multi_reduction <add>, %136, %cst_136 [0] : vector<64x4xf32> to vector<4xf32>
    %138 = vector.shape_cast %137 : vector<4xf32> to vector<1x4xf32>
    %139 = arith.addf %109, %138 : vector<1x4xf32>
    %140 = arith.mulf %136, %136 : vector<64x4xf32>
    %cst_137 = arith.constant dense<0.000000e+00> : vector<4xf32>
    %141 = vector.multi_reduction <add>, %140, %cst_137 [0] : vector<64x4xf32> to vector<4xf32>
    %142 = vector.shape_cast %141 : vector<4xf32> to vector<1x4xf32>
    %143 = arith.addf %113, %142 : vector<1x4xf32>
    %cst_138 = arith.constant 0.000000e+00 : f32
    %144 = vector.broadcast %cst_138 : f32 to vector<64x4xf32>
    %c3_139 = arith.constant 3 : index
    %c0_140 = arith.constant 0 : index
    %c0_141 = arith.constant 0 : index
    %c0_142 = arith.constant 0 : index
    %145 = vector.load %arg4[%c3_139, %c0_140, %c0_141, %c0_142] : memref<4x4x8x4xbf16, #tpu.memory_space<vmem>>, vector<1x1x8x4xbf16>
    %146 = vector.shape_cast %145 : vector<1x1x8x4xbf16> to vector<8x4xbf16>
    %cst_143 = arith.constant dense<0.000000e+00> : vector<64x4xf32>
    %147 = tpu.matmul %70, %146, %cst_143 {dimension_numbers = #tpu.dot_dimension_numbers<[1], [0], [0], [1], [0, 0, 1, 1], [], []>} : vector<64x8xbf16>, vector<8x4xbf16>, vector<64x4xf32> -> vector<64x4xf32>
    %148 = arith.addf %144, %147 : vector<64x4xf32>
    %c3_144 = arith.constant 3 : index
    %c1_145 = arith.constant 1 : index
    %c0_146 = arith.constant 0 : index
    %c0_147 = arith.constant 0 : index
    %149 = vector.load %arg4[%c3_144, %c1_145, %c0_146, %c0_147] : memref<4x4x8x4xbf16, #tpu.memory_space<vmem>>, vector<1x1x8x4xbf16>
    %150 = vector.shape_cast %149 : vector<1x1x8x4xbf16> to vector<8x4xbf16>
    %cst_148 = arith.constant dense<0.000000e+00> : vector<64x4xf32>
    %151 = tpu.matmul %100, %150, %cst_148 {dimension_numbers = #tpu.dot_dimension_numbers<[1], [0], [0], [1], [0, 0, 1, 1], [], []>} : vector<64x8xbf16>, vector<8x4xbf16>, vector<64x4xf32> -> vector<64x4xf32>
    %152 = arith.addf %148, %151 : vector<64x4xf32>
    %c3_149 = arith.constant 3 : index
    %c2_150 = arith.constant 2 : index
    %c0_151 = arith.constant 0 : index
    %c0_152 = arith.constant 0 : index
    %153 = vector.load %arg4[%c3_149, %c2_150, %c0_151, %c0_152] : memref<4x4x8x4xbf16, #tpu.memory_space<vmem>>, vector<1x1x8x4xbf16>
    %154 = vector.shape_cast %153 : vector<1x1x8x4xbf16> to vector<8x4xbf16>
    %cst_153 = arith.constant dense<0.000000e+00> : vector<64x4xf32>
    %155 = tpu.matmul %130, %154, %cst_153 {dimension_numbers = #tpu.dot_dimension_numbers<[1], [0], [0], [1], [0, 0, 1, 1], [], []>} : vector<64x8xbf16>, vector<8x4xbf16>, vector<64x4xf32> -> vector<64x4xf32>
    %156 = arith.addf %152, %155 : vector<64x4xf32>
    %c2_154 = arith.constant 2 : index
    %c2_155 = arith.constant 2 : index
    %c0_156 = arith.constant 0 : index
    %157 = vector.load %arg7[%c2_154, %c2_155, %c0_156] : memref<10x10x8xbf16, #tpu.memory_space<vmem>>, vector<8x8x8xbf16>
    %158 = vector.shape_cast %157 : vector<8x8x8xbf16> to vector<64x8xbf16>
    %c3_157 = arith.constant 3 : index
    %c3_158 = arith.constant 3 : index
    %c0_159 = arith.constant 0 : index
    %c0_160 = arith.constant 0 : index
    %159 = vector.load %arg4[%c3_157, %c3_158, %c0_159, %c0_160] : memref<4x4x8x4xbf16, #tpu.memory_space<vmem>>, vector<1x1x8x4xbf16>
    %160 = vector.shape_cast %159 : vector<1x1x8x4xbf16> to vector<8x4xbf16>
    %cst_161 = arith.constant dense<0.000000e+00> : vector<64x4xf32>
    %161 = tpu.matmul %158, %160, %cst_161 {dimension_numbers = #tpu.dot_dimension_numbers<[1], [0], [0], [1], [0, 0, 1, 1], [], []>} : vector<64x8xbf16>, vector<8x4xbf16>, vector<64x4xf32> -> vector<64x4xf32>
    %162 = arith.addf %156, %161 : vector<64x4xf32>
    %163 = vector.broadcast %47 : vector<1x4xf32> to vector<64x4xf32>
    %164 = arith.addf %162, %163 : vector<64x4xf32>
    %cst_162 = arith.constant dense<0.000000e+00> : vector<4xf32>
    %165 = vector.multi_reduction <add>, %164, %cst_162 [0] : vector<64x4xf32> to vector<4xf32>
    %166 = vector.shape_cast %165 : vector<4xf32> to vector<1x4xf32>
    %167 = arith.addf %139, %166 : vector<1x4xf32>
    %168 = arith.mulf %164, %164 : vector<64x4xf32>
    %cst_163 = arith.constant dense<0.000000e+00> : vector<4xf32>
    %169 = vector.multi_reduction <add>, %168, %cst_163 [0] : vector<64x4xf32> to vector<4xf32>
    %170 = vector.shape_cast %169 : vector<4xf32> to vector<1x4xf32>
    %171 = arith.addf %143, %170 : vector<1x4xf32>
    %cst_164 = arith.constant 3.906250e-03 : f32
    %172 = vector.broadcast %cst_164 : f32 to vector<1x4xf32>
    %173 = arith.mulf %167, %172 : vector<1x4xf32>
    %cst_165 = arith.constant 3.906250e-03 : f32
    %174 = vector.broadcast %cst_165 : f32 to vector<1x4xf32>
    %175 = arith.mulf %171, %174 : vector<1x4xf32>
    %176 = arith.mulf %173, %173 : vector<1x4xf32>
    %177 = arith.subf %175, %176 : vector<1x4xf32>
    %cst_166 = arith.constant 9.99999974E-6 : f32
    %178 = vector.broadcast %cst_166 : f32 to vector<1x4xf32>
    %179 = arith.addf %177, %178 : vector<1x4xf32>
    %180 = math.rsqrt %179 : vector<1x4xf32>
    %181 = vector.broadcast %173 : vector<1x4xf32> to vector<64x4xf32>
    %182 = arith.subf %76, %181 : vector<64x4xf32>
    %183 = vector.broadcast %180 : vector<1x4xf32> to vector<64x4xf32>
    %184 = arith.mulf %182, %183 : vector<64x4xf32>
    %185 = vector.shape_cast %184 : vector<64x4xf32> to vector<8x8x4xf32>
    %186 = vector.broadcast %173 : vector<1x4xf32> to vector<64x4xf32>
    %187 = arith.subf %106, %186 : vector<64x4xf32>
    %188 = vector.broadcast %180 : vector<1x4xf32> to vector<64x4xf32>
    %189 = arith.mulf %187, %188 : vector<64x4xf32>
    %190 = vector.shape_cast %189 : vector<64x4xf32> to vector<8x8x4xf32>
    %191 = vector.broadcast %173 : vector<1x4xf32> to vector<64x4xf32>
    %192 = arith.subf %136, %191 : vector<64x4xf32>
    %193 = vector.broadcast %180 : vector<1x4xf32> to vector<64x4xf32>
    %194 = arith.mulf %192, %193 : vector<64x4xf32>
    %195 = vector.shape_cast %194 : vector<64x4xf32> to vector<8x8x4xf32>
    %196 = vector.broadcast %173 : vector<1x4xf32> to vector<64x4xf32>
    %197 = arith.subf %164, %196 : vector<64x4xf32>
    %198 = vector.broadcast %180 : vector<1x4xf32> to vector<64x4xf32>
    %199 = arith.mulf %197, %198 : vector<64x4xf32>
    %200 = vector.shape_cast %199 : vector<64x4xf32> to vector<8x8x4xf32>
    %201 = tpu.concatenate %185, %190, %195, %200 in 2 : vector<8x8x4xf32>, vector<8x8x4xf32>, vector<8x8x4xf32>, vector<8x8x4xf32> -> vector<8x8x16xf32>
    %202 = vector.shape_cast %201 : vector<8x8x16xf32> to vector<8x128xf32>
    %c0_167 = arith.constant 0 : index
    %c0_168 = arith.constant 0 : index
    %c0_169 = arith.constant 0 : index
    %203 = vector.load %arg6[%c0_167, %c0_168, %c0_169] : memref<1x8x128xf32, #tpu.memory_space<vmem>>, vector<1x8x128xf32>
    %204 = vector.shape_cast %203 : vector<1x8x128xf32> to vector<8x128xf32>
    %205 = vector.shape_cast %202 : vector<8x128xf32> to vector<1x8x128xf32>
    tpu.vector_store %arg6[%c0_167, %c0_168, %c0_169], %205 {strides = array<i32>} : memref<1x8x128xf32, #tpu.memory_space<vmem>>, vector<1x8x128xf32>,
    return
  }
  func.func @transform_0(%arg0: i32) -> (i32, i32, i32, i32) {
    %c0_i32 = arith.constant 0 : i32
    %c0_i32_0 = arith.constant 0 : i32
    %c0_i32_1 = arith.constant 0 : i32
    %c0_i32_2 = arith.constant 0 : i32
    return %arg0, %c0_i32, %c0_i32_0, %c0_i32_1 : i32, i32, i32, i32
  }
  func.func @transform_1(%arg0: i32) -> (i32, i32, i32, i32) {
    %c0_i32 = arith.constant 0 : i32
    %c0_i32_0 = arith.constant 0 : i32
    %c0_i32_1 = arith.constant 0 : i32
    %c0_i32_2 = arith.constant 0 : i32
    %c0_i32_3 = arith.constant 0 : i32
    return %c0_i32, %c0_i32_0, %c0_i32_1, %c0_i32_2 : i32, i32, i32, i32
  }
  func.func @transform_2(%arg0: i32) -> (i32, i32) {
    %c0_i32 = arith.constant 0 : i32
    %c0_i32_0 = arith.constant 0 : i32
    %c0_i32_1 = arith.constant 0 : i32
    return %c0_i32, %c0_i32_0 : i32, i32
  }
  func.func @transform_3(%arg0: i32) -> (i32, i32, i32, i32) {
    %c0_i32 = arith.constant 0 : i32
    %c0_i32_0 = arith.constant 0 : i32
    %c0_i32_1 = arith.constant 0 : i32
    %c0_i32_2 = arith.constant 0 : i32
    %c0_i32_3 = arith.constant 0 : i32
    return %c0_i32, %c0_i32_0, %c0_i32_1, %c0_i32_2 : i32, i32, i32, i32
  }
  func.func @transform_4(%arg0: i32) -> (i32, i32) {
    %c0_i32 = arith.constant 0 : i32
    %c0_i32_0 = arith.constant 0 : i32
    %c0_i32_1 = arith.constant 0 : i32
    return %c0_i32, %c0_i32_0 : i32, i32
  }
  func.func @transform_5(%arg0: i32) -> (i32, i32, i32) {
    %c0_i32 = arith.constant 0 : i32
    %c0_i32_0 = arith.constant 0 : i32
    %c0_i32_1 = arith.constant 0 : i32
    return %arg0, %c0_i32, %c0_i32_0 : i32, i32, i32
  }
}

</mosaic_0001>

<llo_original>
// kernel: tpu_custom_call.1
$region0: #{tpu_custom_call.1}
  #allocation0 [shape = 'u32[]', space=smem, size = 0x4, offset = 0x4, fixed_abs, tag = 'smem constant byte address 0x4 - core index']
  #allocation1 [shape = 'u32[144,128]{1,0:T(1,128)}', space=vmem, size = 0x12000, scoped, tag = 'internal scratch']
  #allocation2 [shape = 'bf16[10,10,8]{2,1,0:T(8,128)(2,1)}', space=vmem, size = 0xa000, scoped, tag = 'scratch operand']
  %s0 = inlined_call_operand.vmem [shape: f32[2,9,9,16], index: 0, kind: input, shape index: {}]
  %s1 = inlined_call_operand.vmem [shape: bf16[2,2,16,8], index: 1, kind: input, shape index: {}]
  %s2 = inlined_call_operand.vmem [shape: f32[1,8], index: 2, kind: input, shape index: {}]
  %s3 = inlined_call_operand.vmem [shape: bf16[4,4,8,4], index: 3, kind: input, shape index: {}]
  %s4 = inlined_call_operand.vmem [shape: f32[1,4], index: 4, kind: input, shape index: {}]
  %s5 = inlined_call_operand.hbm [shape: f32[2,8,128], index: 5, kind: output, shape index: {}]
  %s6 = sld [smem:[#allocation0]]
  $region53: #{tpu_custom_call.1} parent=0
    _
  %s8 = ssub.s32 1, %s6
  %s9 = scalar_select 0, %s8, %s6
  $region1: #{tpu_custom_call.1} parent=0
    #allocation3 [shape = 'u8[8192]{0}', space=vmem, size = 0x2000, scoped, tag = 'output window, operand 0']
    #allocation4 [shape = 's32[2]{0}', space=sflag, size = 0x8, scoped, tag = 'scoped memory for tpu_custom_call.1']
    %10 = vsyncpa [#allocation4], 0
    %s11 = scalar_lea.sflag [#allocation4], 1
    %12 = vsyncpa %s11, 0
    loop: start=0, step=1, limit=4
    $region2: #{tpu_custom_call.1} parent=1 // loop_pre_header
      _
    $region3: #{tpu_custom_call.1} parent=1 // loop_header
      %s14 = sphi 0, %s18
      %p15 = scmp.ge.s32.totalorder %s14, 4
      %s24 = sphi 0, %s26
      %s27 = sphi 0, %s24
      %s28 = sphi 0, %s27
      %s44 = sphi 0, %s28
      %s48 = sphi 0, %s48
      %s50 = sphi 0, %s48
      %s51 = sphi 0, %s50
      %s65 = sphi 0, %s51
      %s69 = sphi 0, %s69
      %s71 = sphi 0, %s69
      %s72 = sphi 0, %s71
      %s86 = sphi 0, %s72
      %s90 = sphi 0, %s90
      %s92 = sphi 0, %s90
      %s93 = sphi 0, %s92
      %s107 = sphi 0, %s93
      %s111 = sphi 0, %s111
      %s113 = sphi 0, %s111
      %s114 = sphi 0, %s113
      %s128 = sphi 0, %s114
      %s134 = sphi 0, %s136
      %s137 = sphi 0, %s134
      %s138 = sphi 0, %s137
      %s154 = sphi 0, %s138
    $region4: #{tpu_custom_call.1} parent=1 // loop_header_branch
      %17 = sbr.rel (%p15) target = $region8
    $region5: #{tpu_custom_call.1} parent=1 // loop_body
      %s19 = ssub.s32 %s14, 1
      %s20 = ssub.s32 %s14, 2
      %s21 = sadd.s32 %s14, 1
      %s22 = ssub.s32 %s14, %s21
      %p23 = scmp.eq.s32.totalorder %s22, 0
      %s25 = sadd.s32 %s24, 1
      %s26 = scalar_select %p23, %s24, %s25
      %p29 = pneg %p23
      %p30 = scmp.eq.s32.totalorder %s14, 1
      %p31 = por %p29, %p30
      %p32 = scmp.ne.s32.totalorder %s24, %s27
      %p33 = scmp.eq.s32.totalorder %s14, 0
      %p34 = por %p32, %p33
      %p35 = scmp.ne.s32.totalorder %s24, %s27
      %p36 = scmp.eq.s32.totalorder %s19, 1
      %p37 = por %p35, %p36
      %p38 = scmp.ne.s32.totalorder %s27, %s28
      %p39 = scmp.eq.s32.totalorder %s19, 0
      %p40 = por %p38, %p39
      %p41 = scmp.ne.s32.totalorder %s27, %s28
      %p42 = scmp.eq.s32.totalorder %s20, 1
      %p43 = por %p41, %p42
      %p45 = scmp.ne.s32.totalorder %s28, %s44
      %p46 = scmp.eq.s32.totalorder %s20, 0
      %p47 = por %p45, %p46
      %s49 = sadd.s32 %s48, 1
      %p52 = scmp.eq.s32.totalorder %s14, 1
      %p53 = scmp.ne.s32.totalorder %s48, %s50
      %p54 = scmp.eq.s32.totalorder %s14, 0
      %p55 = por %p53, %p54
      %p56 = scmp.ne.s32.totalorder %s48, %s50
      %p57 = scmp.eq.s32.totalorder %s19, 1
      %p58 = por %p56, %p57
      %p59 = scmp.ne.s32.totalorder %s50, %s51
      %p60 = scmp.eq.s32.totalorder %s19, 0
      %p61 = por %p59, %p60
      %p62 = scmp.ne.s32.totalorder %s50, %s51
      %p63 = scmp.eq.s32.totalorder %s20, 1
      %p64 = por %p62, %p63
      %p66 = scmp.ne.s32.totalorder %s51, %s65
      %p67 = scmp.eq.s32.totalorder %s20, 0
      %p68 = por %p66, %p67
      %s70 = sadd.s32 %s69, 1
      %p73 = scmp.eq.s32.totalorder %s14, 1
      %p74 = scmp.ne.s32.totalorder %s69, %s71
      %p75 = scmp.eq.s32.totalorder %s14, 0
      %p76 = por %p74, %p75
      %p77 = scmp.ne.s32.totalorder %s69, %s71
      %p78 = scmp.eq.s32.totalorder %s19, 1
      %p79 = por %p77, %p78
      %p80 = scmp.ne.s32.totalorder %s71, %s72
      %p81 = scmp.eq.s32.totalorder %s19, 0
      %p82 = por %p80, %p81
      %p83 = scmp.ne.s32.totalorder %s71, %s72
      %p84 = scmp.eq.s32.totalorder %s20, 1
      %p85 = por %p83, %p84
      %p87 = scmp.ne.s32.totalorder %s72, %s86
      %p88 = scmp.eq.s32.totalorder %s20, 0
      %p89 = por %p87, %p88
      %s91 = sadd.s32 %s90, 1
      %p94 = scmp.eq.s32.totalorder %s14, 1
      %p95 = scmp.ne.s32.totalorder %s90, %s92
      %p96 = scmp.eq.s32.totalorder %s14, 0
      %p97 = por %p95, %p96
      %p98 = scmp.ne.s32.totalorder %s90, %s92
      %p99 = scmp.eq.s32.totalorder %s19, 1
      %p100 = por %p98, %p99
      %p101 = scmp.ne.s32.totalorder %s92, %s93
      %p102 = scmp.eq.s32.totalorder %s19, 0
      %p103 = por %p101, %p102
      %p104 = scmp.ne.s32.totalorder %s92, %s93
      %p105 = scmp.eq.s32.totalorder %s20, 1
      %p106 = por %p104, %p105
      %p108 = scmp.ne.s32.totalorder %s93, %s107
      %p109 = scmp.eq.s32.totalorder %s20, 0
      %p110 = por %p108, %p109
      %s112 = sadd.s32 %s111, 1
      %p115 = scmp.eq.s32.totalorder %s14, 1
      %p116 = scmp.ne.s32.totalorder %s111, %s113
      %p117 = scmp.eq.s32.totalorder %s14, 0
      %p118 = por %p116, %p117
      %p119 = scmp.ne.s32.totalorder %s111, %s113
      %p120 = scmp.eq.s32.totalorder %s19, 1
      %p121 = por %p119, %p120
      %p122 = scmp.ne.s32.totalorder %s113, %s114
      %p123 = scmp.eq.s32.totalorder %s19, 0
      %p124 = por %p122, %p123
      %p125 = scmp.ne.s32.totalorder %s113, %s114
      %p126 = scmp.eq.s32.totalorder %s20, 1
      %p127 = por %p125, %p126
      %p129 = scmp.ne.s32.totalorder %s114, %s128
      %p130 = scmp.eq.s32.totalorder %s20, 0
      %p131 = por %p129, %p130
      %s132 = ssub.s32 %s14, %s21
      %p133 = scmp.eq.s32.totalorder %s132, 0
      %s135 = sadd.s32 %s134, 1
      %s136 = scalar_select %p133, %s134, %s135
      %p139 = pneg %p133
      %p140 = scmp.eq.s32.totalorder %s14, 1
      %p141 = por %p139, %p140
      %p142 = scmp.ne.s32.totalorder %s134, %s137
      %p143 = scmp.eq.s32.totalorder %s14, 0
      %p144 = por %p142, %p143
      %p145 = scmp.ne.s32.totalorder %s134, %s137
      %p146 = scmp.eq.s32.totalorder %s19, 1
      %p147 = por %p145, %p146
      %p148 = scmp.ne.s32.totalorder %s137, %s138
      %p149 = scmp.eq.s32.totalorder %s19, 0
      %p150 = por %p148, %p149
      %p151 = scmp.ne.s32.totalorder %s137, %s138
      %p152 = scmp.eq.s32.totalorder %s20, 1
      %p153 = por %p151, %p152
      %p155 = scmp.ne.s32.totalorder %s138, %s154
      %p156 = scmp.eq.s32.totalorder %s20, 0
      %p157 = por %p155, %p156
      %p158 = scmp.le.s32.totalorder 1, %s14
      %p159 = scmp.lt.s32.totalorder %s14, 3
      %p160 = pnand %p158, %p159
      %p161 = pneg %p160
      // Predicated region
      $region9: #{tpu_custom_call.1} parent=5 // pred_check
        _
      $region10: #{tpu_custom_call.1} parent=5 // pred_check_branch
        %163 = sbr.rel (%p160) target = $region12
      $region11: #{tpu_custom_call.1} parent=5 // pred_region
        %s164 = ssub.s32 %s14, 1
        // Predicated region
        $region13: #{tpu_custom_call.1} parent=11 // pred_check
          %p165 = pneg %p61
        $region14: #{tpu_custom_call.1} parent=11 // pred_check_branch
          %167 = sbr.rel (%p165) target = $region16
        $region15: #{tpu_custom_call.1} parent=11 // pred_region
          _
        $region16: #{tpu_custom_call.1} parent=11 // pred_fallthru
          _
        // Predicated region
        $region17: #{tpu_custom_call.1} parent=11 // pred_check
          %p168 = pneg %p82
        $region18: #{tpu_custom_call.1} parent=11 // pred_check_branch
          %170 = sbr.rel (%p168) target = $region20
        $region19: #{tpu_custom_call.1} parent=11 // pred_region
          _
        $region20: #{tpu_custom_call.1} parent=11 // pred_fallthru
          _
        // Predicated region
        $region21: #{tpu_custom_call.1} parent=11 // pred_check
          %p171 = pneg %p103
        $region22: #{tpu_custom_call.1} parent=11 // pred_check_branch
          %173 = sbr.rel (%p171) target = $region24
        $region23: #{tpu_custom_call.1} parent=11 // pred_region
          _
        $region24: #{tpu_custom_call.1} parent=11 // pred_fallthru
          _
        // Predicated region
        $region25: #{tpu_custom_call.1} parent=11 // pred_check
          %p174 = pneg %p124
        $region26: #{tpu_custom_call.1} parent=11 // pred_check_branch
          %176 = sbr.rel (%p174) target = $region28
        $region27: #{tpu_custom_call.1} parent=11 // pred_region
          _
        $region28: #{tpu_custom_call.1} parent=11 // pred_fallthru
          _
      $region12: #{tpu_custom_call.1} parent=5 // pred_fallthru
        _
      %p177 = scmp.lt.s32.totalorder %s14, 2
      // Predicated region
      $region29: #{tpu_custom_call.1} parent=5 // pred_check
        %p178 = pneg %p177
      $region30: #{tpu_custom_call.1} parent=5 // pred_check_branch
        %180 = sbr.rel (%p178) target = $region32
      $region31: #{tpu_custom_call.1} parent=5 // pred_region
        // Predicated region
        $region33: #{tpu_custom_call.1} parent=31 // pred_check
          %p181 = pneg %p34
        $region34: #{tpu_custom_call.1} parent=31 // pred_check_branch
          %183 = sbr.rel (%p181) target = $region36
        $region35: #{tpu_custom_call.1} parent=31 // pred_region
          %p184 = scmp.lt.s32.totalorder %s14, 1
          %s185 = scalar_select %p184, %s14, 1
          %s186 = smul.addr %s185, 18
          %s187 = smul.addr %s186, 8
          %s188 = scalar_lea.vmem %s0, %s187
        $region36: #{tpu_custom_call.1} parent=31 // pred_fallthru
          _
      $region32: #{tpu_custom_call.1} parent=5 // pred_fallthru
        _
      %p189 = scmp.le.s32.totalorder 1, %s14
      %p190 = scmp.lt.s32.totalorder %s14, 3
      %p191 = pnand %p189, %p190
      %p192 = pneg %p191
      // Predicated region
      $region37: #{tpu_custom_call.1} parent=5 // pred_check
        _
      $region38: #{tpu_custom_call.1} parent=5 // pred_check_branch
        %194 = sbr.rel (%p191) target = $region40
      $region39: #{tpu_custom_call.1} parent=5 // pred_region
        %s195 = ssub.s32 %s14, 1
        %p196 = scmp.lt.s32.totalorder %s19, 1
        %s197 = scalar_select %p196, %s19, 1
        %s198 = smul.addr %s197, 18
        %s199 = smul.addr %s198, 8
        %s200 = scalar_lea.vmem %s0, %s199
        %p201 = pneg %p40
        %p202 = pneg %p37
        %p203 = pneg %p61
        %p204 = pneg %p58
        %p205 = pneg %p82
        %p206 = pneg %p79
        %p207 = pneg %p103
        %p208 = pneg %p100
        %p209 = pneg %p124
        %p210 = pneg %p121
        %p211 = pneg %p150
        %p212 = pneg %p147
        %s213 = sand.u32 %s137, 1
        %s214 = scalar_lea.sflag [#allocation4], %s213
        %s215 = sand.u32 %s137, 1
        %s216 = smul.addr %s215, 8
        %s217 = scalar_lea.vmem [#allocation3], %s216
        %p218 = scmp.lt.s32.totalorder %s19, 1
        %s219 = scalar_select %p218, %s19, 1
        %s220 = smul.addr %s219, 18
        %s221 = smul.addr %s220, 8
        %s222 = scalar_lea.vmem %s0, %s221
        %v224 = vld [vmem:[%s222] sm:$0xff]
        %v225 = vld [vmem:[%s222 + $0x8] sm:$0x1]
        %v226 = vld [vmem:[%s222 + $0x10] sm:$0xff]
        %v227 = vld [vmem:[%s222 + $0x18] sm:$0x1]
        %v228 = vld [vmem:[%s222 + $0x20] sm:$0xff]
        %v229 = vld [vmem:[%s222 + $0x28] sm:$0x1]
        %v230 = vld [vmem:[%s222 + $0x30] sm:$0xff]
        %v231 = vld [vmem:[%s222 + $0x38] sm:$0x1]
        %v232 = vld [vmem:[%s222 + $0x40] sm:$0xff]
        %v233 = vld [vmem:[%s222 + $0x48] sm:$0x1]
        %v234 = vld [vmem:[%s222 + $0x50] sm:$0xff]
        %v235 = vld [vmem:[%s222 + $0x58] sm:$0x1]
        %v236 = vld [vmem:[%s222 + $0x60] sm:$0xff]
        %v237 = vld [vmem:[%s222 + $0x68] sm:$0x1]
        %v238 = vld [vmem:[%s222 + $0x70] sm:$0xff]
        %v239 = vld [vmem:[%s222 + $0x78] sm:$0x1]
        %v240 = vld [vmem:[%s222 + $0x80] sm:$0xff]
        %v241 = vld [vmem:[%s222 + $0x88] sm:$0x1]
        %vm242 = vcmp.gt.f32.partialorder %v224, 0.0
        %vm243 = vcmp.gt.f32.partialorder %v225, 0.0
        %vm244 = vcmp.gt.f32.partialorder %v226, 0.0
        %vm245 = vcmp.gt.f32.partialorder %v227, 0.0
        %vm246 = vcmp.gt.f32.partialorder %v228, 0.0
        %vm247 = vcmp.gt.f32.partialorder %v229, 0.0
        %vm248 = vcmp.gt.f32.partialorder %v230, 0.0
        %vm249 = vcmp.gt.f32.partialorder %v231, 0.0
        %vm250 = vcmp.gt.f32.partialorder %v232, 0.0
        %vm251 = vcmp.gt.f32.partialorder %v233, 0.0
        %vm252 = vcmp.gt.f32.partialorder %v234, 0.0
        %vm253 = vcmp.gt.f32.partialorder %v235, 0.0
        %vm254 = vcmp.gt.f32.partialorder %v236, 0.0
        %vm255 = vcmp.gt.f32.partialorder %v237, 0.0
        %vm256 = vcmp.gt.f32.partialorder %v238, 0.0
        %vm257 = vcmp.gt.f32.partialorder %v239, 0.0
        %vm258 = vcmp.gt.f32.partialorder %v240, 0.0
        %vm259 = vcmp.gt.f32.partialorder %v241, 0.0
        %v260 = vmul.f32 %v224, 0.2
        %v261 = vmul.f32 %v225, 0.2
        %v262 = vmul.f32 %v226, 0.2
        %v263 = vmul.f32 %v227, 0.2
        %v264 = vmul.f32 %v228, 0.2
        %v265 = vmul.f32 %v229, 0.2
        %v266 = vmul.f32 %v230, 0.2
        %v267 = vmul.f32 %v231, 0.2
        %v268 = vmul.f32 %v232, 0.2
        %v269 = vmul.f32 %v233, 0.2
        %v270 = vmul.f32 %v234, 0.2
        %v271 = vmul.f32 %v235, 0.2
        %v272 = vmul.f32 %v236, 0.2
        %v273 = vmul.f32 %v237, 0.2
        %v274 = vmul.f32 %v238, 0.2
        %v275 = vmul.f32 %v239, 0.2
        %v276 = vmul.f32 %v240, 0.2
        %v277 = vmul.f32 %v241, 0.2
        %v278 = vsel %vm242, %v224, %v260
        %v279 = vsel %vm243, %v225, %v261
        %v280 = vsel %vm244, %v226, %v262
        %v281 = vsel %vm245, %v227, %v263
        %v282 = vsel %vm246, %v228, %v264
        %v283 = vsel %vm247, %v229, %v265
        %v284 = vsel %vm248, %v230, %v266
        %v285 = vsel %vm249, %v231, %v267
        %v286 = vsel %vm250, %v232, %v268
        %v287 = vsel %vm251, %v233, %v269
        %v288 = vsel %vm252, %v234, %v270
        %v289 = vsel %vm253, %v235, %v271
        %v290 = vsel %vm254, %v236, %v272
        %v291 = vsel %vm255, %v237, %v273
        %v292 = vsel %vm256, %v238, %v274
        %v293 = vsel %vm257, %v239, %v275
        %v294 = vsel %vm258, %v240, %v276
        %v295 = vsel %vm259, %v241, %v277
        %v296 = vpack.c.bf16 %v279, %v278
        %v297 = vpack.c.bf16 %v281, %v280
        %v298 = vpack.c.bf16 %v283, %v282
        %v299 = vpack.c.bf16 %v285, %v284
        %v300 = vpack.c.bf16 %v287, %v286
        %v301 = vpack.c.bf16 %v289, %v288
        %v302 = vpack.c.bf16 %v291, %v290
        %v303 = vpack.c.bf16 %v293, %v292
        %v304 = vpack.c.bf16 %v295, %v294
        %v305 = vld [vmem:[%s1] sm:$0xf]
        %v306 = vld [vmem:[%s1 + $0x4] sm:$0xf]
        %v315 = vunpack.c.l.b16 %v296
        %v316 = vunpack.c.h.b16 %v296
        %v317 = vunpack.c.l.b16 %v297
        %v318 = vunpack.c.h.b16 %v297
        %v319 = vunpack.c.l.b16 %v298
        %v320 = vunpack.c.h.b16 %v298
        %v321 = vunpack.c.l.b16 %v299
        %v322 = vunpack.c.h.b16 %v299
        %v323 = vunpack.c.l.b16 %v300
        %v324 = vunpack.c.h.b16 %v300
        %v325 = vunpack.c.l.b16 %v301
        %v326 = vunpack.c.h.b16 %v301
        %v327 = vunpack.c.l.b16 %v302
        %v328 = vunpack.c.h.b16 %v302
        %v329 = vunpack.c.l.b16 %v303
        %v330 = vunpack.c.h.b16 %v303
        %v331 = vpack.c.b16 %v315, %v315
        %v332 = vpack.c.b16 %v316, %v316
        %v333 = vpack.c.b16 %v317, %v317
        %v334 = vpack.c.b16 %v318, %v318
        %v335 = vpack.c.b16 %v319, %v319
        %v336 = vpack.c.b16 %v320, %v320
        %v337 = vpack.c.b16 %v321, %v321
        %v338 = vpack.c.b16 %v322, %v322
        %v339 = vpack.c.b16 %v323, %v323
        %v340 = vpack.c.b16 %v324, %v324
        %v341 = vpack.c.b16 %v325, %v325
        %v342 = vpack.c.b16 %v326, %v326
        %v343 = vpack.c.b16 %v327, %v327
        %v344 = vpack.c.b16 %v328, %v328
        %v345 = vpack.c.b16 %v329, %v329
        %v346 = vpack.c.b16 %v330, %v330
        %vm347 = vsmask.f32 3328
        %vm348 = vsmask.f32 7440
        %vm349 = vmor %vm347, %vm348
        %v351 = vshrl.u32 %v331, 16
        %v353 = vrot.slane %v351, 4
        %v354 = vshll.u32 %v331, 16
        %v356 = vrot.slane %v354, 5
        %v357 = vor.u32 %v353, %v356
        %v358 = vrot.slane %v357, 4
        %v360 = vshll.u32 %v332, 16
        %v362 = vrot.slane %v360, 5
        %v363 = vsel %vm349, %v358, %v362
        %v365 = vshrl.u32 %v333, 16
        %v367 = vrot.slane %v365, 4
        %v368 = vshll.u32 %v333, 16
        %v370 = vrot.slane %v368, 5
        %v371 = vor.u32 %v367, %v370
        %v372 = vrot.slane %v371, 4
        %v374 = vshll.u32 %v334, 16
        %v376 = vrot.slane %v374, 5
        %v377 = vsel %vm349, %v372, %v376
        %v379 = vshrl.u32 %v335, 16
        %v381 = vrot.slane %v379, 4
        %v382 = vshll.u32 %v335, 16
        %v384 = vrot.slane %v382, 5
        %v385 = vor.u32 %v381, %v384
        %v386 = vrot.slane %v385, 4
        %v388 = vshll.u32 %v336, 16
        %v390 = vrot.slane %v388, 5
        %v391 = vsel %vm349, %v386, %v390
        %v393 = vshrl.u32 %v337, 16
        %v395 = vrot.slane %v393, 4
        %v396 = vshll.u32 %v337, 16
        %v398 = vrot.slane %v396, 5
        %v399 = vor.u32 %v395, %v398
        %v400 = vrot.slane %v399, 4
        %v402 = vshll.u32 %v338, 16
        %v404 = vrot.slane %v402, 5
        %v405 = vsel %vm349, %v400, %v404
        %v407 = vshrl.u32 %v339, 16
        %v409 = vrot.slane %v407, 4
        %v410 = vshll.u32 %v339, 16
        %v412 = vrot.slane %v410, 5
        %v413 = vor.u32 %v409, %v412
        %v414 = vrot.slane %v413, 4
        %v416 = vshll.u32 %v340, 16
        %v418 = vrot.slane %v416, 5
        %v419 = vsel %vm349, %v414, %v418
        %v421 = vshrl.u32 %v341, 16
        %v423 = vrot.slane %v421, 4
        %v424 = vshll.u32 %v341, 16
        %v426 = vrot.slane %v424, 5
        %v427 = vor.u32 %v423, %v426
        %v428 = vrot.slane %v427, 4
        %v430 = vshll.u32 %v342, 16
        %v432 = vrot.slane %v430, 5
        %v433 = vsel %vm349, %v428, %v432
        %v435 = vshrl.u32 %v343, 16
        %v437 = vrot.slane %v435, 4
        %v438 = vshll.u32 %v343, 16
        %v440 = vrot.slane %v438, 5
        %v441 = vor.u32 %v437, %v440
        %v442 = vrot.slane %v441, 4
        %v444 = vshll.u32 %v344, 16
        %v446 = vrot.slane %v444, 5
        %v447 = vsel %vm349, %v442, %v446
        %v449 = vshrl.u32 %v345, 16
        %v451 = vrot.slane %v449, 4
        %v452 = vshll.u32 %v345, 16
        %v454 = vrot.slane %v452, 5
        %v455 = vor.u32 %v451, %v454
        %v456 = vrot.slane %v455, 4
        %v458 = vshll.u32 %v346, 16
        %v460 = vrot.slane %v458, 5
        %v461 = vsel %vm349, %v456, %v460
        %s462 = scalar_lea.vmem %s1, 8
        %v463 = vld [vmem:[%s462] sm:$0xf]
        %v464 = vld [vmem:[%s462 + $0x4] sm:$0xf]
        %v465 = vunpack.c.l.b16 %v363
        %v466 = vunpack.c.l.b16 %v377
        %v467 = vunpack.c.l.b16 %v391
        %v468 = vunpack.c.l.b16 %v405
        %v469 = vunpack.c.l.b16 %v419
        %v470 = vunpack.c.l.b16 %v433
        %v471 = vunpack.c.l.b16 %v447
        %v472 = vunpack.c.l.b16 %v461
        %v473 = vpack.c.b16 %v466, %v465
        %v474 = vpack.c.b16 %v468, %v467
        %v475 = vpack.c.b16 %v470, %v469
        %v476 = vpack.c.b16 %v472, %v471
        %v479 = vunpack.c.l.b16 %v463
        %v480 = vunpack.c.l.b16 %v464
        %v481 = vpack.c.b16 %v480, %v479
        %vm483 = vcmask 130048
        %v485 = vsel %vm483, %v473, 0
        %v488 = vsel %vm483, %v474, 0
        %v491 = vsel %vm483, %v475, 0
        %v494 = vsel %vm483, %v476, 0
        %496 = vmatprep.subr.bf16.mxu0 0
        %497 = vmatpush1.bf16.msra.mxu0 %v481
        %498 = vmatprep.subr.bf16.mxu0 0
        %499 = vmatpush1.bf16.msra.mxu0 0
        %500 = vmatprep.subr.bf16.mxu0 0
        %501 = vmatpush1.bf16.msra.mxu0 0
        %502 = vmatprep.subr.bf16.mxu0 0
        %503 = vmatpush1.bf16.msra.mxu0 0
        %504 = vmatprep.subr.bf16.mxu0 0
        %505 = vmatpush1.bf16.msra.mxu0 0
        %506 = vmatprep.subr.bf16.mxu0 0
        %507 = vmatpush1.bf16.msra.mxu0 0
        %508 = vmatprep.subr.bf16.mxu0 0
        %509 = vmatpush1.bf16.msra.mxu0 0
        %510 = vmatprep.subr.bf16.mxu0 0
        %511 = vmatpush1.bf16.msra.mxu0 0
        %512 = vmatprep.subr.bf16.mxu0 0
        %513 = vmatpush1.bf16.msra.mxu0 0
        %514 = vmatprep.subr.bf16.mxu0 0
        %515 = vmatpush1.bf16.msra.mxu0 0
        %516 = vmatprep.subr.bf16.mxu0 0
        %517 = vmatpush1.bf16.msra.mxu0 0
        %518 = vmatprep.subr.bf16.mxu0 0
        %519 = vmatpush1.bf16.msra.mxu0 0
        %520 = vmatprep.subr.bf16.mxu0 0
        %521 = vmatpush1.bf16.msra.mxu0 0
        %522 = vmatprep.subr.bf16.mxu0 0
        %523 = vmatpush1.bf16.msra.mxu0 0
        %524 = vmatprep.subr.bf16.mxu0 0
        %525 = vmatpush1.bf16.msra.mxu0 0
        %526 = vmatprep.subr.bf16.mxu0 0
        %527 = vmatpush1.bf16.msra.mxu0 0
        %528 = vmatprep.mubr.bf16.mxu0 0
        %529 = vmatmul.mubr.bf16.gmra.mrb[0].mxu0 %v485
        %v530 = vpop.f32.mrb[0].mxu0
        %v531 = vadd.f32 0.0, %v530
        %v532 = vpop.f32.mrb[0].mxu0
        %v533 = vpop.f32.mrb[0].mxu0
        %v534 = vadd.f32 0.0, %v533
        %v535 = vpop.f32.mrb[0].mxu0
        %536 = vmatprep.mubr.bf16.mxu0 0
        %537 = vmatmul.mubr.bf16.gmra.mrb[0].mxu0 %v488
        %v538 = vpop.f32.mrb[0].mxu0
        %v539 = vadd.f32 0.0, %v538
        %v540 = vpop.f32.mrb[0].mxu0
        %v541 = vpop.f32.mrb[0].mxu0
        %v542 = vadd.f32 0.0, %v541
        %v543 = vpop.f32.mrb[0].mxu0
        %544 = vmatprep.mubr.bf16.mxu0 0
        %545 = vmatmul.mubr.bf16.gmra.mrb[0].mxu0 %v491
        %v546 = vpop.f32.mrb[0].mxu0
        %v547 = vadd.f32 0.0, %v546
        %v548 = vpop.f32.mrb[0].mxu0
        %v549 = vpop.f32.mrb[0].mxu0
        %v550 = vadd.f32 0.0, %v549
        %v551 = vpop.f32.mrb[0].mxu0
        %552 = vmatprep.mubr.bf16.mxu0 0
        %553 = vmatmul.mubr.bf16.gmra.mrb[0].mxu0 %v494
        %v554 = vpop.f32.mrb[0].mxu0
        %v555 = vadd.f32 0.0, %v554
        %v556 = vpop.f32.mrb[0].mxu0
        %v557 = vpop.f32.mrb[0].mxu0
        %v558 = vadd.f32 0.0, %v557
        %v559 = vpop.f32.mrb[0].mxu0
        %560 = vdwg.mxu0
        %v561 = vpack.c.b16 %v317, %v315
        %v562 = vpack.c.b16 %v321, %v319
        %v563 = vpack.c.b16 %v325, %v323
        %v564 = vpack.c.b16 %v329, %v327
        %v567 = vunpack.c.l.b16 %v305
        %v568 = vunpack.c.l.b16 %v306
        %v569 = vpack.c.b16 %v568, %v567
        %v572 = vsel %vm483, %v561, 0
        %v575 = vsel %vm483, %v562, 0
        %v578 = vsel %vm483, %v563, 0
        %v581 = vsel %vm483, %v564, 0
        %583 = vmatprep.subr.bf16.mxu0 0
        %584 = vmatpush1.bf16.msra.mxu0 %v569
        %585 = vmatprep.subr.bf16.mxu0 0
        %586 = vmatpush1.bf16.msra.mxu0 0
        %587 = vmatprep.subr.bf16.mxu0 0
        %588 = vmatpush1.bf16.msra.mxu0 0
        %589 = vmatprep.subr.bf16.mxu0 0
        %590 = vmatpush1.bf16.msra.mxu0 0
        %591 = vmatprep.subr.bf16.mxu0 0
        %592 = vmatpush1.bf16.msra.mxu0 0
        %593 = vmatprep.subr.bf16.mxu0 0
        %594 = vmatpush1.bf16.msra.mxu0 0
        %595 = vmatprep.subr.bf16.mxu0 0
        %596 = vmatpush1.bf16.msra.mxu0 0
        %597 = vmatprep.subr.bf16.mxu0 0
        %598 = vmatpush1.bf16.msra.mxu0 0
        %599 = vmatprep.subr.bf16.mxu0 0
        %600 = vmatpush1.bf16.msra.mxu0 0
        %601 = vmatprep.subr.bf16.mxu0 0
        %602 = vmatpush1.bf16.msra.mxu0 0
        %603 = vmatprep.subr.bf16.mxu0 0
        %604 = vmatpush1.bf16.msra.mxu0 0
        %605 = vmatprep.subr.bf16.mxu0 0
        %606 = vmatpush1.bf16.msra.mxu0 0
        %607 = vmatprep.subr.bf16.mxu0 0
        %608 = vmatpush1.bf16.msra.mxu0 0
        %609 = vmatprep.subr.bf16.mxu0 0
        %610 = vmatpush1.bf16.msra.mxu0 0
        %611 = vmatprep.subr.bf16.mxu0 0
        %612 = vmatpush1.bf16.msra.mxu0 0
        %613 = vmatprep.subr.bf16.mxu0 0
        %614 = vmatpush1.bf16.msra.mxu0 0
        %615 = vmatprep.mubr.bf16.mxu0 0
        %616 = vmatmul.mubr.bf16.gmra.mrb[0].mxu0 %v572
        %v617 = vpop.f32.mrb[0].mxu0
        %v618 = vadd.f32 %v531, %v617
        %v619 = vpop.f32.mrb[0].mxu0
        %v620 = vpop.f32.mrb[0].mxu0
        %v621 = vadd.f32 %v534, %v620
        %v622 = vpop.f32.mrb[0].mxu0
        %623 = vmatprep.mubr.bf16.mxu0 0
        %624 = vmatmul.mubr.bf16.gmra.mrb[0].mxu0 %v575
        %v625 = vpop.f32.mrb[0].mxu0
        %v626 = vadd.f32 %v539, %v625
        %v627 = vpop.f32.mrb[0].mxu0
        %v628 = vpop.f32.mrb[0].mxu0
        %v629 = vadd.f32 %v542, %v628
        %v630 = vpop.f32.mrb[0].mxu0
        %631 = vmatprep.mubr.bf16.mxu0 0
        %632 = vmatmul.mubr.bf16.gmra.mrb[0].mxu0 %v578
        %v633 = vpop.f32.mrb[0].mxu0
        %v634 = vadd.f32 %v547, %v633
        %v635 = vpop.f32.mrb[0].mxu0
        %v636 = vpop.f32.mrb[0].mxu0
        %v637 = vadd.f32 %v550, %v636
        %v638 = vpop.f32.mrb[0].mxu0
        %639 = vmatprep.mubr.bf16.mxu0 0
        %640 = vmatmul.mubr.bf16.gmra.mrb[0].mxu0 %v581
        %v641 = vpop.f32.mrb[0].mxu0
        %v642 = vadd.f32 %v555, %v641
        %v643 = vpop.f32.mrb[0].mxu0
        %v644 = vpop.f32.mrb[0].mxu0
        %v645 = vadd.f32 %v558, %v644
        %v646 = vpop.f32.mrb[0].mxu0
        %647 = vdwg.mxu0
        %s648 = scalar_lea.vmem %s1, 16
        %v649 = vld [vmem:[%s648] sm:$0xf]
        %v650 = vld [vmem:[%s648 + $0x4] sm:$0xf]
        %v652 = vunpack.c.l.b16 %v304
        %v653 = vpack.c.b16 %v319, %v317
        %v654 = vpack.c.b16 %v323, %v321
        %v655 = vpack.c.b16 %v327, %v325
        %v656 = vpack.c.b16 %v652, %v329
        %v659 = vunpack.c.l.b16 %v649
        %v660 = vunpack.c.l.b16 %v650
        %v661 = vpack.c.b16 %v660, %v659
        %v664 = vsel %vm483, %v653, 0
        %v667 = vsel %vm483, %v654, 0
        %v670 = vsel %vm483, %v655, 0
        %v673 = vsel %vm483, %v656, 0
        %675 = vmatprep.subr.bf16.mxu0 0
        %676 = vmatpush1.bf16.msra.mxu0 %v661
        %677 = vmatprep.subr.bf16.mxu0 0
        %678 = vmatpush1.bf16.msra.mxu0 0
        %679 = vmatprep.subr.bf16.mxu0 0
        %680 = vmatpush1.bf16.msra.mxu0 0
        %681 = vmatprep.subr.bf16.mxu0 0
        %682 = vmatpush1.bf16.msra.mxu0 0
        %683 = vmatprep.subr.bf16.mxu0 0
        %684 = vmatpush1.bf16.msra.mxu0 0
        %685 = vmatprep.subr.bf16.mxu0 0
        %686 = vmatpush1.bf16.msra.mxu0 0
        %687 = vmatprep.subr.bf16.mxu0 0
        %688 = vmatpush1.bf16.msra.mxu0 0
        %689 = vmatprep.subr.bf16.mxu0 0
        %690 = vmatpush1.bf16.msra.mxu0 0
        %691 = vmatprep.subr.bf16.mxu0 0
        %692 = vmatpush1.bf16.msra.mxu0 0
        %693 = vmatprep.subr.bf16.mxu0 0
        %694 = vmatpush1.bf16.msra.mxu0 0
        %695 = vmatprep.subr.bf16.mxu0 0
        %696 = vmatpush1.bf16.msra.mxu0 0
        %697 = vmatprep.subr.bf16.mxu0 0
        %698 = vmatpush1.bf16.msra.mxu0 0
        %699 = vmatprep.subr.bf16.mxu0 0
        %700 = vmatpush1.bf16.msra.mxu0 0
        %701 = vmatprep.subr.bf16.mxu0 0
        %702 = vmatpush1.bf16.msra.mxu0 0
        %703 = vmatprep.subr.bf16.mxu0 0
        %704 = vmatpush1.bf16.msra.mxu0 0
        %705 = vmatprep.subr.bf16.mxu0 0
        %706 = vmatpush1.bf16.msra.mxu0 0
        %707 = vmatprep.mubr.bf16.mxu0 0
        %708 = vmatmul.mubr.bf16.gmra.mrb[0].mxu0 %v664
        %v709 = vpop.f32.mrb[0].mxu0
        %v710 = vadd.f32 0.0, %v709
        %v711 = vpop.f32.mrb[0].mxu0
        %v712 = vpop.f32.mrb[0].mxu0
        %v713 = vadd.f32 0.0, %v712
        %v714 = vpop.f32.mrb[0].mxu0
        %715 = vmatprep.mubr.bf16.mxu0 0
        %716 = vmatmul.mubr.bf16.gmra.mrb[0].mxu0 %v667
        %v717 = vpop.f32.mrb[0].mxu0
        %v718 = vadd.f32 0.0, %v717
        %v719 = vpop.f32.mrb[0].mxu0
        %v720 = vpop.f32.mrb[0].mxu0
        %v721 = vadd.f32 0.0, %v720
        %v722 = vpop.f32.mrb[0].mxu0
        %723 = vmatprep.mubr.bf16.mxu0 0
        %724 = vmatmul.mubr.bf16.gmra.mrb[0].mxu0 %v670
        %v725 = vpop.f32.mrb[0].mxu0
        %v726 = vadd.f32 0.0, %v725
        %v727 = vpop.f32.mrb[0].mxu0
        %v728 = vpop.f32.mrb[0].mxu0
        %v729 = vadd.f32 0.0, %v728
        %v730 = vpop.f32.mrb[0].mxu0
        %731 = vmatprep.mubr.bf16.mxu0 0
        %732 = vmatmul.mubr.bf16.gmra.mrb[0].mxu0 %v673
        %v733 = vpop.f32.mrb[0].mxu0
        %v734 = vadd.f32 0.0, %v733
        %v735 = vpop.f32.mrb[0].mxu0
        %v736 = vpop.f32.mrb[0].mxu0
        %v737 = vadd.f32 0.0, %v736
        %v738 = vpop.f32.mrb[0].mxu0
        %739 = vdwg.mxu0
        %v740 = vadd.f32 %v618, %v710
        %v741 = vadd.f32 %v621, %v713
        %v742 = vadd.f32 %v626, %v718
        %v743 = vadd.f32 %v629, %v721
        %v744 = vadd.f32 %v634, %v726
        %v745 = vadd.f32 %v637, %v729
        %v746 = vadd.f32 %v642, %v734
        %v747 = vadd.f32 %v645, %v737
        %v748 = vunpack.c.h.b16 %v304
        %v749 = vpack.c.b16 %v652, %v652
        %v750 = vpack.c.b16 %v748, %v748
        %v752 = vshrl.u32 %v749, 16
        %v754 = vrot.slane %v752, 4
        %v755 = vshll.u32 %v749, 16
        %v757 = vrot.slane %v755, 5
        %v758 = vor.u32 %v754, %v757
        %v759 = vrot.slane %v758, 4
        %v761 = vshll.u32 %v750, 16
        %v763 = vrot.slane %v761, 5
        %v764 = vsel %vm349, %v759, %v763
        %s765 = scalar_lea.vmem %s1, 24
        %v766 = vld [vmem:[%s765] sm:$0xf]
        %v767 = vld [vmem:[%s765 + $0x4] sm:$0xf]
        %v768 = vunpack.c.l.b16 %v764
        %v769 = vpack.c.b16 %v467, %v466
        %v770 = vpack.c.b16 %v469, %v468
        %v771 = vpack.c.b16 %v471, %v470
        %v772 = vpack.c.b16 %v768, %v472
        %v775 = vunpack.c.l.b16 %v766
        %v776 = vunpack.c.l.b16 %v767
        %v777 = vpack.c.b16 %v776, %v775
        %v780 = vsel %vm483, %v769, 0
        %v783 = vsel %vm483, %v770, 0
        %v786 = vsel %vm483, %v771, 0
        %v789 = vsel %vm483, %v772, 0
        %791 = vmatprep.subr.bf16.mxu0 0
        %792 = vmatpush1.bf16.msra.mxu0 %v777
        %793 = vmatprep.subr.bf16.mxu0 0
        %794 = vmatpush1.bf16.msra.mxu0 0
        %795 = vmatprep.subr.bf16.mxu0 0
        %796 = vmatpush1.bf16.msra.mxu0 0
        %797 = vmatprep.subr.bf16.mxu0 0
        %798 = vmatpush1.bf16.msra.mxu0 0
        %799 = vmatprep.subr.bf16.mxu0 0
        %800 = vmatpush1.bf16.msra.mxu0 0
        %801 = vmatprep.subr.bf16.mxu0 0
        %802 = vmatpush1.bf16.msra.mxu0 0
        %803 = vmatprep.subr.bf16.mxu0 0
        %804 = vmatpush1.bf16.msra.mxu0 0
        %805 = vmatprep.subr.bf16.mxu0 0
        %806 = vmatpush1.bf16.msra.mxu0 0
        %807 = vmatprep.subr.bf16.mxu0 0
        %808 = vmatpush1.bf16.msra.mxu0 0
        %809 = vmatprep.subr.bf16.mxu0 0
        %810 = vmatpush1.bf16.msra.mxu0 0
        %811 = vmatprep.subr.bf16.mxu0 0
        %812 = vmatpush1.bf16.msra.mxu0 0
        %813 = vmatprep.subr.bf16.mxu0 0
        %814 = vmatpush1.bf16.msra.mxu0 0
        %815 = vmatprep.subr.bf16.mxu0 0
        %816 = vmatpush1.bf16.msra.mxu0 0
        %817 = vmatprep.subr.bf16.mxu0 0
        %818 = vmatpush1.bf16.msra.mxu0 0
        %819 = vmatprep.subr.bf16.mxu0 0
        %820 = vmatpush1.bf16.msra.mxu0 0
        %821 = vmatprep.subr.bf16.mxu0 0
        %822 = vmatpush1.bf16.msra.mxu0 0
        %823 = vmatprep.mubr.bf16.mxu0 0
        %824 = vmatmul.mubr.bf16.gmra.mrb[0].mxu0 %v780
        %v825 = vpop.f32.mrb[0].mxu0
        %v826 = vadd.f32 0.0, %v825
        %v827 = vpop.f32.mrb[0].mxu0
        %v828 = vpop.f32.mrb[0].mxu0
        %v829 = vadd.f32 0.0, %v828
        %v830 = vpop.f32.mrb[0].mxu0
        %831 = vmatprep.mubr.bf16.mxu0 0
        %832 = vmatmul.mubr.bf16.gmra.mrb[0].mxu0 %v783
        %v833 = vpop.f32.mrb[0].mxu0
        %v834 = vadd.f32 0.0, %v833
        %v835 = vpop.f32.mrb[0].mxu0
        %v836 = vpop.f32.mrb[0].mxu0
        %v837 = vadd.f32 0.0, %v836
        %v838 = vpop.f32.mrb[0].mxu0
        %839 = vmatprep.mubr.bf16.mxu0 0
        %840 = vmatmul.mubr.bf16.gmra.mrb[0].mxu0 %v786
        %v841 = vpop.f32.mrb[0].mxu0
        %v842 = vadd.f32 0.0, %v841
        %v843 = vpop.f32.mrb[0].mxu0
        %v844 = vpop.f32.mrb[0].mxu0
        %v845 = vadd.f32 0.0, %v844
        %v846 = vpop.f32.mrb[0].mxu0
        %847 = vmatprep.mubr.bf16.mxu0 0
        %848 = vmatmul.mubr.bf16.gmra.mrb[0].mxu0 %v789
        %v849 = vpop.f32.mrb[0].mxu0
        %v850 = vadd.f32 0.0, %v849
        %v851 = vpop.f32.mrb[0].mxu0
        %v852 = vpop.f32.mrb[0].mxu0
        %v853 = vadd.f32 0.0, %v852
        %v854 = vpop.f32.mrb[0].mxu0
        %855 = vdwg.mxu0
        %v856 = vadd.f32 %v740, %v826
        %v857 = vadd.f32 %v741, %v829
        %v858 = vadd.f32 %v742, %v834
        %v859 = vadd.f32 %v743, %v837
        %v860 = vadd.f32 %v744, %v842
        %v861 = vadd.f32 %v745, %v845
        %v862 = vadd.f32 %v746, %v850
        %v863 = vadd.f32 %v747, %v853
        %v864 = vld [vmem:[%s2] sm:$0x1]
        %v866 = vlaneseq
        %v867 = vshrl.u32 %v866, 7
        %v868 = vsub.s32 0, %v867
        %v869 = vrot.slane %v864, %v868
        %v871 = vadd.f32 %v856, %v869
        %v872 = vadd.f32 %v857, %v869
        %v873 = vadd.f32 %v858, %v869
        %v874 = vadd.f32 %v859, %v869
        %v875 = vadd.f32 %v860, %v869
        %v876 = vadd.f32 %v861, %v869
        %v877 = vadd.f32 %v862, %v869
        %v878 = vadd.f32 %v863, %v869
        %v879 = vmax.f32 %v871, 0.0
        %v880 = vmax.f32 %v872, 0.0
        %v881 = vmax.f32 %v873, 0.0
        %v882 = vmax.f32 %v874, 0.0
        %v883 = vmax.f32 %v875, 0.0
        %v884 = vmax.f32 %v876, 0.0
        %v885 = vmax.f32 %v877, 0.0
        %v886 = vmax.f32 %v878, 0.0
        %v887 = vpack.c.bf16 %v879, %v879
        %v888 = vpack.c.bf16 %v880, %v880
        %v889 = vpack.c.bf16 %v881, %v881
        %v890 = vpack.c.bf16 %v882, %v882
        %v891 = vpack.c.bf16 %v883, %v883
        %v892 = vpack.c.bf16 %v884, %v884
        %v893 = vpack.c.bf16 %v885, %v885
        %v894 = vpack.c.bf16 %v886, %v886
        %v903 = vunpack.c.l.b16 %v887
        %v904 = vunpack.c.l.b16 %v888
        %v905 = vunpack.c.l.b16 %v889
        %v906 = vunpack.c.l.b16 %v890
        %v907 = vunpack.c.l.b16 %v891
        %v908 = vunpack.c.l.b16 %v892
        %v909 = vunpack.c.l.b16 %v893
        %v910 = vunpack.c.l.b16 %v894
        %v911 = vpack.c.b16 %v903, %v903
        %v912 = vpack.c.b16 %v904, %v904
        %v913 = vpack.c.b16 %v905, %v905
        %v914 = vpack.c.b16 %v906, %v906
        %v915 = vpack.c.b16 %v907, %v907
        %v916 = vpack.c.b16 %v908, %v908
        %v917 = vpack.c.b16 %v909, %v909
        %v918 = vpack.c.b16 %v910, %v910
        %v920 = vshrl.u32 %v911, 16
        %v922 = vrot.slane %v920, 7
        %v923 = vshll.u32 %v911, 16
        %v925 = vor.u32 %v922, %v923
        %v926 = vrot.slane %v922, 4
        %v928 = vshrl.u32 %v912, 16
        %v930 = vrot.slane %v928, 7
        %v931 = vshll.u32 %v912, 16
        %v933 = vor.u32 %v930, %v931
        %v934 = vrot.slane %v930, 4
        %v936 = vshrl.u32 %v913, 16
        %v938 = vrot.slane %v936, 7
        %v939 = vshll.u32 %v913, 16
        %v941 = vor.u32 %v938, %v939
        %v942 = vrot.slane %v938, 4
        %v944 = vshrl.u32 %v914, 16
        %v946 = vrot.slane %v944, 7
        %v947 = vshll.u32 %v914, 16
        %v949 = vor.u32 %v946, %v947
        %v950 = vrot.slane %v946, 4
        %v952 = vshrl.u32 %v915, 16
        %v954 = vrot.slane %v952, 7
        %v955 = vshll.u32 %v915, 16
        %v957 = vor.u32 %v954, %v955
        %v958 = vrot.slane %v954, 4
        %v960 = vshrl.u32 %v916, 16
        %v962 = vrot.slane %v960, 7
        %v963 = vshll.u32 %v916, 16
        %v965 = vor.u32 %v962, %v963
        %v966 = vrot.slane %v962, 4
        %v968 = vshrl.u32 %v917, 16
        %v970 = vrot.slane %v968, 7
        %v971 = vshll.u32 %v917, 16
        %v973 = vor.u32 %v970, %v971
        %v974 = vrot.slane %v970, 4
        %v976 = vshrl.u32 %v918, 16
        %v978 = vrot.slane %v976, 7
        %v979 = vshll.u32 %v918, 16
        %v981 = vor.u32 %v978, %v979
        %v982 = vrot.slane %v978, 4
        %s999 = scalar_lea.vmem [#allocation2], 8
        %vm1000 = vcmask 60416
        %vm1001 = vsmask.f32 7938
        %vm1002 = vmand %vm1000, %vm1001
        %v1003 = vld [vmem:[%s999] sm:$0xf]
        %v1004 = vsel %vm1002, %v925, %v1003
        %1005 = vst [vmem:[%s999] sm:$0xf] %v1004
        %vm1006 = vcmask 57344
        %vm1007 = vsmask.f32 256
        %vm1008 = vmand %vm1006, %vm1007
        %v1009 = vld [vmem:[%s999 + $0x4] sm:$0x1]
        %v1010 = vsel %vm1008, %v926, %v1009
        %1011 = vst [vmem:[%s999 + $0x4] sm:$0x1] %v1010
        %v1012 = vld [vmem:[%s999 + $0x8] sm:$0xf]
        %v1013 = vsel %vm1002, %v933, %v1012
        %1014 = vst [vmem:[%s999 + $0x8] sm:$0xf] %v1013
        %v1015 = vld [vmem:[%s999 + $0xc] sm:$0x1]
        %v1016 = vsel %vm1008, %v934, %v1015
        %1017 = vst [vmem:[%s999 + $0xc] sm:$0x1] %v1016
        %v1018 = vld [vmem:[%s999 + $0x10] sm:$0xf]
        %v1019 = vsel %vm1002, %v941, %v1018
        %1020 = vst [vmem:[%s999 + $0x10] sm:$0xf] %v1019
        %v1021 = vld [vmem:[%s999 + $0x14] sm:$0x1]
        %v1022 = vsel %vm1008, %v942, %v1021
        %1023 = vst [vmem:[%s999 + $0x14] sm:$0x1] %v1022
        %v1024 = vld [vmem:[%s999 + $0x18] sm:$0xf]
        %v1025 = vsel %vm1002, %v949, %v1024
        %1026 = vst [vmem:[%s999 + $0x18] sm:$0xf] %v1025
        %v1027 = vld [vmem:[%s999 + $0x1c] sm:$0x1]
        %v1028 = vsel %vm1008, %v950, %v1027
        %1029 = vst [vmem:[%s999 + $0x1c] sm:$0x1] %v1028
        %v1030 = vld [vmem:[%s999 + $0x20] sm:$0xf]
        %v1031 = vsel %vm1002, %v957, %v1030
        %1032 = vst [vmem:[%s999 + $0x20] sm:$0xf] %v1031
        %v1033 = vld [vmem:[%s999 + $0x24] sm:$0x1]
        %v1034 = vsel %vm1008, %v958, %v1033
        %1035 = vst [vmem:[%s999 + $0x24] sm:$0x1] %v1034
        %v1036 = vld [vmem:[%s999 + $0x28] sm:$0xf]
        %v1037 = vsel %vm1002, %v965, %v1036
        %1038 = vst [vmem:[%s999 + $0x28] sm:$0xf] %v1037
        %v1039 = vld [vmem:[%s999 + $0x2c] sm:$0x1]
        %v1040 = vsel %vm1008, %v966, %v1039
        %1041 = vst [vmem:[%s999 + $0x2c] sm:$0x1] %v1040
        %v1042 = vld [vmem:[%s999 + $0x30] sm:$0xf]
        %v1043 = vsel %vm1002, %v973, %v1042
        %1044 = vst [vmem:[%s999 + $0x30] sm:$0xf] %v1043
        %v1045 = vld [vmem:[%s999 + $0x34] sm:$0x1]
        %v1046 = vsel %vm1008, %v974, %v1045
        %1047 = vst [vmem:[%s999 + $0x34] sm:$0x1] %v1046
        %v1048 = vld [vmem:[%s999 + $0x38] sm:$0xf]
        %v1049 = vsel %vm1002, %v981, %v1048
        %1050 = vst [vmem:[%s999 + $0x38] sm:$0xf] %v1049
        %v1051 = vld [vmem:[%s999 + $0x3c] sm:$0x1]
        %v1052 = vsel %vm1008, %v982, %v1051
        %1053 = vst [vmem:[%s999 + $0x3c] sm:$0x1] %v1052
        %vm1054 = vcmask 60416
        %1055 = vst.msk [vmem:[#allocation2] sm:$0xf] %vm1054, 0
        %vm1056 = vcmask 57344
        %1057 = vst.msk [vmem:[#allocation2 + $0x4] sm:$0x1] %vm1056, 0
        %s1058 = scalar_lea.vmem [#allocation2], 72
        %1059 = vst.msk [vmem:[%s1058] sm:$0xf] %vm1054, 0
        %1060 = vst.msk [vmem:[%s1058 + $0x4] sm:$0x1] %vm1056, 0
        %v1061 = vld [vmem:[#allocation2] sm:$0x1]
        %v1062 = vsel %vm1008, 0, %v1061
        %1063 = vst [vmem:[#allocation2] sm:$0x1] %v1062
        %v1064 = vld [vmem:[#allocation2 + $0x8] sm:$0x1]
        %v1065 = vsel %vm1008, 0, %v1064
        %1066 = vst [vmem:[#allocation2 + $0x8] sm:$0x1] %v1065
        %v1067 = vld [vmem:[#allocation2 + $0x10] sm:$0x1]
        %v1068 = vsel %vm1008, 0, %v1067
        %1069 = vst [vmem:[#allocation2 + $0x10] sm:$0x1] %v1068
        %v1070 = vld [vmem:[#allocation2 + $0x18] sm:$0x1]
        %v1071 = vsel %vm1008, 0, %v1070
        %1072 = vst [vmem:[#allocation2 + $0x18] sm:$0x1] %v1071
        %v1073 = vld [vmem:[#allocation2 + $0x20] sm:$0x1]
        %v1074 = vsel %vm1008, 0, %v1073
        %1075 = vst [vmem:[#allocation2 + $0x20] sm:$0x1] %v1074
        %v1076 = vld [vmem:[#allocation2 + $0x28] sm:$0x1]
        %v1077 = vsel %vm1008, 0, %v1076
        %1078 = vst [vmem:[#allocation2 + $0x28] sm:$0x1] %v1077
        %v1079 = vld [vmem:[#allocation2 + $0x30] sm:$0x1]
        %v1080 = vsel %vm1008, 0, %v1079
        %1081 = vst [vmem:[#allocation2 + $0x30] sm:$0x1] %v1080
        %v1082 = vld [vmem:[#allocation2 + $0x38] sm:$0x1]
        %v1083 = vsel %vm1008, 0, %v1082
        %1084 = vst [vmem:[#allocation2 + $0x38] sm:$0x1] %v1083
        %v1085 = vld [vmem:[#allocation2 + $0x40] sm:$0x1]
        %v1086 = vsel %vm1008, 0, %v1085
        %1087 = vst [vmem:[#allocation2 + $0x40] sm:$0x1] %v1086
        %v1088 = vld [vmem:[#allocation2 + $0x48] sm:$0x1]
        %v1089 = vsel %vm1008, 0, %v1088
        %1090 = vst [vmem:[#allocation2 + $0x48] sm:$0x1] %v1089
        %vm1091 = vmand %vm1006, %vm1001
        %v1092 = vld [vmem:[#allocation2 + $0x4] sm:$0x1]
        %v1093 = vsel %vm1091, 0, %v1092
        %1094 = vst [vmem:[#allocation2 + $0x4] sm:$0x1] %v1093
        %v1095 = vld [vmem:[#allocation2 + $0xc] sm:$0x1]
        %v1096 = vsel %vm1091, 0, %v1095
        %1097 = vst [vmem:[#allocation2 + $0xc] sm:$0x1] %v1096
        %v1098 = vld [vmem:[#allocation2 + $0x14] sm:$0x1]
        %v1099 = vsel %vm1091, 0, %v1098
        %1100 = vst [vmem:[#allocation2 + $0x14] sm:$0x1] %v1099
        %v1101 = vld [vmem:[#allocation2 + $0x1c] sm:$0x1]
        %v1102 = vsel %vm1091, 0, %v1101
        %1103 = vst [vmem:[#allocation2 + $0x1c] sm:$0x1] %v1102
        %v1104 = vld [vmem:[#allocation2 + $0x24] sm:$0x1]
        %v1105 = vsel %vm1091, 0, %v1104
        %1106 = vst [vmem:[#allocation2 + $0x24] sm:$0x1] %v1105
        %v1107 = vld [vmem:[#allocation2 + $0x2c] sm:$0x1]
        %v1108 = vsel %vm1091, 0, %v1107
        %1109 = vst [vmem:[#allocation2 + $0x2c] sm:$0x1] %v1108
        %v1110 = vld [vmem:[#allocation2 + $0x34] sm:$0x1]
        %v1111 = vsel %vm1091, 0, %v1110
        %1112 = vst [vmem:[#allocation2 + $0x34] sm:$0x1] %v1111
        %v1113 = vld [vmem:[#allocation2 + $0x3c] sm:$0x1]
        %v1114 = vsel %vm1091, 0, %v1113
        %1115 = vst [vmem:[#allocation2 + $0x3c] sm:$0x1] %v1114
        %v1116 = vld [vmem:[#allocation2 + $0x44] sm:$0x1]
        %v1117 = vsel %vm1091, 0, %v1116
        %1118 = vst [vmem:[#allocation2 + $0x44] sm:$0x1] %v1117
        %v1119 = vld [vmem:[#allocation2 + $0x4c] sm:$0x1]
        %v1120 = vsel %vm1091, 0, %v1119
        %1121 = vst [vmem:[#allocation2 + $0x4c] sm:$0x1] %v1120
        %v1122 = vld [vmem:[%s4] sm:$0x1]
        %v1123 = vld [vmem:[#allocation2] sm:$0xf]
        %v1124 = vld [vmem:[#allocation2 + $0x8] sm:$0xf]
        %v1125 = vld [vmem:[#allocation2 + $0x10] sm:$0xf]
        %v1126 = vld [vmem:[#allocation2 + $0x18] sm:$0xf]
        %v1127 = vld [vmem:[#allocation2 + $0x20] sm:$0xf]
        %v1128 = vld [vmem:[#allocation2 + $0x28] sm:$0xf]
        %v1129 = vld [vmem:[#allocation2 + $0x30] sm:$0xf]
        %v1130 = vld [vmem:[#allocation2 + $0x38] sm:$0xf]
        %v1131 = vld [vmem:[%s3] sm:$0xf]
        %v1132 = vld [vmem:[#allocation2 + $0x4] sm:$0x1]
        %v1133 = vld [vmem:[#allocation2 + $0xc] sm:$0x1]
        %v1134 = vld [vmem:[#allocation2 + $0x14] sm:$0x1]
        %v1135 = vld [vmem:[#allocation2 + $0x1c] sm:$0x1]
        %v1136 = vld [vmem:[#allocation2 + $0x24] sm:$0x1]
        %v1137 = vld [vmem:[#allocation2 + $0x2c] sm:$0x1]
        %v1138 = vld [vmem:[#allocation2 + $0x34] sm:$0x1]
        %v1139 = vld [vmem:[#allocation2 + $0x3c] sm:$0x1]
        %v1141 = vshrl.u32 %v1123, 16
        %v1143 = vrot.slane %v1141, 4
        %v1144 = vshll.u32 %v1123, 16
        %v1146 = vrot.slane %v1144, 5
        %v1147 = vor.u32 %v1143, %v1146
        %v1148 = vrot.slane %v1147, 4
        %v1150 = vshll.u32 %v1132, 16
        %v1152 = vrot.slane %v1150, 5
        %v1153 = vsel %vm349, %v1148, %v1152
        %v1155 = vshrl.u32 %v1124, 16
        %v1157 = vrot.slane %v1155, 4
        %v1158 = vshll.u32 %v1124, 16
        %v1160 = vrot.slane %v1158, 5
        %v1161 = vor.u32 %v1157, %v1160
        %v1162 = vrot.slane %v1161, 4
        %v1164 = vshll.u32 %v1133, 16
        %v1166 = vrot.slane %v1164, 5
        %v1167 = vsel %vm349, %v1162, %v1166
        %v1169 = vshrl.u32 %v1125, 16
        %v1171 = vrot.slane %v1169, 4
        %v1172 = vshll.u32 %v1125, 16
        %v1174 = vrot.slane %v1172, 5
        %v1175 = vor.u32 %v1171, %v1174
        %v1176 = vrot.slane %v1175, 4
        %v1178 = vshll.u32 %v1134, 16
        %v1180 = vrot.slane %v1178, 5
        %v1181 = vsel %vm349, %v1176, %v1180
        %v1183 = vshrl.u32 %v1126, 16
        %v1185 = vrot.slane %v1183, 4
        %v1186 = vshll.u32 %v1126, 16
        %v1188 = vrot.slane %v1186, 5
        %v1189 = vor.u32 %v1185, %v1188
        %v1190 = vrot.slane %v1189, 4
        %v1192 = vshll.u32 %v1135, 16
        %v1194 = vrot.slane %v1192, 5
        %v1195 = vsel %vm349, %v1190, %v1194
        %v1197 = vshrl.u32 %v1127, 16
        %v1199 = vrot.slane %v1197, 4
        %v1200 = vshll.u32 %v1127, 16
        %v1202 = vrot.slane %v1200, 5
        %v1203 = vor.u32 %v1199, %v1202
        %v1204 = vrot.slane %v1203, 4
        %v1206 = vshll.u32 %v1136, 16
        %v1208 = vrot.slane %v1206, 5
        %v1209 = vsel %vm349, %v1204, %v1208
        %v1211 = vshrl.u32 %v1128, 16
        %v1213 = vrot.slane %v1211, 4
        %v1214 = vshll.u32 %v1128, 16
        %v1216 = vrot.slane %v1214, 5
        %v1217 = vor.u32 %v1213, %v1216
        %v1218 = vrot.slane %v1217, 4
        %v1220 = vshll.u32 %v1137, 16
        %v1222 = vrot.slane %v1220, 5
        %v1223 = vsel %vm349, %v1218, %v1222
        %v1225 = vshrl.u32 %v1129, 16
        %v1227 = vrot.slane %v1225, 4
        %v1228 = vshll.u32 %v1129, 16
        %v1230 = vrot.slane %v1228, 5
        %v1231 = vor.u32 %v1227, %v1230
        %v1232 = vrot.slane %v1231, 4
        %v1234 = vshll.u32 %v1138, 16
        %v1236 = vrot.slane %v1234, 5
        %v1237 = vsel %vm349, %v1232, %v1236
        %v1239 = vshrl.u32 %v1130, 16
        %v1241 = vrot.slane %v1239, 4
        %v1242 = vshll.u32 %v1130, 16
        %v1244 = vrot.slane %v1242, 5
        %v1245 = vor.u32 %v1241, %v1244
        %v1246 = vrot.slane %v1245, 4
        %v1248 = vshll.u32 %v1139, 16
        %v1250 = vrot.slane %v1248, 5
        %v1251 = vsel %vm349, %v1246, %v1250
        %s1252 = scalar_lea.vmem %s3, 4
        %v1253 = vld [vmem:[%s1252] sm:$0xf]
        %v1254 = vunpack.c.l.b16 %v1153
        %v1255 = vunpack.c.l.b16 %v1167
        %v1256 = vunpack.c.l.b16 %v1181
        %v1257 = vunpack.c.l.b16 %v1195
        %v1258 = vunpack.c.l.b16 %v1209
        %v1259 = vunpack.c.l.b16 %v1223
        %v1260 = vunpack.c.l.b16 %v1237
        %v1261 = vunpack.c.l.b16 %v1251
        %v1262 = vpack.c.b16 %v1255, %v1254
        %v1263 = vpack.c.b16 %v1257, %v1256
        %v1264 = vpack.c.b16 %v1259, %v1258
        %v1265 = vpack.c.b16 %v1261, %v1260
        %vm1266 = vcmask 64512
        %v1268 = vsel %vm1266, %v1262, 0
        %v1271 = vsel %vm1266, %v1263, 0
        %v1274 = vsel %vm1266, %v1264, 0
        %v1277 = vsel %vm1266, %v1265, 0
        %vm1279 = vcmask 1043456
        %v1281 = vsel %vm1279, %v1253, 0
        %1283 = vmatprep.subr.bf16.mxu0 0
        %1284 = vmatpush1.bf16.msra.mxu0 %v1281
        %1285 = vmatprep.subr.bf16.mxu0 0
        %1286 = vmatpush1.bf16.msra.mxu0 0
        %1287 = vmatprep.subr.bf16.mxu0 0
        %1288 = vmatpush1.bf16.msra.mxu0 0
        %1289 = vmatprep.subr.bf16.mxu0 0
        %1290 = vmatpush1.bf16.msra.mxu0 0
        %1291 = vmatprep.subr.bf16.mxu0 0
        %1292 = vmatpush1.bf16.msra.mxu0 0
        %1293 = vmatprep.subr.bf16.mxu0 0
        %1294 = vmatpush1.bf16.msra.mxu0 0
        %1295 = vmatprep.subr.bf16.mxu0 0
        %1296 = vmatpush1.bf16.msra.mxu0 0
        %1297 = vmatprep.subr.bf16.mxu0 0
        %1298 = vmatpush1.bf16.msra.mxu0 0
        %1299 = vmatprep.subr.bf16.mxu0 0
        %1300 = vmatpush1.bf16.msra.mxu0 0
        %1301 = vmatprep.subr.bf16.mxu0 0
        %1302 = vmatpush1.bf16.msra.mxu0 0
        %1303 = vmatprep.subr.bf16.mxu0 0
        %1304 = vmatpush1.bf16.msra.mxu0 0
        %1305 = vmatprep.subr.bf16.mxu0 0
        %1306 = vmatpush1.bf16.msra.mxu0 0
        %1307 = vmatprep.subr.bf16.mxu0 0
        %1308 = vmatpush1.bf16.msra.mxu0 0
        %1309 = vmatprep.subr.bf16.mxu0 0
        %1310 = vmatpush1.bf16.msra.mxu0 0
        %1311 = vmatprep.subr.bf16.mxu0 0
        %1312 = vmatpush1.bf16.msra.mxu0 0
        %1313 = vmatprep.subr.bf16.mxu0 0
        %1314 = vmatpush1.bf16.msra.mxu0 0
        %1315 = vmatprep.mubr.bf16.mxu0 0
        %1316 = vmatmul.mubr.bf16.gmra.mrb[0].mxu0 %v1268
        %v1317 = vpop.f32.mrb[0].mxu0
        %v1318 = vadd.f32 0.0, %v1317
        %v1319 = vpop.f32.mrb[0].mxu0
        %v1320 = vpop.f32.mrb[0].mxu0
        %v1321 = vadd.f32 0.0, %v1320
        %v1322 = vpop.f32.mrb[0].mxu0
        %1323 = vmatprep.mubr.bf16.mxu0 0
        %1324 = vmatmul.mubr.bf16.gmra.mrb[0].mxu0 %v1271
        %v1325 = vpop.f32.mrb[0].mxu0
        %v1326 = vadd.f32 0.0, %v1325
        %v1327 = vpop.f32.mrb[0].mxu0
        %v1328 = vpop.f32.mrb[0].mxu0
        %v1329 = vadd.f32 0.0, %v1328
        %v1330 = vpop.f32.mrb[0].mxu0
        %1331 = vmatprep.mubr.bf16.mxu0 0
        %1332 = vmatmul.mubr.bf16.gmra.mrb[0].mxu0 %v1274
        %v1333 = vpop.f32.mrb[0].mxu0
        %v1334 = vadd.f32 0.0, %v1333
        %v1335 = vpop.f32.mrb[0].mxu0
        %v1336 = vpop.f32.mrb[0].mxu0
        %v1337 = vadd.f32 0.0, %v1336
        %v1338 = vpop.f32.mrb[0].mxu0
        %1339 = vmatprep.mubr.bf16.mxu0 0
        %1340 = vmatmul.mubr.bf16.gmra.mrb[0].mxu0 %v1277
        %v1341 = vpop.f32.mrb[0].mxu0
        %v1342 = vadd.f32 0.0, %v1341
        %v1343 = vpop.f32.mrb[0].mxu0
        %v1344 = vpop.f32.mrb[0].mxu0
        %v1345 = vadd.f32 0.0, %v1344
        %v1346 = vpop.f32.mrb[0].mxu0
        %1347 = vdwg.mxu0
        %v1356 = vunpack.c.l.b16 %v1123
        %v1357 = vunpack.c.l.b16 %v1124
        %v1358 = vunpack.c.l.b16 %v1125
        %v1359 = vunpack.c.l.b16 %v1126
        %v1360 = vunpack.c.l.b16 %v1127
        %v1361 = vunpack.c.l.b16 %v1128
        %v1362 = vunpack.c.l.b16 %v1129
        %v1363 = vunpack.c.l.b16 %v1130
        %v1364 = vpack.c.b16 %v1357, %v1356
        %v1365 = vpack.c.b16 %v1359, %v1358
        %v1366 = vpack.c.b16 %v1361, %v1360
        %v1367 = vpack.c.b16 %v1363, %v1362
        %v1369 = vsel %vm1266, %v1364, 0
        %v1372 = vsel %vm1266, %v1365, 0
        %v1375 = vsel %vm1266, %v1366, 0
        %v1378 = vsel %vm1266, %v1367, 0
        %v1381 = vsel %vm1279, %v1131, 0
        %1383 = vmatprep.subr.bf16.mxu0 0
        %1384 = vmatpush1.bf16.msra.mxu0 %v1381
        %1385 = vmatprep.subr.bf16.mxu0 0
        %1386 = vmatpush1.bf16.msra.mxu0 0
        %1387 = vmatprep.subr.bf16.mxu0 0
        %1388 = vmatpush1.bf16.msra.mxu0 0
        %1389 = vmatprep.subr.bf16.mxu0 0
        %1390 = vmatpush1.bf16.msra.mxu0 0
        %1391 = vmatprep.subr.bf16.mxu0 0
        %1392 = vmatpush1.bf16.msra.mxu0 0
        %1393 = vmatprep.subr.bf16.mxu0 0
        %1394 = vmatpush1.bf16.msra.mxu0 0
        %1395 = vmatprep.subr.bf16.mxu0 0
        %1396 = vmatpush1.bf16.msra.mxu0 0
        %1397 = vmatprep.subr.bf16.mxu0 0
        %1398 = vmatpush1.bf16.msra.mxu0 0
        %1399 = vmatprep.subr.bf16.mxu0 0
        %1400 = vmatpush1.bf16.msra.mxu0 0
        %1401 = vmatprep.subr.bf16.mxu0 0
        %1402 = vmatpush1.bf16.msra.mxu0 0
        %1403 = vmatprep.subr.bf16.mxu0 0
        %1404 = vmatpush1.bf16.msra.mxu0 0
        %1405 = vmatprep.subr.bf16.mxu0 0
        %1406 = vmatpush1.bf16.msra.mxu0 0
        %1407 = vmatprep.subr.bf16.mxu0 0
        %1408 = vmatpush1.bf16.msra.mxu0 0
        %1409 = vmatprep.subr.bf16.mxu0 0
        %1410 = vmatpush1.bf16.msra.mxu0 0
        %1411 = vmatprep.subr.bf16.mxu0 0
        %1412 = vmatpush1.bf16.msra.mxu0 0
        %1413 = vmatprep.subr.bf16.mxu0 0
        %1414 = vmatpush1.bf16.msra.mxu0 0
        %1415 = vmatprep.mubr.bf16.mxu0 0
        %1416 = vmatmul.mubr.bf16.gmra.mrb[0].mxu0 %v1369
        %v1417 = vpop.f32.mrb[0].mxu0
        %v1418 = vadd.f32 %v1318, %v1417
        %v1419 = vpop.f32.mrb[0].mxu0
        %v1420 = vpop.f32.mrb[0].mxu0
        %v1421 = vadd.f32 %v1321, %v1420
        %v1422 = vpop.f32.mrb[0].mxu0
        %1423 = vmatprep.mubr.bf16.mxu0 0
        %1424 = vmatmul.mubr.bf16.gmra.mrb[0].mxu0 %v1372
        %v1425 = vpop.f32.mrb[0].mxu0
        %v1426 = vadd.f32 %v1326, %v1425
        %v1427 = vpop.f32.mrb[0].mxu0
        %v1428 = vpop.f32.mrb[0].mxu0
        %v1429 = vadd.f32 %v1329, %v1428
        %v1430 = vpop.f32.mrb[0].mxu0
        %1431 = vmatprep.mubr.bf16.mxu0 0
        %1432 = vmatmul.mubr.bf16.gmra.mrb[0].mxu0 %v1375
        %v1433 = vpop.f32.mrb[0].mxu0
        %v1434 = vadd.f32 %v1334, %v1433
        %v1435 = vpop.f32.mrb[0].mxu0
        %v1436 = vpop.f32.mrb[0].mxu0
        %v1437 = vadd.f32 %v1337, %v1436
        %v1438 = vpop.f32.mrb[0].mxu0
        %1439 = vmatprep.mubr.bf16.mxu0 0
        %1440 = vmatmul.mubr.bf16.gmra.mrb[0].mxu0 %v1378
        %v1441 = vpop.f32.mrb[0].mxu0
        %v1442 = vadd.f32 %v1342, %v1441
        %v1443 = vpop.f32.mrb[0].mxu0
        %v1444 = vpop.f32.mrb[0].mxu0
        %v1445 = vadd.f32 %v1345, %v1444
        %v1446 = vpop.f32.mrb[0].mxu0
        %1447 = vdwg.mxu0
        %v1448 = vld [vmem:[%s999] sm:$0xf]
        %v1449 = vld [vmem:[%s999 + $0x8] sm:$0xf]
        %v1450 = vld [vmem:[%s999 + $0x10] sm:$0xf]
        %v1451 = vld [vmem:[%s999 + $0x18] sm:$0xf]
        %v1452 = vld [vmem:[%s999 + $0x20] sm:$0xf]
        %v1453 = vld [vmem:[%s999 + $0x28] sm:$0xf]
        %v1454 = vld [vmem:[%s999 + $0x30] sm:$0xf]
        %v1455 = vld [vmem:[%s999 + $0x38] sm:$0xf]
        %s1456 = scalar_lea.vmem %s3, 8
        %v1457 = vld [vmem:[%s1456] sm:$0xf]
        %v1466 = vunpack.c.l.b16 %v1448
        %v1467 = vunpack.c.l.b16 %v1449
        %v1468 = vunpack.c.l.b16 %v1450
        %v1469 = vunpack.c.l.b16 %v1451
        %v1470 = vunpack.c.l.b16 %v1452
        %v1471 = vunpack.c.l.b16 %v1453
        %v1472 = vunpack.c.l.b16 %v1454
        %v1473 = vunpack.c.l.b16 %v1455
        %v1474 = vpack.c.b16 %v1467, %v1466
        %v1475 = vpack.c.b16 %v1469, %v1468
        %v1476 = vpack.c.b16 %v1471, %v1470
        %v1477 = vpack.c.b16 %v1473, %v1472
        %v1479 = vsel %vm1266, %v1474, 0
        %v1482 = vsel %vm1266, %v1475, 0
        %v1485 = vsel %vm1266, %v1476, 0
        %v1488 = vsel %vm1266, %v1477, 0
        %v1491 = vsel %vm1279, %v1457, 0
        %1493 = vmatprep.subr.bf16.mxu0 0
        %1494 = vmatpush1.bf16.msra.mxu0 %v1491
        %1495 = vmatprep.subr.bf16.mxu0 0
        %1496 = vmatpush1.bf16.msra.mxu0 0
        %1497 = vmatprep.subr.bf16.mxu0 0
        %1498 = vmatpush1.bf16.msra.mxu0 0
        %1499 = vmatprep.subr.bf16.mxu0 0
        %1500 = vmatpush1.bf16.msra.mxu0 0
        %1501 = vmatprep.subr.bf16.mxu0 0
        %1502 = vmatpush1.bf16.msra.mxu0 0
        %1503 = vmatprep.subr.bf16.mxu0 0
        %1504 = vmatpush1.bf16.msra.mxu0 0
        %1505 = vmatprep.subr.bf16.mxu0 0
        %1506 = vmatpush1.bf16.msra.mxu0 0
        %1507 = vmatprep.subr.bf16.mxu0 0
        %1508 = vmatpush1.bf16.msra.mxu0 0
        %1509 = vmatprep.subr.bf16.mxu0 0
        %1510 = vmatpush1.bf16.msra.mxu0 0
        %1511 = vmatprep.subr.bf16.mxu0 0
        %1512 = vmatpush1.bf16.msra.mxu0 0
        %1513 = vmatprep.subr.bf16.mxu0 0
        %1514 = vmatpush1.bf16.msra.mxu0 0
        %1515 = vmatprep.subr.bf16.mxu0 0
        %1516 = vmatpush1.bf16.msra.mxu0 0
        %1517 = vmatprep.subr.bf16.mxu0 0
        %1518 = vmatpush1.bf16.msra.mxu0 0
        %1519 = vmatprep.subr.bf16.mxu0 0
        %1520 = vmatpush1.bf16.msra.mxu0 0
        %1521 = vmatprep.subr.bf16.mxu0 0
        %1522 = vmatpush1.bf16.msra.mxu0 0
        %1523 = vmatprep.subr.bf16.mxu0 0
        %1524 = vmatpush1.bf16.msra.mxu0 0
        %1525 = vmatprep.mubr.bf16.mxu0 0
        %1526 = vmatmul.mubr.bf16.gmra.mrb[0].mxu0 %v1479
        %v1527 = vpop.f32.mrb[0].mxu0
        %v1528 = vadd.f32 0.0, %v1527
        %v1529 = vpop.f32.mrb[0].mxu0
        %v1530 = vpop.f32.mrb[0].mxu0
        %v1531 = vadd.f32 0.0, %v1530
        %v1532 = vpop.f32.mrb[0].mxu0
        %1533 = vmatprep.mubr.bf16.mxu0 0
        %1534 = vmatmul.mubr.bf16.gmra.mrb[0].mxu0 %v1482
        %v1535 = vpop.f32.mrb[0].mxu0
        %v1536 = vadd.f32 0.0, %v1535
        %v1537 = vpop.f32.mrb[0].mxu0
        %v1538 = vpop.f32.mrb[0].mxu0
        %v1539 = vadd.f32 0.0, %v1538
        %v1540 = vpop.f32.mrb[0].mxu0
        %1541 = vmatprep.mubr.bf16.mxu0 0
        %1542 = vmatmul.mubr.bf16.gmra.mrb[0].mxu0 %v1485
        %v1543 = vpop.f32.mrb[0].mxu0
        %v1544 = vadd.f32 0.0, %v1543
        %v1545 = vpop.f32.mrb[0].mxu0
        %v1546 = vpop.f32.mrb[0].mxu0
        %v1547 = vadd.f32 0.0, %v1546
        %v1548 = vpop.f32.mrb[0].mxu0
        %1549 = vmatprep.mubr.bf16.mxu0 0
        %1550 = vmatmul.mubr.bf16.gmra.mrb[0].mxu0 %v1488
        %v1551 = vpop.f32.mrb[0].mxu0
        %v1552 = vadd.f32 0.0, %v1551
        %v1553 = vpop.f32.mrb[0].mxu0
        %v1554 = vpop.f32.mrb[0].mxu0
        %v1555 = vadd.f32 0.0, %v1554
        %v1556 = vpop.f32.mrb[0].mxu0
        %1557 = vdwg.mxu0
        %v1558 = vadd.f32 %v1418, %v1528
        %v1559 = vadd.f32 %v1421, %v1531
        %v1560 = vadd.f32 %v1426, %v1536
        %v1561 = vadd.f32 %v1429, %v1539
        %v1562 = vadd.f32 %v1434, %v1544
        %v1563 = vadd.f32 %v1437, %v1547
        %v1564 = vadd.f32 %v1442, %v1552
        %v1565 = vadd.f32 %v1445, %v1555
        %v1566 = vld [vmem:[%s999] sm:$0xf]
        %v1567 = vld [vmem:[%s999 + $0x4] sm:$0x1]
        %v1568 = vld [vmem:[%s999 + $0x8] sm:$0xf]
        %v1569 = vld [vmem:[%s999 + $0xc] sm:$0x1]
        %v1570 = vld [vmem:[%s999 + $0x10] sm:$0xf]
        %v1571 = vld [vmem:[%s999 + $0x14] sm:$0x1]
        %v1572 = vld [vmem:[%s999 + $0x18] sm:$0xf]
        %v1573 = vld [vmem:[%s999 + $0x1c] sm:$0x1]
        %v1574 = vld [vmem:[%s999 + $0x20] sm:$0xf]
        %v1575 = vld [vmem:[%s999 + $0x24] sm:$0x1]
        %v1576 = vld [vmem:[%s999 + $0x28] sm:$0xf]
        %v1577 = vld [vmem:[%s999 + $0x2c] sm:$0x1]
        %v1578 = vld [vmem:[%s999 + $0x30] sm:$0xf]
        %v1579 = vld [vmem:[%s999 + $0x34] sm:$0x1]
        %v1580 = vld [vmem:[%s999 + $0x38] sm:$0xf]
        %v1581 = vld [vmem:[%s999 + $0x3c] sm:$0x1]
        %v1583 = vshrl.u32 %v1566, 16
        %v1585 = vrot.slane %v1583, 4
        %v1586 = vshll.u32 %v1566, 16
        %v1588 = vrot.slane %v1586, 5
        %v1589 = vor.u32 %v1585, %v1588
        %v1590 = vrot.slane %v1589, 4
        %v1592 = vshll.u32 %v1567, 16
        %v1594 = vrot.slane %v1592, 5
        %v1595 = vsel %vm349, %v1590, %v1594
        %v1597 = vshrl.u32 %v1568, 16
        %v1599 = vrot.slane %v1597, 4
        %v1600 = vshll.u32 %v1568, 16
        %v1602 = vrot.slane %v1600, 5
        %v1603 = vor.u32 %v1599, %v1602
        %v1604 = vrot.slane %v1603, 4
        %v1606 = vshll.u32 %v1569, 16
        %v1608 = vrot.slane %v1606, 5
        %v1609 = vsel %vm349, %v1604, %v1608
        %v1611 = vshrl.u32 %v1570, 16
        %v1613 = vrot.slane %v1611, 4
        %v1614 = vshll.u32 %v1570, 16
        %v1616 = vrot.slane %v1614, 5
        %v1617 = vor.u32 %v1613, %v1616
        %v1618 = vrot.slane %v1617, 4
        %v1620 = vshll.u32 %v1571, 16
        %v1622 = vrot.slane %v1620, 5
        %v1623 = vsel %vm349, %v1618, %v1622
        %v1625 = vshrl.u32 %v1572, 16
        %v1627 = vrot.slane %v1625, 4
        %v1628 = vshll.u32 %v1572, 16
        %v1630 = vrot.slane %v1628, 5
        %v1631 = vor.u32 %v1627, %v1630
        %v1632 = vrot.slane %v1631, 4
        %v1634 = vshll.u32 %v1573, 16
        %v1636 = vrot.slane %v1634, 5
        %v1637 = vsel %vm349, %v1632, %v1636
        %v1639 = vshrl.u32 %v1574, 16
        %v1641 = vrot.slane %v1639, 4
        %v1642 = vshll.u32 %v1574, 16
        %v1644 = vrot.slane %v1642, 5
        %v1645 = vor.u32 %v1641, %v1644
        %v1646 = vrot.slane %v1645, 4
        %v1648 = vshll.u32 %v1575, 16
        %v1650 = vrot.slane %v1648, 5
        %v1651 = vsel %vm349, %v1646, %v1650
        %v1653 = vshrl.u32 %v1576, 16
        %v1655 = vrot.slane %v1653, 4
        %v1656 = vshll.u32 %v1576, 16
        %v1658 = vrot.slane %v1656, 5
        %v1659 = vor.u32 %v1655, %v1658
        %v1660 = vrot.slane %v1659, 4
        %v1662 = vshll.u32 %v1577, 16
        %v1664 = vrot.slane %v1662, 5
        %v1665 = vsel %vm349, %v1660, %v1664
        %v1667 = vshrl.u32 %v1578, 16
        %v1669 = vrot.slane %v1667, 4
        %v1670 = vshll.u32 %v1578, 16
        %v1672 = vrot.slane %v1670, 5
        %v1673 = vor.u32 %v1669, %v1672
        %v1674 = vrot.slane %v1673, 4
        %v1676 = vshll.u32 %v1579, 16
        %v1678 = vrot.slane %v1676, 5
        %v1679 = vsel %vm349, %v1674, %v1678
        %v1681 = vshrl.u32 %v1580, 16
        %v1683 = vrot.slane %v1681, 4
        %v1684 = vshll.u32 %v1580, 16
        %v1686 = vrot.slane %v1684, 5
        %v1687 = vor.u32 %v1683, %v1686
        %v1688 = vrot.slane %v1687, 4
        %v1690 = vshll.u32 %v1581, 16
        %v1692 = vrot.slane %v1690, 5
        %v1693 = vsel %vm349, %v1688, %v1692
        %s1694 = scalar_lea.vmem %s3, 12
        %v1695 = vld [vmem:[%s1694] sm:$0xf]
        %v1696 = vunpack.c.l.b16 %v1595
        %v1697 = vunpack.c.l.b16 %v1609
        %v1698 = vunpack.c.l.b16 %v1623
        %v1699 = vunpack.c.l.b16 %v1637
        %v1700 = vunpack.c.l.b16 %v1651
        %v1701 = vunpack.c.l.b16 %v1665
        %v1702 = vunpack.c.l.b16 %v1679
        %v1703 = vunpack.c.l.b16 %v1693
        %v1704 = vpack.c.b16 %v1697, %v1696
        %v1705 = vpack.c.b16 %v1699, %v1698
        %v1706 = vpack.c.b16 %v1701, %v1700
        %v1707 = vpack.c.b16 %v1703, %v1702
        %v1709 = vsel %vm1266, %v1704, 0
        %v1712 = vsel %vm1266, %v1705, 0
        %v1715 = vsel %vm1266, %v1706, 0
        %v1718 = vsel %vm1266, %v1707, 0
        %v1721 = vsel %vm1279, %v1695, 0
        %1723 = vmatprep.subr.bf16.mxu0 0
        %1724 = vmatpush1.bf16.msra.mxu0 %v1721
        %1725 = vmatprep.subr.bf16.mxu0 0
        %1726 = vmatpush1.bf16.msra.mxu0 0
        %1727 = vmatprep.subr.bf16.mxu0 0
        %1728 = vmatpush1.bf16.msra.mxu0 0
        %1729 = vmatprep.subr.bf16.mxu0 0
        %1730 = vmatpush1.bf16.msra.mxu0 0
        %1731 = vmatprep.subr.bf16.mxu0 0
        %1732 = vmatpush1.bf16.msra.mxu0 0
        %1733 = vmatprep.subr.bf16.mxu0 0
        %1734 = vmatpush1.bf16.msra.mxu0 0
        %1735 = vmatprep.subr.bf16.mxu0 0
        %1736 = vmatpush1.bf16.msra.mxu0 0
        %1737 = vmatprep.subr.bf16.mxu0 0
        %1738 = vmatpush1.bf16.msra.mxu0 0
        %1739 = vmatprep.subr.bf16.mxu0 0
        %1740 = vmatpush1.bf16.msra.mxu0 0
        %1741 = vmatprep.subr.bf16.mxu0 0
        %1742 = vmatpush1.bf16.msra.mxu0 0
        %1743 = vmatprep.subr.bf16.mxu0 0
        %1744 = vmatpush1.bf16.msra.mxu0 0
        %1745 = vmatprep.subr.bf16.mxu0 0
        %1746 = vmatpush1.bf16.msra.mxu0 0
        %1747 = vmatprep.subr.bf16.mxu0 0
        %1748 = vmatpush1.bf16.msra.mxu0 0
        %1749 = vmatprep.subr.bf16.mxu0 0
        %1750 = vmatpush1.bf16.msra.mxu0 0
        %1751 = vmatprep.subr.bf16.mxu0 0
        %1752 = vmatpush1.bf16.msra.mxu0 0
        %1753 = vmatprep.subr.bf16.mxu0 0
        %1754 = vmatpush1.bf16.msra.mxu0 0
        %1755 = vmatprep.mubr.bf16.mxu0 0
        %1756 = vmatmul.mubr.bf16.gmra.mrb[0].mxu0 %v1709
        %v1757 = vpop.f32.mrb[0].mxu0
        %v1758 = vadd.f32 0.0, %v1757
        %v1759 = vpop.f32.mrb[0].mxu0
        %v1760 = vpop.f32.mrb[0].mxu0
        %v1761 = vadd.f32 0.0, %v1760
        %v1762 = vpop.f32.mrb[0].mxu0
        %1763 = vmatprep.mubr.bf16.mxu0 0
        %1764 = vmatmul.mubr.bf16.gmra.mrb[0].mxu0 %v1712
        %v1765 = vpop.f32.mrb[0].mxu0
        %v1766 = vadd.f32 0.0, %v1765
        %v1767 = vpop.f32.mrb[0].mxu0
        %v1768 = vpop.f32.mrb[0].mxu0
        %v1769 = vadd.f32 0.0, %v1768
        %v1770 = vpop.f32.mrb[0].mxu0
        %1771 = vmatprep.mubr.bf16.mxu0 0
        %1772 = vmatmul.mubr.bf16.gmra.mrb[0].mxu0 %v1715
        %v1773 = vpop.f32.mrb[0].mxu0
        %v1774 = vadd.f32 0.0, %v1773
        %v1775 = vpop.f32.mrb[0].mxu0
        %v1776 = vpop.f32.mrb[0].mxu0
        %v1777 = vadd.f32 0.0, %v1776
        %v1778 = vpop.f32.mrb[0].mxu0
        %1779 = vmatprep.mubr.bf16.mxu0 0
        %1780 = vmatmul.mubr.bf16.gmra.mrb[0].mxu0 %v1718
        %v1781 = vpop.f32.mrb[0].mxu0
        %v1782 = vadd.f32 0.0, %v1781
        %v1783 = vpop.f32.mrb[0].mxu0
        %v1784 = vpop.f32.mrb[0].mxu0
        %v1785 = vadd.f32 0.0, %v1784
        %v1786 = vpop.f32.mrb[0].mxu0
        %1787 = vdwg.mxu0
        %v1788 = vadd.f32 %v1558, %v1758
        %v1789 = vadd.f32 %v1559, %v1761
        %v1790 = vadd.f32 %v1560, %v1766
        %v1791 = vadd.f32 %v1561, %v1769
        %v1792 = vadd.f32 %v1562, %v1774
        %v1793 = vadd.f32 %v1563, %v1777
        %v1794 = vadd.f32 %v1564, %v1782
        %v1795 = vadd.f32 %v1565, %v1785
        %v1797 = vlaneseq
        %v1798 = vshrl.u32 %v1797, 7
        %v1799 = vsub.s32 0, %v1798
        %v1800 = vrot.slane %v1122, %v1799
        %v1802 = vadd.f32 %v1788, %v1800
        %v1803 = vadd.f32 %v1789, %v1800
        %v1804 = vadd.f32 %v1790, %v1800
        %v1805 = vadd.f32 %v1791, %v1800
        %v1806 = vadd.f32 %v1792, %v1800
        %v1807 = vadd.f32 %v1793, %v1800
        %v1808 = vadd.f32 %v1794, %v1800
        %v1809 = vadd.f32 %v1795, %v1800
        %vm1810 = vcmask 31744
        %v1811 = vsel %vm1810, %v1802, 0.0
        %v1812 = vsel %vm1810, %v1803, 0.0
        %v1813 = vadd.f32 %v1811, %v1812
        %v1814 = vsel %vm1810, %v1804, 0.0
        %v1815 = vadd.f32 %v1813, %v1814
        %v1816 = vsel %vm1810, %v1805, 0.0
        %v1817 = vadd.f32 %v1815, %v1816
        %v1818 = vsel %vm1810, %v1806, 0.0
        %v1819 = vadd.f32 %v1817, %v1818
        %v1820 = vsel %vm1810, %v1807, 0.0
        %v1821 = vadd.f32 %v1819, %v1820
        %v1822 = vsel %vm1810, %v1808, 0.0
        %v1823 = vadd.f32 %v1821, %v1822
        %v1824 = vsel %vm1810, %v1809, 0.0
        %v1825 = vadd.f32 %v1823, %v1824
        %v1826 = vrot.slane %v1825, 4
        %v1827 = vadd.f32 %v1825, %v1826
        %v1828 = vrot.slane %v1827, 2
        %v1829 = vadd.f32 %v1827, %v1828
        %v1830 = vrot.slane %v1829, 1
        %v1831 = vadd.f32 %v1829, %v1830
        %v1832 = vadd.f32 %v1831, 0.0
        %v1833 = vmul.f32 %v1802, %v1802
        %v1834 = vmul.f32 %v1803, %v1803
        %v1835 = vmul.f32 %v1804, %v1804
        %v1836 = vmul.f32 %v1805, %v1805
        %v1837 = vmul.f32 %v1806, %v1806
        %v1838 = vmul.f32 %v1807, %v1807
        %v1839 = vmul.f32 %v1808, %v1808
        %v1840 = vmul.f32 %v1809, %v1809
        %v1841 = vsel %vm1810, %v1833, 0.0
        %v1842 = vsel %vm1810, %v1834, 0.0
        %v1843 = vadd.f32 %v1841, %v1842
        %v1844 = vsel %vm1810, %v1835, 0.0
        %v1845 = vadd.f32 %v1843, %v1844
        %v1846 = vsel %vm1810, %v1836, 0.0
        %v1847 = vadd.f32 %v1845, %v1846
        %v1848 = vsel %vm1810, %v1837, 0.0
        %v1849 = vadd.f32 %v1847, %v1848
        %v1850 = vsel %vm1810, %v1838, 0.0
        %v1851 = vadd.f32 %v1849, %v1850
        %v1852 = vsel %vm1810, %v1839, 0.0
        %v1853 = vadd.f32 %v1851, %v1852
        %v1854 = vsel %vm1810, %v1840, 0.0
        %v1855 = vadd.f32 %v1853, %v1854
        %v1856 = vrot.slane %v1855, 4
        %v1857 = vadd.f32 %v1855, %v1856
        %v1858 = vrot.slane %v1857, 2
        %v1859 = vadd.f32 %v1857, %v1858
        %v1860 = vrot.slane %v1859, 1
        %v1861 = vadd.f32 %v1859, %v1860
        %v1862 = vadd.f32 %v1861, 0.0
        %s1863 = scalar_lea.vmem %s3, 16
        %v1864 = vld [vmem:[%s1863] sm:$0xf]
        %v1865 = vld [vmem:[#allocation2] sm:$0xe]
        %v1866 = vld [vmem:[#allocation2 + $0x8] sm:$0xe]
        %v1867 = vld [vmem:[#allocation2 + $0x10] sm:$0xe]
        %v1868 = vld [vmem:[#allocation2 + $0x18] sm:$0xe]
        %v1869 = vld [vmem:[#allocation2 + $0x20] sm:$0xe]
        %v1870 = vld [vmem:[#allocation2 + $0x28] sm:$0xe]
        %v1871 = vld [vmem:[#allocation2 + $0x30] sm:$0xe]
        %v1872 = vld [vmem:[#allocation2 + $0x38] sm:$0xe]
        %vm1889 = vcmask 1042432
        %vm1890 = vcmask 1046532
        %vm1891 = vmor %vm1889, %vm1890
        %v1892 = vrot.slane %v1865, 5
        %v1893 = vrot.slane %v1892, 4
        %v1894 = vrot.slane %v1132, 5
        %v1895 = vsel %vm1891, %v1893, %v1894
        %v1896 = vrot.slane %v1866, 5
        %v1897 = vrot.slane %v1896, 4
        %v1898 = vrot.slane %v1133, 5
        %v1899 = vsel %vm1891, %v1897, %v1898
        %v1900 = vrot.slane %v1867, 5
        %v1901 = vrot.slane %v1900, 4
        %v1902 = vrot.slane %v1134, 5
        %v1903 = vsel %vm1891, %v1901, %v1902
        %v1904 = vrot.slane %v1868, 5
        %v1905 = vrot.slane %v1904, 4
        %v1906 = vrot.slane %v1135, 5
        %v1907 = vsel %vm1891, %v1905, %v1906
        %v1908 = vrot.slane %v1869, 5
        %v1909 = vrot.slane %v1908, 4
        %v1910 = vrot.slane %v1136, 5
        %v1911 = vsel %vm1891, %v1909, %v1910
        %v1912 = vrot.slane %v1870, 5
        %v1913 = vrot.slane %v1912, 4
        %v1914 = vrot.slane %v1137, 5
        %v1915 = vsel %vm1891, %v1913, %v1914
        %v1916 = vrot.slane %v1871, 5
        %v1917 = vrot.slane %v1916, 4
        %v1918 = vrot.slane %v1138, 5
        %v1919 = vsel %vm1891, %v1917, %v1918
        %v1920 = vrot.slane %v1872, 5
        %v1921 = vrot.slane %v1920, 4
        %v1922 = vrot.slane %v1139, 5
        %v1923 = vsel %vm1891, %v1921, %v1922
        %s1924 = scalar_lea.vmem %s3, 20
        %v1925 = vld [vmem:[%s1924] sm:$0xf]
        %v1926 = vunpack.c.l.b16 %v1895
        %v1927 = vunpack.c.l.b16 %v1899
        %v1928 = vunpack.c.l.b16 %v1903
        %v1929 = vunpack.c.l.b16 %v1907
        %v1930 = vunpack.c.l.b16 %v1911
        %v1931 = vunpack.c.l.b16 %v1915
        %v1932 = vunpack.c.l.b16 %v1919
        %v1933 = vunpack.c.l.b16 %v1923
        %v1934 = vpack.c.b16 %v1927, %v1926
        %v1935 = vpack.c.b16 %v1929, %v1928
        %v1936 = vpack.c.b16 %v1931, %v1930
        %v1937 = vpack.c.b16 %v1933, %v1932
        %v1939 = vsel %vm1266, %v1934, 0
        %v1942 = vsel %vm1266, %v1935, 0
        %v1945 = vsel %vm1266, %v1936, 0
        %v1948 = vsel %vm1266, %v1937, 0
        %v1951 = vsel %vm1279, %v1925, 0
        %1953 = vmatprep.subr.bf16.mxu0 0
        %1954 = vmatpush1.bf16.msra.mxu0 %v1951
        %1955 = vmatprep.subr.bf16.mxu0 0
        %1956 = vmatpush1.bf16.msra.mxu0 0
        %1957 = vmatprep.subr.bf16.mxu0 0
        %1958 = vmatpush1.bf16.msra.mxu0 0
        %1959 = vmatprep.subr.bf16.mxu0 0
        %1960 = vmatpush1.bf16.msra.mxu0 0
        %1961 = vmatprep.subr.bf16.mxu0 0
        %1962 = vmatpush1.bf16.msra.mxu0 0
        %1963 = vmatprep.subr.bf16.mxu0 0
        %1964 = vmatpush1.bf16.msra.mxu0 0
        %1965 = vmatprep.subr.bf16.mxu0 0
        %1966 = vmatpush1.bf16.msra.mxu0 0
        %1967 = vmatprep.subr.bf16.mxu0 0
        %1968 = vmatpush1.bf16.msra.mxu0 0
        %1969 = vmatprep.subr.bf16.mxu0 0
        %1970 = vmatpush1.bf16.msra.mxu0 0
        %1971 = vmatprep.subr.bf16.mxu0 0
        %1972 = vmatpush1.bf16.msra.mxu0 0
        %1973 = vmatprep.subr.bf16.mxu0 0
        %1974 = vmatpush1.bf16.msra.mxu0 0
        %1975 = vmatprep.subr.bf16.mxu0 0
        %1976 = vmatpush1.bf16.msra.mxu0 0
        %1977 = vmatprep.subr.bf16.mxu0 0
        %1978 = vmatpush1.bf16.msra.mxu0 0
        %1979 = vmatprep.subr.bf16.mxu0 0
        %1980 = vmatpush1.bf16.msra.mxu0 0
        %1981 = vmatprep.subr.bf16.mxu0 0
        %1982 = vmatpush1.bf16.msra.mxu0 0
        %1983 = vmatprep.subr.bf16.mxu0 0
        %1984 = vmatpush1.bf16.msra.mxu0 0
        %1985 = vmatprep.mubr.bf16.mxu0 0
        %1986 = vmatmul.mubr.bf16.gmra.mrb[0].mxu0 %v1939
        %v1987 = vpop.f32.mrb[0].mxu0
        %v1988 = vadd.f32 0.0, %v1987
        %v1989 = vpop.f32.mrb[0].mxu0
        %v1990 = vpop.f32.mrb[0].mxu0
        %v1991 = vadd.f32 0.0, %v1990
        %v1992 = vpop.f32.mrb[0].mxu0
        %1993 = vmatprep.mubr.bf16.mxu0 0
        %1994 = vmatmul.mubr.bf16.gmra.mrb[0].mxu0 %v1942
        %v1995 = vpop.f32.mrb[0].mxu0
        %v1996 = vadd.f32 0.0, %v1995
        %v1997 = vpop.f32.mrb[0].mxu0
        %v1998 = vpop.f32.mrb[0].mxu0
        %v1999 = vadd.f32 0.0, %v1998
        %v2000 = vpop.f32.mrb[0].mxu0
        %2001 = vmatprep.mubr.bf16.mxu0 0
        %2002 = vmatmul.mubr.bf16.gmra.mrb[0].mxu0 %v1945
        %v2003 = vpop.f32.mrb[0].mxu0
        %v2004 = vadd.f32 0.0, %v2003
        %v2005 = vpop.f32.mrb[0].mxu0
        %v2006 = vpop.f32.mrb[0].mxu0
        %v2007 = vadd.f32 0.0, %v2006
        %v2008 = vpop.f32.mrb[0].mxu0
        %2009 = vmatprep.mubr.bf16.mxu0 0
        %2010 = vmatmul.mubr.bf16.gmra.mrb[0].mxu0 %v1948
        %v2011 = vpop.f32.mrb[0].mxu0
        %v2012 = vadd.f32 0.0, %v2011
        %v2013 = vpop.f32.mrb[0].mxu0
        %v2014 = vpop.f32.mrb[0].mxu0
        %v2015 = vadd.f32 0.0, %v2014
        %v2016 = vpop.f32.mrb[0].mxu0
        %2017 = vdwg.mxu0
        %v2019 = vsel %vm1279, %v1864, 0
        %2021 = vmatprep.subr.bf16.mxu0 0
        %2022 = vmatpush1.bf16.msra.mxu0 %v2019
        %2023 = vmatprep.subr.bf16.mxu0 0
        %2024 = vmatpush1.bf16.msra.mxu0 0
        %2025 = vmatprep.subr.bf16.mxu0 0
        %2026 = vmatpush1.bf16.msra.mxu0 0
        %2027 = vmatprep.subr.bf16.mxu0 0
        %2028 = vmatpush1.bf16.msra.mxu0 0
        %2029 = vmatprep.subr.bf16.mxu0 0
        %2030 = vmatpush1.bf16.msra.mxu0 0
        %2031 = vmatprep.subr.bf16.mxu0 0
        %2032 = vmatpush1.bf16.msra.mxu0 0
        %2033 = vmatprep.subr.bf16.mxu0 0
        %2034 = vmatpush1.bf16.msra.mxu0 0
        %2035 = vmatprep.subr.bf16.mxu0 0
        %2036 = vmatpush1.bf16.msra.mxu0 0
        %2037 = vmatprep.subr.bf16.mxu0 0
        %2038 = vmatpush1.bf16.msra.mxu0 0
        %2039 = vmatprep.subr.bf16.mxu0 0
        %2040 = vmatpush1.bf16.msra.mxu0 0
        %2041 = vmatprep.subr.bf16.mxu0 0
        %2042 = vmatpush1.bf16.msra.mxu0 0
        %2043 = vmatprep.subr.bf16.mxu0 0
        %2044 = vmatpush1.bf16.msra.mxu0 0
        %2045 = vmatprep.subr.bf16.mxu0 0
        %2046 = vmatpush1.bf16.msra.mxu0 0
        %2047 = vmatprep.subr.bf16.mxu0 0
        %2048 = vmatpush1.bf16.msra.mxu0 0
        %2049 = vmatprep.subr.bf16.mxu0 0
        %2050 = vmatpush1.bf16.msra.mxu0 0
        %2051 = vmatprep.subr.bf16.mxu0 0
        %2052 = vmatpush1.bf16.msra.mxu0 0
        %2053 = vmatprep.mubr.bf16.mxu0 0
        %2054 = vmatmul.mubr.bf16.gmra.mrb[0].mxu0 %v1268
        %v2055 = vpop.f32.mrb[0].mxu0
        %v2056 = vadd.f32 %v1988, %v2055
        %v2057 = vpop.f32.mrb[0].mxu0
        %v2058 = vpop.f32.mrb[0].mxu0
        %v2059 = vadd.f32 %v1991, %v2058
        %v2060 = vpop.f32.mrb[0].mxu0
        %2061 = vmatprep.mubr.bf16.mxu0 0
        %2062 = vmatmul.mubr.bf16.gmra.mrb[0].mxu0 %v1271
        %v2063 = vpop.f32.mrb[0].mxu0
        %v2064 = vadd.f32 %v1996, %v2063
        %v2065 = vpop.f32.mrb[0].mxu0
        %v2066 = vpop.f32.mrb[0].mxu0
        %v2067 = vadd.f32 %v1999, %v2066
        %v2068 = vpop.f32.mrb[0].mxu0
        %2069 = vmatprep.mubr.bf16.mxu0 0
        %2070 = vmatmul.mubr.bf16.gmra.mrb[0].mxu0 %v1274
        %v2071 = vpop.f32.mrb[0].mxu0
        %v2072 = vadd.f32 %v2004, %v2071
        %v2073 = vpop.f32.mrb[0].mxu0
        %v2074 = vpop.f32.mrb[0].mxu0
        %v2075 = vadd.f32 %v2007, %v2074
        %v2076 = vpop.f32.mrb[0].mxu0
        %2077 = vmatprep.mubr.bf16.mxu0 0
        %2078 = vmatmul.mubr.bf16.gmra.mrb[0].mxu0 %v1277
        %v2079 = vpop.f32.mrb[0].mxu0
        %v2080 = vadd.f32 %v2012, %v2079
        %v2081 = vpop.f32.mrb[0].mxu0
        %v2082 = vpop.f32.mrb[0].mxu0
        %v2083 = vadd.f32 %v2015, %v2082
        %v2084 = vpop.f32.mrb[0].mxu0
        %2085 = vdwg.mxu0
        %s2086 = scalar_lea.vmem %s3, 24
        %v2087 = vld [vmem:[%s2086] sm:$0xf]
        %v2089 = vsel %vm1279, %v2087, 0
        %2091 = vmatprep.subr.bf16.mxu0 0
        %2092 = vmatpush1.bf16.msra.mxu0 %v2089
        %2093 = vmatprep.subr.bf16.mxu0 0
        %2094 = vmatpush1.bf16.msra.mxu0 0
        %2095 = vmatprep.subr.bf16.mxu0 0
        %2096 = vmatpush1.bf16.msra.mxu0 0
        %2097 = vmatprep.subr.bf16.mxu0 0
        %2098 = vmatpush1.bf16.msra.mxu0 0
        %2099 = vmatprep.subr.bf16.mxu0 0
        %2100 = vmatpush1.bf16.msra.mxu0 0
        %2101 = vmatprep.subr.bf16.mxu0 0
        %2102 = vmatpush1.bf16.msra.mxu0 0
        %2103 = vmatprep.subr.bf16.mxu0 0
        %2104 = vmatpush1.bf16.msra.mxu0 0
        %2105 = vmatprep.subr.bf16.mxu0 0
        %2106 = vmatpush1.bf16.msra.mxu0 0
        %2107 = vmatprep.subr.bf16.mxu0 0
        %2108 = vmatpush1.bf16.msra.mxu0 0
        %2109 = vmatprep.subr.bf16.mxu0 0
        %2110 = vmatpush1.bf16.msra.mxu0 0
        %2111 = vmatprep.subr.bf16.mxu0 0
        %2112 = vmatpush1.bf16.msra.mxu0 0
        %2113 = vmatprep.subr.bf16.mxu0 0
        %2114 = vmatpush1.bf16.msra.mxu0 0
        %2115 = vmatprep.subr.bf16.mxu0 0
        %2116 = vmatpush1.bf16.msra.mxu0 0
        %2117 = vmatprep.subr.bf16.mxu0 0
        %2118 = vmatpush1.bf16.msra.mxu0 0
        %2119 = vmatprep.subr.bf16.mxu0 0
        %2120 = vmatpush1.bf16.msra.mxu0 0
        %2121 = vmatprep.subr.bf16.mxu0 0
        %2122 = vmatpush1.bf16.msra.mxu0 0
        %2123 = vmatprep.mubr.bf16.mxu0 0
        %2124 = vmatmul.mubr.bf16.gmra.mrb[0].mxu0 %v1709
        %v2125 = vpop.f32.mrb[0].mxu0
        %v2126 = vadd.f32 0.0, %v2125
        %v2127 = vpop.f32.mrb[0].mxu0
        %v2128 = vpop.f32.mrb[0].mxu0
        %v2129 = vadd.f32 0.0, %v2128
        %v2130 = vpop.f32.mrb[0].mxu0
        %2131 = vmatprep.mubr.bf16.mxu0 0
        %2132 = vmatmul.mubr.bf16.gmra.mrb[0].mxu0 %v1712
        %v2133 = vpop.f32.mrb[0].mxu0
        %v2134 = vadd.f32 0.0, %v2133
        %v2135 = vpop.f32.mrb[0].mxu0
        %v2136 = vpop.f32.mrb[0].mxu0
        %v2137 = vadd.f32 0.0, %v2136
        %v2138 = vpop.f32.mrb[0].mxu0
        %2139 = vmatprep.mubr.bf16.mxu0 0
        %2140 = vmatmul.mubr.bf16.gmra.mrb[0].mxu0 %v1715
        %v2141 = vpop.f32.mrb[0].mxu0
        %v2142 = vadd.f32 0.0, %v2141
        %v2143 = vpop.f32.mrb[0].mxu0
        %v2144 = vpop.f32.mrb[0].mxu0
        %v2145 = vadd.f32 0.0, %v2144
        %v2146 = vpop.f32.mrb[0].mxu0
        %2147 = vmatprep.mubr.bf16.mxu0 0
        %2148 = vmatmul.mubr.bf16.gmra.mrb[0].mxu0 %v1718
        %v2149 = vpop.f32.mrb[0].mxu0
        %v2150 = vadd.f32 0.0, %v2149
        %v2151 = vpop.f32.mrb[0].mxu0
        %v2152 = vpop.f32.mrb[0].mxu0
        %v2153 = vadd.f32 0.0, %v2152
        %v2154 = vpop.f32.mrb[0].mxu0
        %2155 = vdwg.mxu0
        %v2156 = vadd.f32 %v2056, %v2126
        %v2157 = vadd.f32 %v2059, %v2129
        %v2158 = vadd.f32 %v2064, %v2134
        %v2159 = vadd.f32 %v2067, %v2137
        %v2160 = vadd.f32 %v2072, %v2142
        %v2161 = vadd.f32 %v2075, %v2145
        %v2162 = vadd.f32 %v2080, %v2150
        %v2163 = vadd.f32 %v2083, %v2153
        %v2164 = vld [vmem:[%s999] sm:$0xe]
        %v2165 = vld [vmem:[%s999 + $0x8] sm:$0xe]
        %v2166 = vld [vmem:[%s999 + $0x10] sm:$0xe]
        %v2167 = vld [vmem:[%s999 + $0x18] sm:$0xe]
        %v2168 = vld [vmem:[%s999 + $0x20] sm:$0xe]
        %v2169 = vld [vmem:[%s999 + $0x28] sm:$0xe]
        %v2170 = vld [vmem:[%s999 + $0x30] sm:$0xe]
        %v2171 = vld [vmem:[%s999 + $0x38] sm:$0xe]
        %v2188 = vrot.slane %v2164, 5
        %v2189 = vrot.slane %v2188, 4
        %v2190 = vrot.slane %v1567, 5
        %v2191 = vsel %vm1891, %v2189, %v2190
        %v2192 = vrot.slane %v2165, 5
        %v2193 = vrot.slane %v2192, 4
        %v2194 = vrot.slane %v1569, 5
        %v2195 = vsel %vm1891, %v2193, %v2194
        %v2196 = vrot.slane %v2166, 5
        %v2197 = vrot.slane %v2196, 4
        %v2198 = vrot.slane %v1571, 5
        %v2199 = vsel %vm1891, %v2197, %v2198
        %v2200 = vrot.slane %v2167, 5
        %v2201 = vrot.slane %v2200, 4
        %v2202 = vrot.slane %v1573, 5
        %v2203 = vsel %vm1891, %v2201, %v2202
        %v2204 = vrot.slane %v2168, 5
        %v2205 = vrot.slane %v2204, 4
        %v2206 = vrot.slane %v1575, 5
        %v2207 = vsel %vm1891, %v2205, %v2206
        %v2208 = vrot.slane %v2169, 5
        %v2209 = vrot.slane %v2208, 4
        %v2210 = vrot.slane %v1577, 5
        %v2211 = vsel %vm1891, %v2209, %v2210
        %v2212 = vrot.slane %v2170, 5
        %v2213 = vrot.slane %v2212, 4
        %v2214 = vrot.slane %v1579, 5
        %v2215 = vsel %vm1891, %v2213, %v2214
        %v2216 = vrot.slane %v2171, 5
        %v2217 = vrot.slane %v2216, 4
        %v2218 = vrot.slane %v1581, 5
        %v2219 = vsel %vm1891, %v2217, %v2218
        %s2220 = scalar_lea.vmem %s3, 28
        %v2221 = vld [vmem:[%s2220] sm:$0xf]
        %v2222 = vunpack.c.l.b16 %v2191
        %v2223 = vunpack.c.l.b16 %v2195
        %v2224 = vunpack.c.l.b16 %v2199
        %v2225 = vunpack.c.l.b16 %v2203
        %v2226 = vunpack.c.l.b16 %v2207
        %v2227 = vunpack.c.l.b16 %v2211
        %v2228 = vunpack.c.l.b16 %v2215
        %v2229 = vunpack.c.l.b16 %v2219
        %v2230 = vpack.c.b16 %v2223, %v2222
        %v2231 = vpack.c.b16 %v2225, %v2224
        %v2232 = vpack.c.b16 %v2227, %v2226
        %v2233 = vpack.c.b16 %v2229, %v2228
        %v2235 = vsel %vm1266, %v2230, 0
        %v2238 = vsel %vm1266, %v2231, 0
        %v2241 = vsel %vm1266, %v2232, 0
        %v2244 = vsel %vm1266, %v2233, 0
        %v2247 = vsel %vm1279, %v2221, 0
        %2249 = vmatprep.subr.bf16.mxu0 0
        %2250 = vmatpush1.bf16.msra.mxu0 %v2247
        %2251 = vmatprep.subr.bf16.mxu0 0
        %2252 = vmatpush1.bf16.msra.mxu0 0
        %2253 = vmatprep.subr.bf16.mxu0 0
        %2254 = vmatpush1.bf16.msra.mxu0 0
        %2255 = vmatprep.subr.bf16.mxu0 0
        %2256 = vmatpush1.bf16.msra.mxu0 0
        %2257 = vmatprep.subr.bf16.mxu0 0
        %2258 = vmatpush1.bf16.msra.mxu0 0
        %2259 = vmatprep.subr.bf16.mxu0 0
        %2260 = vmatpush1.bf16.msra.mxu0 0
        %2261 = vmatprep.subr.bf16.mxu0 0
        %2262 = vmatpush1.bf16.msra.mxu0 0
        %2263 = vmatprep.subr.bf16.mxu0 0
        %2264 = vmatpush1.bf16.msra.mxu0 0
        %2265 = vmatprep.subr.bf16.mxu0 0
        %2266 = vmatpush1.bf16.msra.mxu0 0
        %2267 = vmatprep.subr.bf16.mxu0 0
        %2268 = vmatpush1.bf16.msra.mxu0 0
        %2269 = vmatprep.subr.bf16.mxu0 0
        %2270 = vmatpush1.bf16.msra.mxu0 0
        %2271 = vmatprep.subr.bf16.mxu0 0
        %2272 = vmatpush1.bf16.msra.mxu0 0
        %2273 = vmatprep.subr.bf16.mxu0 0
        %2274 = vmatpush1.bf16.msra.mxu0 0
        %2275 = vmatprep.subr.bf16.mxu0 0
        %2276 = vmatpush1.bf16.msra.mxu0 0
        %2277 = vmatprep.subr.bf16.mxu0 0
        %2278 = vmatpush1.bf16.msra.mxu0 0
        %2279 = vmatprep.subr.bf16.mxu0 0
        %2280 = vmatpush1.bf16.msra.mxu0 0
        %2281 = vmatprep.mubr.bf16.mxu0 0
        %2282 = vmatmul.mubr.bf16.gmra.mrb[0].mxu0 %v2235
        %v2283 = vpop.f32.mrb[0].mxu0
        %v2284 = vadd.f32 0.0, %v2283
        %v2285 = vpop.f32.mrb[0].mxu0
        %v2286 = vpop.f32.mrb[0].mxu0
        %v2287 = vadd.f32 0.0, %v2286
        %v2288 = vpop.f32.mrb[0].mxu0
        %2289 = vmatprep.mubr.bf16.mxu0 0
        %2290 = vmatmul.mubr.bf16.gmra.mrb[0].mxu0 %v2238
        %v2291 = vpop.f32.mrb[0].mxu0
        %v2292 = vadd.f32 0.0, %v2291
        %v2293 = vpop.f32.mrb[0].mxu0
        %v2294 = vpop.f32.mrb[0].mxu0
        %v2295 = vadd.f32 0.0, %v2294
        %v2296 = vpop.f32.mrb[0].mxu0
        %2297 = vmatprep.mubr.bf16.mxu0 0
        %2298 = vmatmul.mubr.bf16.gmra.mrb[0].mxu0 %v2241
        %v2299 = vpop.f32.mrb[0].mxu0
        %v2300 = vadd.f32 0.0, %v2299
        %v2301 = vpop.f32.mrb[0].mxu0
        %v2302 = vpop.f32.mrb[0].mxu0
        %v2303 = vadd.f32 0.0, %v2302
        %v2304 = vpop.f32.mrb[0].mxu0
        %2305 = vmatprep.mubr.bf16.mxu0 0
        %2306 = vmatmul.mubr.bf16.gmra.mrb[0].mxu0 %v2244
        %v2307 = vpop.f32.mrb[0].mxu0
        %v2308 = vadd.f32 0.0, %v2307
        %v2309 = vpop.f32.mrb[0].mxu0
        %v2310 = vpop.f32.mrb[0].mxu0
        %v2311 = vadd.f32 0.0, %v2310
        %v2312 = vpop.f32.mrb[0].mxu0
        %2313 = vdwg.mxu0
        %v2314 = vadd.f32 %v2156, %v2284
        %v2315 = vadd.f32 %v2157, %v2287
        %v2316 = vadd.f32 %v2158, %v2292
        %v2317 = vadd.f32 %v2159, %v2295
        %v2318 = vadd.f32 %v2160, %v2300
        %v2319 = vadd.f32 %v2161, %v2303
        %v2320 = vadd.f32 %v2162, %v2308
        %v2321 = vadd.f32 %v2163, %v2311
        %v2322 = vadd.f32 %v2314, %v1800
        %v2323 = vadd.f32 %v2315, %v1800
        %v2324 = vadd.f32 %v2316, %v1800
        %v2325 = vadd.f32 %v2317, %v1800
        %v2326 = vadd.f32 %v2318, %v1800
        %v2327 = vadd.f32 %v2319, %v1800
        %v2328 = vadd.f32 %v2320, %v1800
        %v2329 = vadd.f32 %v2321, %v1800
        %v2330 = vsel %vm1810, %v2322, 0.0
        %v2331 = vsel %vm1810, %v2323, 0.0
        %v2332 = vadd.f32 %v2330, %v2331
        %v2333 = vsel %vm1810, %v2324, 0.0
        %v2334 = vadd.f32 %v2332, %v2333
        %v2335 = vsel %vm1810, %v2325, 0.0
        %v2336 = vadd.f32 %v2334, %v2335
        %v2337 = vsel %vm1810, %v2326, 0.0
        %v2338 = vadd.f32 %v2336, %v2337
        %v2339 = vsel %vm1810, %v2327, 0.0
        %v2340 = vadd.f32 %v2338, %v2339
        %v2341 = vsel %vm1810, %v2328, 0.0
        %v2342 = vadd.f32 %v2340, %v2341
        %v2343 = vsel %vm1810, %v2329, 0.0
        %v2344 = vadd.f32 %v2342, %v2343
        %v2345 = vrot.slane %v2344, 4
        %v2346 = vadd.f32 %v2344, %v2345
        %v2347 = vrot.slane %v2346, 2
        %v2348 = vadd.f32 %v2346, %v2347
        %v2349 = vrot.slane %v2348, 1
        %v2350 = vadd.f32 %v2348, %v2349
        %v2351 = vadd.f32 %v1832, %v2350
        %v2352 = vmul.f32 %v2322, %v2322
        %v2353 = vmul.f32 %v2323, %v2323
        %v2354 = vmul.f32 %v2324, %v2324
        %v2355 = vmul.f32 %v2325, %v2325
        %v2356 = vmul.f32 %v2326, %v2326
        %v2357 = vmul.f32 %v2327, %v2327
        %v2358 = vmul.f32 %v2328, %v2328
        %v2359 = vmul.f32 %v2329, %v2329
        %v2360 = vsel %vm1810, %v2352, 0.0
        %v2361 = vsel %vm1810, %v2353, 0.0
        %v2362 = vadd.f32 %v2360, %v2361
        %v2363 = vsel %vm1810, %v2354, 0.0
        %v2364 = vadd.f32 %v2362, %v2363
        %v2365 = vsel %vm1810, %v2355, 0.0
        %v2366 = vadd.f32 %v2364, %v2365
        %v2367 = vsel %vm1810, %v2356, 0.0
        %v2368 = vadd.f32 %v2366, %v2367
        %v2369 = vsel %vm1810, %v2357, 0.0
        %v2370 = vadd.f32 %v2368, %v2369
        %v2371 = vsel %vm1810, %v2358, 0.0
        %v2372 = vadd.f32 %v2370, %v2371
        %v2373 = vsel %vm1810, %v2359, 0.0
        %v2374 = vadd.f32 %v2372, %v2373
        %v2375 = vrot.slane %v2374, 4
        %v2376 = vadd.f32 %v2374, %v2375
        %v2377 = vrot.slane %v2376, 2
        %v2378 = vadd.f32 %v2376, %v2377
        %v2379 = vrot.slane %v2378, 1
        %v2380 = vadd.f32 %v2378, %v2379
        %v2381 = vadd.f32 %v1862, %v2380
        %s2382 = scalar_lea.vmem %s3, 32
        %v2383 = vld [vmem:[%s2382] sm:$0xf]
        %s2384 = scalar_lea.vmem %s3, 36
        %v2385 = vld [vmem:[%s2384] sm:$0xf]
        %v2387 = vsel %vm1279, %v2385, 0
        %2389 = vmatprep.subr.bf16.mxu0 0
        %2390 = vmatpush1.bf16.msra.mxu0 %v2387
        %2391 = vmatprep.subr.bf16.mxu0 0
        %2392 = vmatpush1.bf16.msra.mxu0 0
        %2393 = vmatprep.subr.bf16.mxu0 0
        %2394 = vmatpush1.bf16.msra.mxu0 0
        %2395 = vmatprep.subr.bf16.mxu0 0
        %2396 = vmatpush1.bf16.msra.mxu0 0
        %2397 = vmatprep.subr.bf16.mxu0 0
        %2398 = vmatpush1.bf16.msra.mxu0 0
        %2399 = vmatprep.subr.bf16.mxu0 0
        %2400 = vmatpush1.bf16.msra.mxu0 0
        %2401 = vmatprep.subr.bf16.mxu0 0
        %2402 = vmatpush1.bf16.msra.mxu0 0
        %2403 = vmatprep.subr.bf16.mxu0 0
        %2404 = vmatpush1.bf16.msra.mxu0 0
        %2405 = vmatprep.subr.bf16.mxu0 0
        %2406 = vmatpush1.bf16.msra.mxu0 0
        %2407 = vmatprep.subr.bf16.mxu0 0
        %2408 = vmatpush1.bf16.msra.mxu0 0
        %2409 = vmatprep.subr.bf16.mxu0 0
        %2410 = vmatpush1.bf16.msra.mxu0 0
        %2411 = vmatprep.subr.bf16.mxu0 0
        %2412 = vmatpush1.bf16.msra.mxu0 0
        %2413 = vmatprep.subr.bf16.mxu0 0
        %2414 = vmatpush1.bf16.msra.mxu0 0
        %2415 = vmatprep.subr.bf16.mxu0 0
        %2416 = vmatpush1.bf16.msra.mxu0 0
        %2417 = vmatprep.subr.bf16.mxu0 0
        %2418 = vmatpush1.bf16.msra.mxu0 0
        %2419 = vmatprep.subr.bf16.mxu0 0
        %2420 = vmatpush1.bf16.msra.mxu0 0
        %2421 = vmatprep.mubr.bf16.mxu0 0
        %2422 = vmatmul.mubr.bf16.gmra.mrb[0].mxu0 %v1709
        %v2423 = vpop.f32.mrb[0].mxu0
        %v2424 = vadd.f32 0.0, %v2423
        %v2425 = vpop.f32.mrb[0].mxu0
        %v2426 = vpop.f32.mrb[0].mxu0
        %v2427 = vadd.f32 0.0, %v2426
        %v2428 = vpop.f32.mrb[0].mxu0
        %2429 = vmatprep.mubr.bf16.mxu0 0
        %2430 = vmatmul.mubr.bf16.gmra.mrb[0].mxu0 %v1712
        %v2431 = vpop.f32.mrb[0].mxu0
        %v2432 = vadd.f32 0.0, %v2431
        %v2433 = vpop.f32.mrb[0].mxu0
        %v2434 = vpop.f32.mrb[0].mxu0
        %v2435 = vadd.f32 0.0, %v2434
        %v2436 = vpop.f32.mrb[0].mxu0
        %2437 = vmatprep.mubr.bf16.mxu0 0
        %2438 = vmatmul.mubr.bf16.gmra.mrb[0].mxu0 %v1715
        %v2439 = vpop.f32.mrb[0].mxu0
        %v2440 = vadd.f32 0.0, %v2439
        %v2441 = vpop.f32.mrb[0].mxu0
        %v2442 = vpop.f32.mrb[0].mxu0
        %v2443 = vadd.f32 0.0, %v2442
        %v2444 = vpop.f32.mrb[0].mxu0
        %2445 = vmatprep.mubr.bf16.mxu0 0
        %2446 = vmatmul.mubr.bf16.gmra.mrb[0].mxu0 %v1718
        %v2447 = vpop.f32.mrb[0].mxu0
        %v2448 = vadd.f32 0.0, %v2447
        %v2449 = vpop.f32.mrb[0].mxu0
        %v2450 = vpop.f32.mrb[0].mxu0
        %v2451 = vadd.f32 0.0, %v2450
        %v2452 = vpop.f32.mrb[0].mxu0
        %2453 = vdwg.mxu0
        %v2455 = vsel %vm1279, %v2383, 0
        %2457 = vmatprep.subr.bf16.mxu0 0
        %2458 = vmatpush1.bf16.msra.mxu0 %v2455
        %2459 = vmatprep.subr.bf16.mxu0 0
        %2460 = vmatpush1.bf16.msra.mxu0 0
        %2461 = vmatprep.subr.bf16.mxu0 0
        %2462 = vmatpush1.bf16.msra.mxu0 0
        %2463 = vmatprep.subr.bf16.mxu0 0
        %2464 = vmatpush1.bf16.msra.mxu0 0
        %2465 = vmatprep.subr.bf16.mxu0 0
        %2466 = vmatpush1.bf16.msra.mxu0 0
        %2467 = vmatprep.subr.bf16.mxu0 0
        %2468 = vmatpush1.bf16.msra.mxu0 0
        %2469 = vmatprep.subr.bf16.mxu0 0
        %2470 = vmatpush1.bf16.msra.mxu0 0
        %2471 = vmatprep.subr.bf16.mxu0 0
        %2472 = vmatpush1.bf16.msra.mxu0 0
        %2473 = vmatprep.subr.bf16.mxu0 0
        %2474 = vmatpush1.bf16.msra.mxu0 0
        %2475 = vmatprep.subr.bf16.mxu0 0
        %2476 = vmatpush1.bf16.msra.mxu0 0
        %2477 = vmatprep.subr.bf16.mxu0 0
        %2478 = vmatpush1.bf16.msra.mxu0 0
        %2479 = vmatprep.subr.bf16.mxu0 0
        %2480 = vmatpush1.bf16.msra.mxu0 0
        %2481 = vmatprep.subr.bf16.mxu0 0
        %2482 = vmatpush1.bf16.msra.mxu0 0
        %2483 = vmatprep.subr.bf16.mxu0 0
        %2484 = vmatpush1.bf16.msra.mxu0 0
        %2485 = vmatprep.subr.bf16.mxu0 0
        %2486 = vmatpush1.bf16.msra.mxu0 0
        %2487 = vmatprep.subr.bf16.mxu0 0
        %2488 = vmatpush1.bf16.msra.mxu0 0
        %2489 = vmatprep.mubr.bf16.mxu0 0
        %2490 = vmatmul.mubr.bf16.gmra.mrb[0].mxu0 %v1479
        %v2491 = vpop.f32.mrb[0].mxu0
        %v2492 = vadd.f32 %v2424, %v2491
        %v2493 = vpop.f32.mrb[0].mxu0
        %v2494 = vpop.f32.mrb[0].mxu0
        %v2495 = vadd.f32 %v2427, %v2494
        %v2496 = vpop.f32.mrb[0].mxu0
        %2497 = vmatprep.mubr.bf16.mxu0 0
        %2498 = vmatmul.mubr.bf16.gmra.mrb[0].mxu0 %v1482
        %v2499 = vpop.f32.mrb[0].mxu0
        %v2500 = vadd.f32 %v2432, %v2499
        %v2501 = vpop.f32.mrb[0].mxu0
        %v2502 = vpop.f32.mrb[0].mxu0
        %v2503 = vadd.f32 %v2435, %v2502
        %v2504 = vpop.f32.mrb[0].mxu0
        %2505 = vmatprep.mubr.bf16.mxu0 0
        %2506 = vmatmul.mubr.bf16.gmra.mrb[0].mxu0 %v1485
        %v2507 = vpop.f32.mrb[0].mxu0
        %v2508 = vadd.f32 %v2440, %v2507
        %v2509 = vpop.f32.mrb[0].mxu0
        %v2510 = vpop.f32.mrb[0].mxu0
        %v2511 = vadd.f32 %v2443, %v2510
        %v2512 = vpop.f32.mrb[0].mxu0
        %2513 = vmatprep.mubr.bf16.mxu0 0
        %2514 = vmatmul.mubr.bf16.gmra.mrb[0].mxu0 %v1488
        %v2515 = vpop.f32.mrb[0].mxu0
        %v2516 = vadd.f32 %v2448, %v2515
        %v2517 = vpop.f32.mrb[0].mxu0
        %v2518 = vpop.f32.mrb[0].mxu0
        %v2519 = vadd.f32 %v2451, %v2518
        %v2520 = vpop.f32.mrb[0].mxu0
        %2521 = vdwg.mxu0
        %s2522 = scalar_lea.vmem [#allocation2], 16
        %v2523 = vld [vmem:[%s2522] sm:$0xf]
        %v2524 = vld [vmem:[%s2522 + $0x8] sm:$0xf]
        %v2525 = vld [vmem:[%s2522 + $0x10] sm:$0xf]
        %v2526 = vld [vmem:[%s2522 + $0x18] sm:$0xf]
        %v2527 = vld [vmem:[%s2522 + $0x20] sm:$0xf]
        %v2528 = vld [vmem:[%s2522 + $0x28] sm:$0xf]
        %v2529 = vld [vmem:[%s2522 + $0x30] sm:$0xf]
        %v2530 = vld [vmem:[%s2522 + $0x38] sm:$0xf]
        %s2531 = scalar_lea.vmem %s3, 40
        %v2532 = vld [vmem:[%s2531] sm:$0xf]
        %v2541 = vunpack.c.l.b16 %v2523
        %v2542 = vunpack.c.l.b16 %v2524
        %v2543 = vunpack.c.l.b16 %v2525
        %v2544 = vunpack.c.l.b16 %v2526
        %v2545 = vunpack.c.l.b16 %v2527
        %v2546 = vunpack.c.l.b16 %v2528
        %v2547 = vunpack.c.l.b16 %v2529
        %v2548 = vunpack.c.l.b16 %v2530
        %v2549 = vpack.c.b16 %v2542, %v2541
        %v2550 = vpack.c.b16 %v2544, %v2543
        %v2551 = vpack.c.b16 %v2546, %v2545
        %v2552 = vpack.c.b16 %v2548, %v2547
        %v2554 = vsel %vm1266, %v2549, 0
        %v2557 = vsel %vm1266, %v2550, 0
        %v2560 = vsel %vm1266, %v2551, 0
        %v2563 = vsel %vm1266, %v2552, 0
        %v2566 = vsel %vm1279, %v2532, 0
        %2568 = vmatprep.subr.bf16.mxu0 0
        %2569 = vmatpush1.bf16.msra.mxu0 %v2566
        %2570 = vmatprep.subr.bf16.mxu0 0
        %2571 = vmatpush1.bf16.msra.mxu0 0
        %2572 = vmatprep.subr.bf16.mxu0 0
        %2573 = vmatpush1.bf16.msra.mxu0 0
        %2574 = vmatprep.subr.bf16.mxu0 0
        %2575 = vmatpush1.bf16.msra.mxu0 0
        %2576 = vmatprep.subr.bf16.mxu0 0
        %2577 = vmatpush1.bf16.msra.mxu0 0
        %2578 = vmatprep.subr.bf16.mxu0 0
        %2579 = vmatpush1.bf16.msra.mxu0 0
        %2580 = vmatprep.subr.bf16.mxu0 0
        %2581 = vmatpush1.bf16.msra.mxu0 0
        %2582 = vmatprep.subr.bf16.mxu0 0
        %2583 = vmatpush1.bf16.msra.mxu0 0
        %2584 = vmatprep.subr.bf16.mxu0 0
        %2585 = vmatpush1.bf16.msra.mxu0 0
        %2586 = vmatprep.subr.bf16.mxu0 0
        %2587 = vmatpush1.bf16.msra.mxu0 0
        %2588 = vmatprep.subr.bf16.mxu0 0
        %2589 = vmatpush1.bf16.msra.mxu0 0
        %2590 = vmatprep.subr.bf16.mxu0 0
        %2591 = vmatpush1.bf16.msra.mxu0 0
        %2592 = vmatprep.subr.bf16.mxu0 0
        %2593 = vmatpush1.bf16.msra.mxu0 0
        %2594 = vmatprep.subr.bf16.mxu0 0
        %2595 = vmatpush1.bf16.msra.mxu0 0
        %2596 = vmatprep.subr.bf16.mxu0 0
        %2597 = vmatpush1.bf16.msra.mxu0 0
        %2598 = vmatprep.subr.bf16.mxu0 0
        %2599 = vmatpush1.bf16.msra.mxu0 0
        %2600 = vmatprep.mubr.bf16.mxu0 0
        %2601 = vmatmul.mubr.bf16.gmra.mrb[0].mxu0 %v2554
        %v2602 = vpop.f32.mrb[0].mxu0
        %v2603 = vadd.f32 0.0, %v2602
        %v2604 = vpop.f32.mrb[0].mxu0
        %v2605 = vpop.f32.mrb[0].mxu0
        %v2606 = vadd.f32 0.0, %v2605
        %v2607 = vpop.f32.mrb[0].mxu0
        %2608 = vmatprep.mubr.bf16.mxu0 0
        %2609 = vmatmul.mubr.bf16.gmra.mrb[0].mxu0 %v2557
        %v2610 = vpop.f32.mrb[0].mxu0
        %v2611 = vadd.f32 0.0, %v2610
        %v2612 = vpop.f32.mrb[0].mxu0
        %v2613 = vpop.f32.mrb[0].mxu0
        %v2614 = vadd.f32 0.0, %v2613
        %v2615 = vpop.f32.mrb[0].mxu0
        %2616 = vmatprep.mubr.bf16.mxu0 0
        %2617 = vmatmul.mubr.bf16.gmra.mrb[0].mxu0 %v2560
        %v2618 = vpop.f32.mrb[0].mxu0
        %v2619 = vadd.f32 0.0, %v2618
        %v2620 = vpop.f32.mrb[0].mxu0
        %v2621 = vpop.f32.mrb[0].mxu0
        %v2622 = vadd.f32 0.0, %v2621
        %v2623 = vpop.f32.mrb[0].mxu0
        %2624 = vmatprep.mubr.bf16.mxu0 0
        %2625 = vmatmul.mubr.bf16.gmra.mrb[0].mxu0 %v2563
        %v2626 = vpop.f32.mrb[0].mxu0
        %v2627 = vadd.f32 0.0, %v2626
        %v2628 = vpop.f32.mrb[0].mxu0
        %v2629 = vpop.f32.mrb[0].mxu0
        %v2630 = vadd.f32 0.0, %v2629
        %v2631 = vpop.f32.mrb[0].mxu0
        %2632 = vdwg.mxu0
        %v2633 = vadd.f32 %v2492, %v2603
        %v2634 = vadd.f32 %v2495, %v2606
        %v2635 = vadd.f32 %v2500, %v2611
        %v2636 = vadd.f32 %v2503, %v2614
        %v2637 = vadd.f32 %v2508, %v2619
        %v2638 = vadd.f32 %v2511, %v2622
        %v2639 = vadd.f32 %v2516, %v2627
        %v2640 = vadd.f32 %v2519, %v2630
        %v2641 = vld [vmem:[%s2522] sm:$0xf]
        %v2642 = vld [vmem:[%s2522 + $0x4] sm:$0x1]
        %v2643 = vld [vmem:[%s2522 + $0x8] sm:$0xf]
        %v2644 = vld [vmem:[%s2522 + $0xc] sm:$0x1]
        %v2645 = vld [vmem:[%s2522 + $0x10] sm:$0xf]
        %v2646 = vld [vmem:[%s2522 + $0x14] sm:$0x1]
        %v2647 = vld [vmem:[%s2522 + $0x18] sm:$0xf]
        %v2648 = vld [vmem:[%s2522 + $0x1c] sm:$0x1]
        %v2649 = vld [vmem:[%s2522 + $0x20] sm:$0xf]
        %v2650 = vld [vmem:[%s2522 + $0x24] sm:$0x1]
        %v2651 = vld [vmem:[%s2522 + $0x28] sm:$0xf]
        %v2652 = vld [vmem:[%s2522 + $0x2c] sm:$0x1]
        %v2653 = vld [vmem:[%s2522 + $0x30] sm:$0xf]
        %v2654 = vld [vmem:[%s2522 + $0x34] sm:$0x1]
        %v2655 = vld [vmem:[%s2522 + $0x38] sm:$0xf]
        %v2656 = vld [vmem:[%s2522 + $0x3c] sm:$0x1]
        %v2658 = vshrl.u32 %v2641, 16
        %v2660 = vrot.slane %v2658, 4
        %v2661 = vshll.u32 %v2641, 16
        %v2663 = vrot.slane %v2661, 5
        %v2664 = vor.u32 %v2660, %v2663
        %v2665 = vrot.slane %v2664, 4
        %v2667 = vshll.u32 %v2642, 16
        %v2669 = vrot.slane %v2667, 5
        %v2670 = vsel %vm349, %v2665, %v2669
        %v2672 = vshrl.u32 %v2643, 16
        %v2674 = vrot.slane %v2672, 4
        %v2675 = vshll.u32 %v2643, 16
        %v2677 = vrot.slane %v2675, 5
        %v2678 = vor.u32 %v2674, %v2677
        %v2679 = vrot.slane %v2678, 4
        %v2681 = vshll.u32 %v2644, 16
        %v2683 = vrot.slane %v2681, 5
        %v2684 = vsel %vm349, %v2679, %v2683
        %v2686 = vshrl.u32 %v2645, 16
        %v2688 = vrot.slane %v2686, 4
        %v2689 = vshll.u32 %v2645, 16
        %v2691 = vrot.slane %v2689, 5
        %v2692 = vor.u32 %v2688, %v2691
        %v2693 = vrot.slane %v2692, 4
        %v2695 = vshll.u32 %v2646, 16
        %v2697 = vrot.slane %v2695, 5
        %v2698 = vsel %vm349, %v2693, %v2697
        %v2700 = vshrl.u32 %v2647, 16
        %v2702 = vrot.slane %v2700, 4
        %v2703 = vshll.u32 %v2647, 16
        %v2705 = vrot.slane %v2703, 5
        %v2706 = vor.u32 %v2702, %v2705
        %v2707 = vrot.slane %v2706, 4
        %v2709 = vshll.u32 %v2648, 16
        %v2711 = vrot.slane %v2709, 5
        %v2712 = vsel %vm349, %v2707, %v2711
        %v2714 = vshrl.u32 %v2649, 16
        %v2716 = vrot.slane %v2714, 4
        %v2717 = vshll.u32 %v2649, 16
        %v2719 = vrot.slane %v2717, 5
        %v2720 = vor.u32 %v2716, %v2719
        %v2721 = vrot.slane %v2720, 4
        %v2723 = vshll.u32 %v2650, 16
        %v2725 = vrot.slane %v2723, 5
        %v2726 = vsel %vm349, %v2721, %v2725
        %v2728 = vshrl.u32 %v2651, 16
        %v2730 = vrot.slane %v2728, 4
        %v2731 = vshll.u32 %v2651, 16
        %v2733 = vrot.slane %v2731, 5
        %v2734 = vor.u32 %v2730, %v2733
        %v2735 = vrot.slane %v2734, 4
        %v2737 = vshll.u32 %v2652, 16
        %v2739 = vrot.slane %v2737, 5
        %v2740 = vsel %vm349, %v2735, %v2739
        %v2742 = vshrl.u32 %v2653, 16
        %v2744 = vrot.slane %v2742, 4
        %v2745 = vshll.u32 %v2653, 16
        %v2747 = vrot.slane %v2745, 5
        %v2748 = vor.u32 %v2744, %v2747
        %v2749 = vrot.slane %v2748, 4
        %v2751 = vshll.u32 %v2654, 16
        %v2753 = vrot.slane %v2751, 5
        %v2754 = vsel %vm349, %v2749, %v2753
        %v2756 = vshrl.u32 %v2655, 16
        %v2758 = vrot.slane %v2756, 4
        %v2759 = vshll.u32 %v2655, 16
        %v2761 = vrot.slane %v2759, 5
        %v2762 = vor.u32 %v2758, %v2761
        %v2763 = vrot.slane %v2762, 4
        %v2765 = vshll.u32 %v2656, 16
        %v2767 = vrot.slane %v2765, 5
        %v2768 = vsel %vm349, %v2763, %v2767
        %s2769 = scalar_lea.vmem %s3, 44
        %v2770 = vld [vmem:[%s2769] sm:$0xf]
        %v2771 = vunpack.c.l.b16 %v2670
        %v2772 = vunpack.c.l.b16 %v2684
        %v2773 = vunpack.c.l.b16 %v2698
        %v2774 = vunpack.c.l.b16 %v2712
        %v2775 = vunpack.c.l.b16 %v2726
        %v2776 = vunpack.c.l.b16 %v2740
        %v2777 = vunpack.c.l.b16 %v2754
        %v2778 = vunpack.c.l.b16 %v2768
        %v2779 = vpack.c.b16 %v2772, %v2771
        %v2780 = vpack.c.b16 %v2774, %v2773
        %v2781 = vpack.c.b16 %v2776, %v2775
        %v2782 = vpack.c.b16 %v2778, %v2777
        %v2784 = vsel %vm1266, %v2779, 0
        %v2787 = vsel %vm1266, %v2780, 0
        %v2790 = vsel %vm1266, %v2781, 0
        %v2793 = vsel %vm1266, %v2782, 0
        %v2796 = vsel %vm1279, %v2770, 0
        %2798 = vmatprep.subr.bf16.mxu0 0
        %2799 = vmatpush1.bf16.msra.mxu0 %v2796
        %2800 = vmatprep.subr.bf16.mxu0 0
        %2801 = vmatpush1.bf16.msra.mxu0 0
        %2802 = vmatprep.subr.bf16.mxu0 0
        %2803 = vmatpush1.bf16.msra.mxu0 0
        %2804 = vmatprep.subr.bf16.mxu0 0
        %2805 = vmatpush1.bf16.msra.mxu0 0
        %2806 = vmatprep.subr.bf16.mxu0 0
        %2807 = vmatpush1.bf16.msra.mxu0 0
        %2808 = vmatprep.subr.bf16.mxu0 0
        %2809 = vmatpush1.bf16.msra.mxu0 0
        %2810 = vmatprep.subr.bf16.mxu0 0
        %2811 = vmatpush1.bf16.msra.mxu0 0
        %2812 = vmatprep.subr.bf16.mxu0 0
        %2813 = vmatpush1.bf16.msra.mxu0 0
        %2814 = vmatprep.subr.bf16.mxu0 0
        %2815 = vmatpush1.bf16.msra.mxu0 0
        %2816 = vmatprep.subr.bf16.mxu0 0
        %2817 = vmatpush1.bf16.msra.mxu0 0
        %2818 = vmatprep.subr.bf16.mxu0 0
        %2819 = vmatpush1.bf16.msra.mxu0 0
        %2820 = vmatprep.subr.bf16.mxu0 0
        %2821 = vmatpush1.bf16.msra.mxu0 0
        %2822 = vmatprep.subr.bf16.mxu0 0
        %2823 = vmatpush1.bf16.msra.mxu0 0
        %2824 = vmatprep.subr.bf16.mxu0 0
        %2825 = vmatpush1.bf16.msra.mxu0 0
        %2826 = vmatprep.subr.bf16.mxu0 0
        %2827 = vmatpush1.bf16.msra.mxu0 0
        %2828 = vmatprep.subr.bf16.mxu0 0
        %2829 = vmatpush1.bf16.msra.mxu0 0
        %2830 = vmatprep.mubr.bf16.mxu0 0
        %2831 = vmatmul.mubr.bf16.gmra.mrb[0].mxu0 %v2784
        %v2832 = vpop.f32.mrb[0].mxu0
        %v2833 = vadd.f32 0.0, %v2832
        %v2834 = vpop.f32.mrb[0].mxu0
        %v2835 = vpop.f32.mrb[0].mxu0
        %v2836 = vadd.f32 0.0, %v2835
        %v2837 = vpop.f32.mrb[0].mxu0
        %2838 = vmatprep.mubr.bf16.mxu0 0
        %2839 = vmatmul.mubr.bf16.gmra.mrb[0].mxu0 %v2787
        %v2840 = vpop.f32.mrb[0].mxu0
        %v2841 = vadd.f32 0.0, %v2840
        %v2842 = vpop.f32.mrb[0].mxu0
        %v2843 = vpop.f32.mrb[0].mxu0
        %v2844 = vadd.f32 0.0, %v2843
        %v2845 = vpop.f32.mrb[0].mxu0
        %2846 = vmatprep.mubr.bf16.mxu0 0
        %2847 = vmatmul.mubr.bf16.gmra.mrb[0].mxu0 %v2790
        %v2848 = vpop.f32.mrb[0].mxu0
        %v2849 = vadd.f32 0.0, %v2848
        %v2850 = vpop.f32.mrb[0].mxu0
        %v2851 = vpop.f32.mrb[0].mxu0
        %v2852 = vadd.f32 0.0, %v2851
        %v2853 = vpop.f32.mrb[0].mxu0
        %2854 = vmatprep.mubr.bf16.mxu0 0
        %2855 = vmatmul.mubr.bf16.gmra.mrb[0].mxu0 %v2793
        %v2856 = vpop.f32.mrb[0].mxu0
        %v2857 = vadd.f32 0.0, %v2856
        %v2858 = vpop.f32.mrb[0].mxu0
        %v2859 = vpop.f32.mrb[0].mxu0
        %v2860 = vadd.f32 0.0, %v2859
        %v2861 = vpop.f32.mrb[0].mxu0
        %2862 = vdwg.mxu0
        %v2863 = vadd.f32 %v2633, %v2833
        %v2864 = vadd.f32 %v2634, %v2836
        %v2865 = vadd.f32 %v2635, %v2841
        %v2866 = vadd.f32 %v2636, %v2844
        %v2867 = vadd.f32 %v2637, %v2849
        %v2868 = vadd.f32 %v2638, %v2852
        %v2869 = vadd.f32 %v2639, %v2857
        %v2870 = vadd.f32 %v2640, %v2860
        %v2871 = vadd.f32 %v2863, %v1800
        %v2872 = vadd.f32 %v2864, %v1800
        %v2873 = vadd.f32 %v2865, %v1800
        %v2874 = vadd.f32 %v2866, %v1800
        %v2875 = vadd.f32 %v2867, %v1800
        %v2876 = vadd.f32 %v2868, %v1800
        %v2877 = vadd.f32 %v2869, %v1800
        %v2878 = vadd.f32 %v2870, %v1800
        %v2879 = vsel %vm1810, %v2871, 0.0
        %v2880 = vsel %vm1810, %v2872, 0.0
        %v2881 = vadd.f32 %v2879, %v2880
        %v2882 = vsel %vm1810, %v2873, 0.0
        %v2883 = vadd.f32 %v2881, %v2882
        %v2884 = vsel %vm1810, %v2874, 0.0
        %v2885 = vadd.f32 %v2883, %v2884
        %v2886 = vsel %vm1810, %v2875, 0.0
        %v2887 = vadd.f32 %v2885, %v2886
        %v2888 = vsel %vm1810, %v2876, 0.0
        %v2889 = vadd.f32 %v2887, %v2888
        %v2890 = vsel %vm1810, %v2877, 0.0
        %v2891 = vadd.f32 %v2889, %v2890
        %v2892 = vsel %vm1810, %v2878, 0.0
        %v2893 = vadd.f32 %v2891, %v2892
        %v2894 = vrot.slane %v2893, 4
        %v2895 = vadd.f32 %v2893, %v2894
        %v2896 = vrot.slane %v2895, 2
        %v2897 = vadd.f32 %v2895, %v2896
        %v2898 = vrot.slane %v2897, 1
        %v2899 = vadd.f32 %v2897, %v2898
        %v2900 = vadd.f32 %v2351, %v2899
        %v2901 = vmul.f32 %v2871, %v2871
        %v2902 = vmul.f32 %v2872, %v2872
        %v2903 = vmul.f32 %v2873, %v2873
        %v2904 = vmul.f32 %v2874, %v2874
        %v2905 = vmul.f32 %v2875, %v2875
        %v2906 = vmul.f32 %v2876, %v2876
        %v2907 = vmul.f32 %v2877, %v2877
        %v2908 = vmul.f32 %v2878, %v2878
        %v2909 = vsel %vm1810, %v2901, 0.0
        %v2910 = vsel %vm1810, %v2902, 0.0
        %v2911 = vadd.f32 %v2909, %v2910
        %v2912 = vsel %vm1810, %v2903, 0.0
        %v2913 = vadd.f32 %v2911, %v2912
        %v2914 = vsel %vm1810, %v2904, 0.0
        %v2915 = vadd.f32 %v2913, %v2914
        %v2916 = vsel %vm1810, %v2905, 0.0
        %v2917 = vadd.f32 %v2915, %v2916
        %v2918 = vsel %vm1810, %v2906, 0.0
        %v2919 = vadd.f32 %v2917, %v2918
        %v2920 = vsel %vm1810, %v2907, 0.0
        %v2921 = vadd.f32 %v2919, %v2920
        %v2922 = vsel %vm1810, %v2908, 0.0
        %v2923 = vadd.f32 %v2921, %v2922
        %v2924 = vrot.slane %v2923, 4
        %v2925 = vadd.f32 %v2923, %v2924
        %v2926 = vrot.slane %v2925, 2
        %v2927 = vadd.f32 %v2925, %v2926
        %v2928 = vrot.slane %v2927, 1
        %v2929 = vadd.f32 %v2927, %v2928
        %v2930 = vadd.f32 %v2381, %v2929
        %s2931 = scalar_lea.vmem %s3, 48
        %v2932 = vld [vmem:[%s2931] sm:$0xf]
        %s2933 = scalar_lea.vmem %s3, 52
        %v2934 = vld [vmem:[%s2933] sm:$0xf]
        %v2936 = vsel %vm1279, %v2934, 0
        %2938 = vmatprep.subr.bf16.mxu0 0
        %2939 = vmatpush1.bf16.msra.mxu0 %v2936
        %2940 = vmatprep.subr.bf16.mxu0 0
        %2941 = vmatpush1.bf16.msra.mxu0 0
        %2942 = vmatprep.subr.bf16.mxu0 0
        %2943 = vmatpush1.bf16.msra.mxu0 0
        %2944 = vmatprep.subr.bf16.mxu0 0
        %2945 = vmatpush1.bf16.msra.mxu0 0
        %2946 = vmatprep.subr.bf16.mxu0 0
        %2947 = vmatpush1.bf16.msra.mxu0 0
        %2948 = vmatprep.subr.bf16.mxu0 0
        %2949 = vmatpush1.bf16.msra.mxu0 0
        %2950 = vmatprep.subr.bf16.mxu0 0
        %2951 = vmatpush1.bf16.msra.mxu0 0
        %2952 = vmatprep.subr.bf16.mxu0 0
        %2953 = vmatpush1.bf16.msra.mxu0 0
        %2954 = vmatprep.subr.bf16.mxu0 0
        %2955 = vmatpush1.bf16.msra.mxu0 0
        %2956 = vmatprep.subr.bf16.mxu0 0
        %2957 = vmatpush1.bf16.msra.mxu0 0
        %2958 = vmatprep.subr.bf16.mxu0 0
        %2959 = vmatpush1.bf16.msra.mxu0 0
        %2960 = vmatprep.subr.bf16.mxu0 0
        %2961 = vmatpush1.bf16.msra.mxu0 0
        %2962 = vmatprep.subr.bf16.mxu0 0
        %2963 = vmatpush1.bf16.msra.mxu0 0
        %2964 = vmatprep.subr.bf16.mxu0 0
        %2965 = vmatpush1.bf16.msra.mxu0 0
        %2966 = vmatprep.subr.bf16.mxu0 0
        %2967 = vmatpush1.bf16.msra.mxu0 0
        %2968 = vmatprep.subr.bf16.mxu0 0
        %2969 = vmatpush1.bf16.msra.mxu0 0
        %2970 = vmatprep.mubr.bf16.mxu0 0
        %2971 = vmatmul.mubr.bf16.gmra.mrb[0].mxu0 %v2235
        %v2972 = vpop.f32.mrb[0].mxu0
        %v2973 = vadd.f32 0.0, %v2972
        %v2974 = vpop.f32.mrb[0].mxu0
        %v2975 = vpop.f32.mrb[0].mxu0
        %v2976 = vadd.f32 0.0, %v2975
        %v2977 = vpop.f32.mrb[0].mxu0
        %2978 = vmatprep.mubr.bf16.mxu0 0
        %2979 = vmatmul.mubr.bf16.gmra.mrb[0].mxu0 %v2238
        %v2980 = vpop.f32.mrb[0].mxu0
        %v2981 = vadd.f32 0.0, %v2980
        %v2982 = vpop.f32.mrb[0].mxu0
        %v2983 = vpop.f32.mrb[0].mxu0
        %v2984 = vadd.f32 0.0, %v2983
        %v2985 = vpop.f32.mrb[0].mxu0
        %2986 = vmatprep.mubr.bf16.mxu0 0
        %2987 = vmatmul.mubr.bf16.gmra.mrb[0].mxu0 %v2241
        %v2988 = vpop.f32.mrb[0].mxu0
        %v2989 = vadd.f32 0.0, %v2988
        %v2990 = vpop.f32.mrb[0].mxu0
        %v2991 = vpop.f32.mrb[0].mxu0
        %v2992 = vadd.f32 0.0, %v2991
        %v2993 = vpop.f32.mrb[0].mxu0
        %2994 = vmatprep.mubr.bf16.mxu0 0
        %2995 = vmatmul.mubr.bf16.gmra.mrb[0].mxu0 %v2244
        %v2996 = vpop.f32.mrb[0].mxu0
        %v2997 = vadd.f32 0.0, %v2996
        %v2998 = vpop.f32.mrb[0].mxu0
        %v2999 = vpop.f32.mrb[0].mxu0
        %v3000 = vadd.f32 0.0, %v2999
        %v3001 = vpop.f32.mrb[0].mxu0
        %3002 = vdwg.mxu0
        %v3004 = vsel %vm1279, %v2932, 0
        %3006 = vmatprep.subr.bf16.mxu0 0
        %3007 = vmatpush1.bf16.msra.mxu0 %v3004
        %3008 = vmatprep.subr.bf16.mxu0 0
        %3009 = vmatpush1.bf16.msra.mxu0 0
        %3010 = vmatprep.subr.bf16.mxu0 0
        %3011 = vmatpush1.bf16.msra.mxu0 0
        %3012 = vmatprep.subr.bf16.mxu0 0
        %3013 = vmatpush1.bf16.msra.mxu0 0
        %3014 = vmatprep.subr.bf16.mxu0 0
        %3015 = vmatpush1.bf16.msra.mxu0 0
        %3016 = vmatprep.subr.bf16.mxu0 0
        %3017 = vmatpush1.bf16.msra.mxu0 0
        %3018 = vmatprep.subr.bf16.mxu0 0
        %3019 = vmatpush1.bf16.msra.mxu0 0
        %3020 = vmatprep.subr.bf16.mxu0 0
        %3021 = vmatpush1.bf16.msra.mxu0 0
        %3022 = vmatprep.subr.bf16.mxu0 0
        %3023 = vmatpush1.bf16.msra.mxu0 0
        %3024 = vmatprep.subr.bf16.mxu0 0
        %3025 = vmatpush1.bf16.msra.mxu0 0
        %3026 = vmatprep.subr.bf16.mxu0 0
        %3027 = vmatpush1.bf16.msra.mxu0 0
        %3028 = vmatprep.subr.bf16.mxu0 0
        %3029 = vmatpush1.bf16.msra.mxu0 0
        %3030 = vmatprep.subr.bf16.mxu0 0
        %3031 = vmatpush1.bf16.msra.mxu0 0
        %3032 = vmatprep.subr.bf16.mxu0 0
        %3033 = vmatpush1.bf16.msra.mxu0 0
        %3034 = vmatprep.subr.bf16.mxu0 0
        %3035 = vmatpush1.bf16.msra.mxu0 0
        %3036 = vmatprep.subr.bf16.mxu0 0
        %3037 = vmatpush1.bf16.msra.mxu0 0
        %3038 = vmatprep.mubr.bf16.mxu0 0
        %3039 = vmatmul.mubr.bf16.gmra.mrb[0].mxu0 %v1709
        %v3040 = vpop.f32.mrb[0].mxu0
        %v3041 = vadd.f32 %v2973, %v3040
        %v3042 = vpop.f32.mrb[0].mxu0
        %v3043 = vpop.f32.mrb[0].mxu0
        %v3044 = vadd.f32 %v2976, %v3043
        %v3045 = vpop.f32.mrb[0].mxu0
        %3046 = vmatprep.mubr.bf16.mxu0 0
        %3047 = vmatmul.mubr.bf16.gmra.mrb[0].mxu0 %v1712
        %v3048 = vpop.f32.mrb[0].mxu0
        %v3049 = vadd.f32 %v2981, %v3048
        %v3050 = vpop.f32.mrb[0].mxu0
        %v3051 = vpop.f32.mrb[0].mxu0
        %v3052 = vadd.f32 %v2984, %v3051
        %v3053 = vpop.f32.mrb[0].mxu0
        %3054 = vmatprep.mubr.bf16.mxu0 0
        %3055 = vmatmul.mubr.bf16.gmra.mrb[0].mxu0 %v1715
        %v3056 = vpop.f32.mrb[0].mxu0
        %v3057 = vadd.f32 %v2989, %v3056
        %v3058 = vpop.f32.mrb[0].mxu0
        %v3059 = vpop.f32.mrb[0].mxu0
        %v3060 = vadd.f32 %v2992, %v3059
        %v3061 = vpop.f32.mrb[0].mxu0
        %3062 = vmatprep.mubr.bf16.mxu0 0
        %3063 = vmatmul.mubr.bf16.gmra.mrb[0].mxu0 %v1718
        %v3064 = vpop.f32.mrb[0].mxu0
        %v3065 = vadd.f32 %v2997, %v3064
        %v3066 = vpop.f32.mrb[0].mxu0
        %v3067 = vpop.f32.mrb[0].mxu0
        %v3068 = vadd.f32 %v3000, %v3067
        %v3069 = vpop.f32.mrb[0].mxu0
        %3070 = vdwg.mxu0
        %s3071 = scalar_lea.vmem %s3, 56
        %v3072 = vld [vmem:[%s3071] sm:$0xf]
        %v3074 = vsel %vm1279, %v3072, 0
        %3076 = vmatprep.subr.bf16.mxu0 0
        %3077 = vmatpush1.bf16.msra.mxu0 %v3074
        %3078 = vmatprep.subr.bf16.mxu0 0
        %3079 = vmatpush1.bf16.msra.mxu0 0
        %3080 = vmatprep.subr.bf16.mxu0 0
        %3081 = vmatpush1.bf16.msra.mxu0 0
        %3082 = vmatprep.subr.bf16.mxu0 0
        %3083 = vmatpush1.bf16.msra.mxu0 0
        %3084 = vmatprep.subr.bf16.mxu0 0
        %3085 = vmatpush1.bf16.msra.mxu0 0
        %3086 = vmatprep.subr.bf16.mxu0 0
        %3087 = vmatpush1.bf16.msra.mxu0 0
        %3088 = vmatprep.subr.bf16.mxu0 0
        %3089 = vmatpush1.bf16.msra.mxu0 0
        %3090 = vmatprep.subr.bf16.mxu0 0
        %3091 = vmatpush1.bf16.msra.mxu0 0
        %3092 = vmatprep.subr.bf16.mxu0 0
        %3093 = vmatpush1.bf16.msra.mxu0 0
        %3094 = vmatprep.subr.bf16.mxu0 0
        %3095 = vmatpush1.bf16.msra.mxu0 0
        %3096 = vmatprep.subr.bf16.mxu0 0
        %3097 = vmatpush1.bf16.msra.mxu0 0
        %3098 = vmatprep.subr.bf16.mxu0 0
        %3099 = vmatpush1.bf16.msra.mxu0 0
        %3100 = vmatprep.subr.bf16.mxu0 0
        %3101 = vmatpush1.bf16.msra.mxu0 0
        %3102 = vmatprep.subr.bf16.mxu0 0
        %3103 = vmatpush1.bf16.msra.mxu0 0
        %3104 = vmatprep.subr.bf16.mxu0 0
        %3105 = vmatpush1.bf16.msra.mxu0 0
        %3106 = vmatprep.subr.bf16.mxu0 0
        %3107 = vmatpush1.bf16.msra.mxu0 0
        %3108 = vmatprep.mubr.bf16.mxu0 0
        %3109 = vmatmul.mubr.bf16.gmra.mrb[0].mxu0 %v2784
        %v3110 = vpop.f32.mrb[0].mxu0
        %v3111 = vadd.f32 0.0, %v3110
        %v3112 = vpop.f32.mrb[0].mxu0
        %v3113 = vpop.f32.mrb[0].mxu0
        %v3114 = vadd.f32 0.0, %v3113
        %v3115 = vpop.f32.mrb[0].mxu0
        %3116 = vmatprep.mubr.bf16.mxu0 0
        %3117 = vmatmul.mubr.bf16.gmra.mrb[0].mxu0 %v2787
        %v3118 = vpop.f32.mrb[0].mxu0
        %v3119 = vadd.f32 0.0, %v3118
        %v3120 = vpop.f32.mrb[0].mxu0
        %v3121 = vpop.f32.mrb[0].mxu0
        %v3122 = vadd.f32 0.0, %v3121
        %v3123 = vpop.f32.mrb[0].mxu0
        %3124 = vmatprep.mubr.bf16.mxu0 0
        %3125 = vmatmul.mubr.bf16.gmra.mrb[0].mxu0 %v2790
        %v3126 = vpop.f32.mrb[0].mxu0
        %v3127 = vadd.f32 0.0, %v3126
        %v3128 = vpop.f32.mrb[0].mxu0
        %v3129 = vpop.f32.mrb[0].mxu0
        %v3130 = vadd.f32 0.0, %v3129
        %v3131 = vpop.f32.mrb[0].mxu0
        %3132 = vmatprep.mubr.bf16.mxu0 0
        %3133 = vmatmul.mubr.bf16.gmra.mrb[0].mxu0 %v2793
        %v3134 = vpop.f32.mrb[0].mxu0
        %v3135 = vadd.f32 0.0, %v3134
        %v3136 = vpop.f32.mrb[0].mxu0
        %v3137 = vpop.f32.mrb[0].mxu0
        %v3138 = vadd.f32 0.0, %v3137
        %v3139 = vpop.f32.mrb[0].mxu0
        %3140 = vdwg.mxu0
        %v3141 = vadd.f32 %v3041, %v3111
        %v3142 = vadd.f32 %v3044, %v3114
        %v3143 = vadd.f32 %v3049, %v3119
        %v3144 = vadd.f32 %v3052, %v3122
        %v3145 = vadd.f32 %v3057, %v3127
        %v3146 = vadd.f32 %v3060, %v3130
        %v3147 = vadd.f32 %v3065, %v3135
        %v3148 = vadd.f32 %v3068, %v3138
        %v3149 = vld [vmem:[%s2522] sm:$0xe]
        %v3150 = vld [vmem:[%s2522 + $0x8] sm:$0xe]
        %v3151 = vld [vmem:[%s2522 + $0x10] sm:$0xe]
        %v3152 = vld [vmem:[%s2522 + $0x18] sm:$0xe]
        %v3153 = vld [vmem:[%s2522 + $0x20] sm:$0xe]
        %v3154 = vld [vmem:[%s2522 + $0x28] sm:$0xe]
        %v3155 = vld [vmem:[%s2522 + $0x30] sm:$0xe]
        %v3156 = vld [vmem:[%s2522 + $0x38] sm:$0xe]
        %v3173 = vrot.slane %v3149, 5
        %v3174 = vrot.slane %v3173, 4
        %v3175 = vrot.slane %v2642, 5
        %v3176 = vsel %vm1891, %v3174, %v3175
        %v3177 = vrot.slane %v3150, 5
        %v3178 = vrot.slane %v3177, 4
        %v3179 = vrot.slane %v2644, 5
        %v3180 = vsel %vm1891, %v3178, %v3179
        %v3181 = vrot.slane %v3151, 5
        %v3182 = vrot.slane %v3181, 4
        %v3183 = vrot.slane %v2646, 5
        %v3184 = vsel %vm1891, %v3182, %v3183
        %v3185 = vrot.slane %v3152, 5
        %v3186 = vrot.slane %v3185, 4
        %v3187 = vrot.slane %v2648, 5
        %v3188 = vsel %vm1891, %v3186, %v3187
        %v3189 = vrot.slane %v3153, 5
        %v3190 = vrot.slane %v3189, 4
        %v3191 = vrot.slane %v2650, 5
        %v3192 = vsel %vm1891, %v3190, %v3191
        %v3193 = vrot.slane %v3154, 5
        %v3194 = vrot.slane %v3193, 4
        %v3195 = vrot.slane %v2652, 5
        %v3196 = vsel %vm1891, %v3194, %v3195
        %v3197 = vrot.slane %v3155, 5
        %v3198 = vrot.slane %v3197, 4
        %v3199 = vrot.slane %v2654, 5
        %v3200 = vsel %vm1891, %v3198, %v3199
        %v3201 = vrot.slane %v3156, 5
        %v3202 = vrot.slane %v3201, 4
        %v3203 = vrot.slane %v2656, 5
        %v3204 = vsel %vm1891, %v3202, %v3203
        %s3205 = scalar_lea.vmem %s3, 60
        %v3206 = vld [vmem:[%s3205] sm:$0xf]
        %v3207 = vunpack.c.l.b16 %v3176
        %v3208 = vunpack.c.l.b16 %v3180
        %v3209 = vunpack.c.l.b16 %v3184
        %v3210 = vunpack.c.l.b16 %v3188
        %v3211 = vunpack.c.l.b16 %v3192
        %v3212 = vunpack.c.l.b16 %v3196
        %v3213 = vunpack.c.l.b16 %v3200
        %v3214 = vunpack.c.l.b16 %v3204
        %v3215 = vpack.c.b16 %v3208, %v3207
        %v3216 = vpack.c.b16 %v3210, %v3209
        %v3217 = vpack.c.b16 %v3212, %v3211
        %v3218 = vpack.c.b16 %v3214, %v3213
        %v3220 = vsel %vm1266, %v3215, 0
        %v3223 = vsel %vm1266, %v3216, 0
        %v3226 = vsel %vm1266, %v3217, 0
        %v3229 = vsel %vm1266, %v3218, 0
        %v3232 = vsel %vm1279, %v3206, 0
        %3234 = vmatprep.subr.bf16.mxu0 0
        %3235 = vmatpush1.bf16.msra.mxu0 %v3232
        %3236 = vmatprep.subr.bf16.mxu0 0
        %3237 = vmatpush1.bf16.msra.mxu0 0
        %3238 = vmatprep.subr.bf16.mxu0 0
        %3239 = vmatpush1.bf16.msra.mxu0 0
        %3240 = vmatprep.subr.bf16.mxu0 0
        %3241 = vmatpush1.bf16.msra.mxu0 0
        %3242 = vmatprep.subr.bf16.mxu0 0
        %3243 = vmatpush1.bf16.msra.mxu0 0
        %3244 = vmatprep.subr.bf16.mxu0 0
        %3245 = vmatpush1.bf16.msra.mxu0 0
        %3246 = vmatprep.subr.bf16.mxu0 0
        %3247 = vmatpush1.bf16.msra.mxu0 0
        %3248 = vmatprep.subr.bf16.mxu0 0
        %3249 = vmatpush1.bf16.msra.mxu0 0
        %3250 = vmatprep.subr.bf16.mxu0 0
        %3251 = vmatpush1.bf16.msra.mxu0 0
        %3252 = vmatprep.subr.bf16.mxu0 0
        %3253 = vmatpush1.bf16.msra.mxu0 0
        %3254 = vmatprep.subr.bf16.mxu0 0
        %3255 = vmatpush1.bf16.msra.mxu0 0
        %3256 = vmatprep.subr.bf16.mxu0 0
        %3257 = vmatpush1.bf16.msra.mxu0 0
        %3258 = vmatprep.subr.bf16.mxu0 0
        %3259 = vmatpush1.bf16.msra.mxu0 0
        %3260 = vmatprep.subr.bf16.mxu0 0
        %3261 = vmatpush1.bf16.msra.mxu0 0
        %3262 = vmatprep.subr.bf16.mxu0 0
        %3263 = vmatpush1.bf16.msra.mxu0 0
        %3264 = vmatprep.subr.bf16.mxu0 0
        %3265 = vmatpush1.bf16.msra.mxu0 0
        %3266 = vmatprep.mubr.bf16.mxu0 0
        %3267 = vmatmul.mubr.bf16.gmra.mrb[0].mxu0 %v3220
        %v3268 = vpop.f32.mrb[0].mxu0
        %v3269 = vadd.f32 0.0, %v3268
        %v3270 = vpop.f32.mrb[0].mxu0
        %v3271 = vpop.f32.mrb[0].mxu0
        %v3272 = vadd.f32 0.0, %v3271
        %v3273 = vpop.f32.mrb[0].mxu0
        %3274 = vmatprep.mubr.bf16.mxu0 0
        %3275 = vmatmul.mubr.bf16.gmra.mrb[0].mxu0 %v3223
        %v3276 = vpop.f32.mrb[0].mxu0
        %v3277 = vadd.f32 0.0, %v3276
        %v3278 = vpop.f32.mrb[0].mxu0
        %v3279 = vpop.f32.mrb[0].mxu0
        %v3280 = vadd.f32 0.0, %v3279
        %v3281 = vpop.f32.mrb[0].mxu0
        %3282 = vmatprep.mubr.bf16.mxu0 0
        %3283 = vmatmul.mubr.bf16.gmra.mrb[0].mxu0 %v3226
        %v3284 = vpop.f32.mrb[0].mxu0
        %v3285 = vadd.f32 0.0, %v3284
        %v3286 = vpop.f32.mrb[0].mxu0
        %v3287 = vpop.f32.mrb[0].mxu0
        %v3288 = vadd.f32 0.0, %v3287
        %v3289 = vpop.f32.mrb[0].mxu0
        %3290 = vmatprep.mubr.bf16.mxu0 0
        %3291 = vmatmul.mubr.bf16.gmra.mrb[0].mxu0 %v3229
        %v3292 = vpop.f32.mrb[0].mxu0
        %v3293 = vadd.f32 0.0, %v3292
        %v3294 = vpop.f32.mrb[0].mxu0
        %v3295 = vpop.f32.mrb[0].mxu0
        %v3296 = vadd.f32 0.0, %v3295
        %v3297 = vpop.f32.mrb[0].mxu0
        %3298 = vdwg.mxu0
        %v3299 = vadd.f32 %v3141, %v3269
        %v3300 = vadd.f32 %v3142, %v3272
        %v3301 = vadd.f32 %v3143, %v3277
        %v3302 = vadd.f32 %v3144, %v3280
        %v3303 = vadd.f32 %v3145, %v3285
        %v3304 = vadd.f32 %v3146, %v3288
        %v3305 = vadd.f32 %v3147, %v3293
        %v3306 = vadd.f32 %v3148, %v3296
        %v3307 = vadd.f32 %v3299, %v1800
        %v3308 = vadd.f32 %v3300, %v1800
        %v3309 = vadd.f32 %v3301, %v1800
        %v3310 = vadd.f32 %v3302, %v1800
        %v3311 = vadd.f32 %v3303, %v1800
        %v3312 = vadd.f32 %v3304, %v1800
        %v3313 = vadd.f32 %v3305, %v1800
        %v3314 = vadd.f32 %v3306, %v1800
        %v3315 = vsel %vm1810, %v3307, 0.0
        %v3316 = vsel %vm1810, %v3308, 0.0
        %v3317 = vadd.f32 %v3315, %v3316
        %v3318 = vsel %vm1810, %v3309, 0.0
        %v3319 = vadd.f32 %v3317, %v3318
        %v3320 = vsel %vm1810, %v3310, 0.0
        %v3321 = vadd.f32 %v3319, %v3320
        %v3322 = vsel %vm1810, %v3311, 0.0
        %v3323 = vadd.f32 %v3321, %v3322
        %v3324 = vsel %vm1810, %v3312, 0.0
        %v3325 = vadd.f32 %v3323, %v3324
        %v3326 = vsel %vm1810, %v3313, 0.0
        %v3327 = vadd.f32 %v3325, %v3326
        %v3328 = vsel %vm1810, %v3314, 0.0
        %v3329 = vadd.f32 %v3327, %v3328
        %v3330 = vrot.slane %v3329, 4
        %v3331 = vadd.f32 %v3329, %v3330
        %v3332 = vrot.slane %v3331, 2
        %v3333 = vadd.f32 %v3331, %v3332
        %v3334 = vrot.slane %v3333, 1
        %v3335 = vadd.f32 %v3333, %v3334
        %v3336 = vadd.f32 %v2900, %v3335
        %v3337 = vmul.f32 %v3307, %v3307
        %v3338 = vmul.f32 %v3308, %v3308
        %v3339 = vmul.f32 %v3309, %v3309
        %v3340 = vmul.f32 %v3310, %v3310
        %v3341 = vmul.f32 %v3311, %v3311
        %v3342 = vmul.f32 %v3312, %v3312
        %v3343 = vmul.f32 %v3313, %v3313
        %v3344 = vmul.f32 %v3314, %v3314
        %v3345 = vsel %vm1810, %v3337, 0.0
        %v3346 = vsel %vm1810, %v3338, 0.0
        %v3347 = vadd.f32 %v3345, %v3346
        %v3348 = vsel %vm1810, %v3339, 0.0
        %v3349 = vadd.f32 %v3347, %v3348
        %v3350 = vsel %vm1810, %v3340, 0.0
        %v3351 = vadd.f32 %v3349, %v3350
        %v3352 = vsel %vm1810, %v3341, 0.0
        %v3353 = vadd.f32 %v3351, %v3352
        %v3354 = vsel %vm1810, %v3342, 0.0
        %v3355 = vadd.f32 %v3353, %v3354
        %v3356 = vsel %vm1810, %v3343, 0.0
        %v3357 = vadd.f32 %v3355, %v3356
        %v3358 = vsel %vm1810, %v3344, 0.0
        %v3359 = vadd.f32 %v3357, %v3358
        %v3360 = vrot.slane %v3359, 4
        %v3361 = vadd.f32 %v3359, %v3360
        %v3362 = vrot.slane %v3361, 2
        %v3363 = vadd.f32 %v3361, %v3362
        %v3364 = vrot.slane %v3363, 1
        %v3365 = vadd.f32 %v3363, %v3364
        %v3366 = vadd.f32 %v2930, %v3365
        %v3367 = vmul.f32 %v3336, 0.00390625
        %v3368 = vmul.f32 %v3366, 0.00390625
        %v3369 = vmul.f32 %v3367, %v3367
        %v3370 = vsub.f32 %v3368, %v3369
        %v3371 = vadd.f32 %v3370, 1e-05
        %v3372 = vrsqrt.pop %v3371
        %v3373 = vsub.f32 %v1802, %v3367
        %v3374 = vsub.f32 %v1803, %v3367
        %v3375 = vsub.f32 %v1804, %v3367
        %v3376 = vsub.f32 %v1805, %v3367
        %v3377 = vsub.f32 %v1806, %v3367
        %v3378 = vsub.f32 %v1807, %v3367
        %v3379 = vsub.f32 %v1808, %v3367
        %v3380 = vsub.f32 %v1809, %v3367
        %v3381 = vmul.f32 %v3373, %v3372
        %v3382 = vmul.f32 %v3374, %v3372
        %v3383 = vmul.f32 %v3375, %v3372
        %v3384 = vmul.f32 %v3376, %v3372
        %v3385 = vmul.f32 %v3377, %v3372
        %v3386 = vmul.f32 %v3378, %v3372
        %v3387 = vmul.f32 %v3379, %v3372
        %v3388 = vmul.f32 %v3380, %v3372
        %v3389 = vsub.f32 %v2322, %v3367
        %v3390 = vsub.f32 %v2323, %v3367
        %v3391 = vsub.f32 %v2324, %v3367
        %v3392 = vsub.f32 %v2325, %v3367
        %v3393 = vsub.f32 %v2326, %v3367
        %v3394 = vsub.f32 %v2327, %v3367
        %v3395 = vsub.f32 %v2328, %v3367
        %v3396 = vsub.f32 %v2329, %v3367
        %v3397 = vmul.f32 %v3389, %v3372
        %v3398 = vmul.f32 %v3390, %v3372
        %v3399 = vmul.f32 %v3391, %v3372
        %v3400 = vmul.f32 %v3392, %v3372
        %v3401 = vmul.f32 %v3393, %v3372
        %v3402 = vmul.f32 %v3394, %v3372
        %v3403 = vmul.f32 %v3395, %v3372
        %v3404 = vmul.f32 %v3396, %v3372
        %v3405 = vsub.f32 %v2871, %v3367
        %v3406 = vsub.f32 %v2872, %v3367
        %v3407 = vsub.f32 %v2873, %v3367
        %v3408 = vsub.f32 %v2874, %v3367
        %v3409 = vsub.f32 %v2875, %v3367
        %v3410 = vsub.f32 %v2876, %v3367
        %v3411 = vsub.f32 %v2877, %v3367
        %v3412 = vsub.f32 %v2878, %v3367
        %v3413 = vmul.f32 %v3405, %v3372
        %v3414 = vmul.f32 %v3406, %v3372
        %v3415 = vmul.f32 %v3407, %v3372
        %v3416 = vmul.f32 %v3408, %v3372
        %v3417 = vmul.f32 %v3409, %v3372
        %v3418 = vmul.f32 %v3410, %v3372
        %v3419 = vmul.f32 %v3411, %v3372
        %v3420 = vmul.f32 %v3412, %v3372
        %v3421 = vsub.f32 %v3307, %v3367
        %v3422 = vsub.f32 %v3308, %v3367
        %v3423 = vsub.f32 %v3309, %v3367
        %v3424 = vsub.f32 %v3310, %v3367
        %v3425 = vsub.f32 %v3311, %v3367
        %v3426 = vsub.f32 %v3312, %v3367
        %v3427 = vsub.f32 %v3313, %v3367
        %v3428 = vsub.f32 %v3314, %v3367
        %v3429 = vmul.f32 %v3421, %v3372
        %v3430 = vmul.f32 %v3422, %v3372
        %v3431 = vmul.f32 %v3423, %v3372
        %v3432 = vmul.f32 %v3424, %v3372
        %v3433 = vmul.f32 %v3425, %v3372
        %v3434 = vmul.f32 %v3426, %v3372
        %v3435 = vmul.f32 %v3427, %v3372
        %v3436 = vmul.f32 %v3428, %v3372
        %3445 = vrot.lane.b32.xlu0 %v3397, 4
        %v3446 = vpop.permute.xlu0 %3445
        %3447 = vrot.lane.b32.xlu0 %v3398, 4
        %v3448 = vpop.permute.xlu0 %3447
        %3449 = vrot.lane.b32.xlu0 %v3399, 4
        %v3450 = vpop.permute.xlu0 %3449
        %3451 = vrot.lane.b32.xlu0 %v3400, 4
        %v3452 = vpop.permute.xlu0 %3451
        %3453 = vrot.lane.b32.xlu0 %v3401, 4
        %v3454 = vpop.permute.xlu0 %3453
        %3455 = vrot.lane.b32.xlu0 %v3402, 4
        %v3456 = vpop.permute.xlu0 %3455
        %3457 = vrot.lane.b32.xlu0 %v3403, 4
        %v3458 = vpop.permute.xlu0 %3457
        %3459 = vrot.lane.b32.xlu0 %v3404, 4
        %v3460 = vpop.permute.xlu0 %3459
        %3477 = vrot.lane.b32.xlu0 %v3413, 8
        %v3478 = vpop.permute.xlu0 %3477
        %3479 = vrot.lane.b32.xlu0 %v3414, 8
        %v3480 = vpop.permute.xlu0 %3479
        %3481 = vrot.lane.b32.xlu0 %v3415, 8
        %v3482 = vpop.permute.xlu0 %3481
        %3483 = vrot.lane.b32.xlu0 %v3416, 8
        %v3484 = vpop.permute.xlu0 %3483
        %3485 = vrot.lane.b32.xlu0 %v3417, 8
        %v3486 = vpop.permute.xlu0 %3485
        %3487 = vrot.lane.b32.xlu0 %v3418, 8
        %v3488 = vpop.permute.xlu0 %3487
        %3489 = vrot.lane.b32.xlu0 %v3419, 8
        %v3490 = vpop.permute.xlu0 %3489
        %3491 = vrot.lane.b32.xlu0 %v3420, 8
        %v3492 = vpop.permute.xlu0 %3491
        %3509 = vrot.lane.b32.xlu0 %v3429, 12
        %v3510 = vpop.permute.xlu0 %3509
        %3511 = vrot.lane.b32.xlu0 %v3430, 12
        %v3512 = vpop.permute.xlu0 %3511
        %3513 = vrot.lane.b32.xlu0 %v3431, 12
        %v3514 = vpop.permute.xlu0 %3513
        %3515 = vrot.lane.b32.xlu0 %v3432, 12
        %v3516 = vpop.permute.xlu0 %3515
        %3517 = vrot.lane.b32.xlu0 %v3433, 12
        %v3518 = vpop.permute.xlu0 %3517
        %3519 = vrot.lane.b32.xlu0 %v3434, 12
        %v3520 = vpop.permute.xlu0 %3519
        %3521 = vrot.lane.b32.xlu0 %v3435, 12
        %v3522 = vpop.permute.xlu0 %3521
        %3523 = vrot.lane.b32.xlu0 %v3436, 12
        %v3524 = vpop.permute.xlu0 %3523
        %v3533 = vsel %vm1810, %v3381, %v3446
        %v3534 = vsel %vm1810, %v3382, %v3448
        %v3535 = vsel %vm1810, %v3383, %v3450
        %v3536 = vsel %vm1810, %v3384, %v3452
        %v3537 = vsel %vm1810, %v3385, %v3454
        %v3538 = vsel %vm1810, %v3386, %v3456
        %v3539 = vsel %vm1810, %v3387, %v3458
        %v3540 = vsel %vm1810, %v3388, %v3460
        %v3541 = vsel %vm1266, %v3533, %v3478
        %v3542 = vsel %vm1266, %v3534, %v3480
        %v3543 = vsel %vm1266, %v3535, %v3482
        %v3544 = vsel %vm1266, %v3536, %v3484
        %v3545 = vsel %vm1266, %v3537, %v3486
        %v3546 = vsel %vm1266, %v3538, %v3488
        %v3547 = vsel %vm1266, %v3539, %v3490
        %v3548 = vsel %vm1266, %v3540, %v3492
        %vm3549 = vcmask 97280
        %v3550 = vsel %vm3549, %v3541, %v3510
        %v3551 = vsel %vm3549, %v3542, %v3512
        %v3552 = vsel %vm3549, %v3543, %v3514
        %v3553 = vsel %vm3549, %v3544, %v3516
        %v3554 = vsel %vm3549, %v3545, %v3518
        %v3555 = vsel %vm3549, %v3546, %v3520
        %v3556 = vsel %vm3549, %v3547, %v3522
        %v3557 = vsel %vm3549, %v3548, %v3524
        %v3558 = vcombine.low %v3550, %v3552
        %v3559 = vcombine.high %v3550, %v3552
        %v3561 = vunpack.c.l.s4 1983009808
        %v3562 = vunpack.c.0.s8 %v3561
        %v3563 = vlaneseq
        %v3564 = vshrl.u32 %v3563, 7
        %v3565 = vsub.s32 %v3562, %v3564
        %v3566 = vrot.slane %v3558, %v3565
        %v3568 = vunpack.c.l.s4 1983009808
        %v3569 = vunpack.c.0.s8 %v3568
        %v3570 = vlaneseq
        %v3571 = vshrl.u32 %v3570, 7
        %v3572 = vsub.s32 %v3569, %v3571
        %v3573 = vrot.slane %v3559, %v3572
        %v3574 = vcombine.low %v3551, %v3553
        %v3575 = vcombine.high %v3551, %v3553
        %v3577 = vunpack.c.l.s4 1983009808
        %v3578 = vunpack.c.0.s8 %v3577
        %v3579 = vlaneseq
        %v3580 = vshrl.u32 %v3579, 7
        %v3581 = vsub.s32 %v3578, %v3580
        %v3582 = vrot.slane %v3574, %v3581
        %v3584 = vunpack.c.l.s4 1983009808
        %v3585 = vunpack.c.0.s8 %v3584
        %v3586 = vlaneseq
        %v3587 = vshrl.u32 %v3586, 7
        %v3588 = vsub.s32 %v3585, %v3587
        %v3589 = vrot.slane %v3575, %v3588
        %v3590 = vcombine.low %v3554, %v3556
        %v3591 = vcombine.high %v3554, %v3556
        %v3593 = vunpack.c.l.s4 1983009808
        %v3594 = vunpack.c.0.s8 %v3593
        %v3595 = vlaneseq
        %v3596 = vshrl.u32 %v3595, 7
        %v3597 = vsub.s32 %v3594, %v3596
        %v3598 = vrot.slane %v3590, %v3597
        %v3600 = vunpack.c.l.s4 1983009808
        %v3601 = vunpack.c.0.s8 %v3600
        %v3602 = vlaneseq
        %v3603 = vshrl.u32 %v3602, 7
        %v3604 = vsub.s32 %v3601, %v3603
        %v3605 = vrot.slane %v3591, %v3604
        %v3606 = vcombine.low %v3555, %v3557
        %v3607 = vcombine.high %v3555, %v3557
        %v3609 = vunpack.c.l.s4 1983009808
        %v3610 = vunpack.c.0.s8 %v3609
        %v3611 = vlaneseq
        %v3612 = vshrl.u32 %v3611, 7
        %v3613 = vsub.s32 %v3610, %v3612
        %v3614 = vrot.slane %v3606, %v3613
        %v3616 = vunpack.c.l.s4 1983009808
        %v3617 = vunpack.c.0.s8 %v3616
        %v3618 = vlaneseq
        %v3619 = vshrl.u32 %v3618, 7
        %v3620 = vsub.s32 %v3617, %v3619
        %v3621 = vrot.slane %v3607, %v3620
        %v3622 = vcombine.low %v3566, %v3582
        %v3623 = vcombine.high %v3566, %v3582
        %v3625 = vunpack.c.l.s4 1934713408
        %v3626 = vunpack.c.0.s8 %v3625
        %v3627 = vlaneseq
        %v3628 = vshrl.u32 %v3627, 7
        %v3629 = vsub.s32 %v3626, %v3628
        %v3630 = vrot.slane %v3622, %v3629
        %v3632 = vunpack.c.l.s4 1934713408
        %v3633 = vunpack.c.0.s8 %v3632
        %v3634 = vlaneseq
        %v3635 = vshrl.u32 %v3634, 7
        %v3636 = vsub.s32 %v3633, %v3635
        %v3637 = vrot.slane %v3623, %v3636
        %v3638 = vcombine.low %v3573, %v3589
        %v3639 = vcombine.high %v3573, %v3589
        %v3641 = vunpack.c.l.s4 1934713408
        %v3642 = vunpack.c.0.s8 %v3641
        %v3643 = vlaneseq
        %v3644 = vshrl.u32 %v3643, 7
        %v3645 = vsub.s32 %v3642, %v3644
        %v3646 = vrot.slane %v3638, %v3645
        %v3648 = vunpack.c.l.s4 1934713408
        %v3649 = vunpack.c.0.s8 %v3648
        %v3650 = vlaneseq
        %v3651 = vshrl.u32 %v3650, 7
        %v3652 = vsub.s32 %v3649, %v3651
        %v3653 = vrot.slane %v3639, %v3652
        %v3654 = vcombine.low %v3598, %v3614
        %v3655 = vcombine.high %v3598, %v3614
        %v3657 = vunpack.c.l.s4 1934713408
        %v3658 = vunpack.c.0.s8 %v3657
        %v3659 = vlaneseq
        %v3660 = vshrl.u32 %v3659, 7
        %v3661 = vsub.s32 %v3658, %v3660
        %v3662 = vrot.slane %v3654, %v3661
        %v3664 = vunpack.c.l.s4 1934713408
        %v3665 = vunpack.c.0.s8 %v3664
        %v3666 = vlaneseq
        %v3667 = vshrl.u32 %v3666, 7
        %v3668 = vsub.s32 %v3665, %v3667
        %v3669 = vrot.slane %v3655, %v3668
        %v3670 = vcombine.low %v3605, %v3621
        %v3671 = vcombine.high %v3605, %v3621
        %v3673 = vunpack.c.l.s4 1934713408
        %v3674 = vunpack.c.0.s8 %v3673
        %v3675 = vlaneseq
        %v3676 = vshrl.u32 %v3675, 7
        %v3677 = vsub.s32 %v3674, %v3676
        %v3678 = vrot.slane %v3670, %v3677
        %v3680 = vunpack.c.l.s4 1934713408
        %v3681 = vunpack.c.0.s8 %v3680
        %v3682 = vlaneseq
        %v3683 = vshrl.u32 %v3682, 7
        %v3684 = vsub.s32 %v3681, %v3683
        %v3685 = vrot.slane %v3671, %v3684
        %v3686 = vcombine.low %v3630, %v3662
        %v3687 = vcombine.high %v3630, %v3662
        %v3688 = vcombine.low %v3637, %v3669
        %v3689 = vcombine.high %v3637, %v3669
        %v3690 = vcombine.low %v3646, %v3678
        %v3691 = vcombine.high %v3646, %v3678
        %v3692 = vcombine.low %v3653, %v3685
        %v3693 = vcombine.high %v3653, %v3685
        %3695 = vrot.lane.b32.xlu0 %v3687, 16
        %v3696 = vpop.permute.xlu0 %3695
        %3699 = vrot.lane.b32.xlu0 %v3688, 32
        %v3700 = vpop.permute.xlu0 %3699
        %3703 = vrot.lane.b32.xlu0 %v3689, 48
        %v3704 = vpop.permute.xlu0 %3703
        %3707 = vrot.lane.b32.xlu0 %v3690, 64
        %v3708 = vpop.permute.xlu0 %3707
        %3711 = vrot.lane.b32.xlu0 %v3691, 80
        %v3712 = vpop.permute.xlu0 %3711
        %3715 = vrot.lane.b32.xlu0 %v3692, 96
        %v3716 = vpop.permute.xlu0 %3715
        %3719 = vrot.lane.b32.xlu0 %v3693, 112
        %v3720 = vpop.permute.xlu0 %3719
        %v3722 = vsel %vm483, %v3686, %v3696
        %vm3723 = vcmask 261120
        %v3724 = vsel %vm3723, %v3722, %v3700
        %vm3725 = vcmask 392192
        %v3726 = vsel %vm3725, %v3724, %v3704
        %vm3727 = vcmask 523264
        %v3728 = vsel %vm3727, %v3726, %v3708
        %vm3729 = vcmask 654336
        %v3730 = vsel %vm3729, %v3728, %v3712
        %vm3731 = vcmask 785408
        %v3732 = vsel %vm3731, %v3730, %v3716
        %vm3733 = vcmask 916480
        %v3734 = vsel %vm3733, %v3732, %v3720
        %3735 = vst [vmem:[%s217] sm:$0xff] %v3734
        %s3736 = sand.u32 %s137, 1
        %s3737 = scalar_lea.sflag [#allocation4], %s3736
        %s3738 = sand.u32 %s137, 1
        %s3739 = smul.addr %s3738, 8
        %s3740 = scalar_lea.vmem [#allocation3], %s3739
        // Predicated region
        $region41: #{tpu_custom_call.1} parent=39 // pred_check
          %p3741 = pneg %p147
        $region42: #{tpu_custom_call.1} parent=39 // pred_check_branch
          %3743 = sbr.rel (%p3741) target = $region44
        $region43: #{tpu_custom_call.1} parent=39 // pred_region
          %s3745 = ssub.s32 128, 128
          %3746 = vsyncadd %s3737, %s3745
          %s3747 = smul.addr %s19, 128
          %s3748 = scalar_lea.hbm %s5, %s3747
          %s3750 = sshll.u32 %s3740, 4
          %s3751 = int_to_ptr.vmem [resolvable:$true] %s3750
          %3753 = dma.vmem_to_hbm [thread:$0]  %s3751, 128, %s3748, %s3737
        $region44: #{tpu_custom_call.1} parent=39 // pred_fallthru
          _
      $region40: #{tpu_custom_call.1} parent=5 // pred_fallthru
        _
      %p3754 = scmp.le.s32.totalorder 2, %s14
      // Predicated region
      $region45: #{tpu_custom_call.1} parent=5 // pred_check
        %p3755 = pneg %p3754
      $region46: #{tpu_custom_call.1} parent=5 // pred_check_branch
        %3757 = sbr.rel (%p3755) target = $region48
      $region47: #{tpu_custom_call.1} parent=5 // pred_region
        %s3758 = ssub.s32 %s14, 2
        // Predicated region
        $region49: #{tpu_custom_call.1} parent=47 // pred_check
          %p3759 = pneg %p153
        $region50: #{tpu_custom_call.1} parent=47 // pred_check_branch
          %3761 = sbr.rel (%p3759) target = $region52
        $region51: #{tpu_custom_call.1} parent=47 // pred_region
          %s3762 = sand.u32 %s138, 1
          %s3763 = scalar_lea.sflag [#allocation4], %s3762
          %s3764 = sand.u32 %s138, 1
          %s3765 = smul.addr %s3764, 8
          %s3766 = scalar_lea.vmem [#allocation3], %s3765
          %3767 = dma.done %s3763, 128
        $region52: #{tpu_custom_call.1} parent=47 // pred_fallthru
          _
      $region48: #{tpu_custom_call.1} parent=5 // pred_fallthru
        _
    $region6: #{tpu_custom_call.1} parent=1 // loop_footer
      %s18 = sadd.s32 1, %s14
    $region7: #{tpu_custom_call.1} parent=1 // loop_footer_branch
      %13 = sbr.rel target = $region3
    $region8: #{tpu_custom_call.1} parent=1 // loop_exit
      _
    %3768 = vsyncpa [#allocation4], 1
    %s3769 = scalar_lea.sflag [#allocation4], 1
    %3770 = vsyncpa %s3769, 1

</llo_original>
